<compile_context>
chip_gen: v6e
topology: v6e:2x2x1
jax: 0.10.0
libtpu: 0.0.40
codegen_flags: <defaults>
</compile_context>

<pallas_src>
import math
import functools

import jax
import jax.numpy as jnp
from jax.experimental import pallas as pl
from jax.experimental.pallas import tpu as pltpu


# ----------------------------- fused Pallas kernel -----------------------------

def _make_fused_kernel(num_layers, num_heads, head_dim, batch, seq, eps=1e-5):
    E = num_heads * head_dim
    Dh = head_dim
    H = num_heads
    B, S = batch, seq
    BS = B * S
    bf16, f32 = jnp.bfloat16, jnp.float32

    def ln(x, g, b):                       # f32 LayerNorm over last dim
        mu = jnp.mean(x, axis=-1, keepdims=True)
        var = jnp.mean((x - mu) ** 2, axis=-1, keepdims=True)
        return (x - mu) * jax.lax.rsqrt(var + eps) * g + b

    def kernel(x_ref,        # (B, S, Din)  f32
               in_w,         # (Din, E)     bf16
               in_b,         # (1, E)       f32
               qkv_w,        # (L, E, 3E)   bf16  (Q columns pre-scaled by 1/sqrt(Dh))
               wo_w,         # (L, E, E)    bf16
               w1,           # (L, E, 512)  bf16
               w2,           # (L, 512, E)  bf16
               vec_e,        # (L, 9, E)    f32   rows: bq,bk,bv,bo,b2,g1,be1,g2,be2
               b1,           # (L, 1, 512)  f32
               out_w,        # (E, Cpad)    bf16
               out_b,        # (1, Cpad)    f32
               o_ref):       # (B*S, Cpad)  f32
        x3 = x_ref[...]                                   # (B, S, Din)
        x2d = x3.reshape(BS, x3.shape[-1])                # (B*S, Din)

        # PyTorch attn_mask: key columns whose raw-input row sums to 0 are masked.
        # NOTE: false-positives if a real row sums exactly to zero (matches the
        # reference model's own mask construction).  Finite -1e30 (not -inf) so a
        # fully-masked row gives a uniform softmax rather than NaN.
        key_bias = jnp.where(jnp.sum(x3, axis=-1) == 0.0,
                             jnp.float32(-1e30), jnp.float32(0.0))   # (B, S)
        key_bias = key_bias[:, None, :]                              # (B, 1, S)

        # Input projection: bf16 MXU operands, f32 accumulate.
        h = jnp.dot(x2d.astype(bf16), in_w[...],
                    preferred_element_type=f32) + in_b[...]          # (B*S, E)

        # TODO(synk): if num_layers is scaled up, switch this static unroll to a
        # lax.fori_loop over the stacked (L, ...) weights to bound trace size.
        for l in range(num_layers):
            ve = vec_e[l]                                            # (9, E) f32
            h_bf = h.astype(bf16)

            # Fused QKV projection: one (B*S,E)x(E,3E) matmul (96-lane output).
            qkv = jnp.dot(h_bf, qkv_w[l], preferred_element_type=f32)   # (B*S, 3E)
            q = qkv[:, 0 * E:1 * E] + ve[0:1]
            k = qkv[:, 1 * E:2 * E] + ve[1:2]
            v = qkv[:, 2 * E:3 * E] + ve[2:3]

            # Per-head scores / softmax / PV, batched over B via einsum.
            head_outs = []
            for hd in range(H):
                qh = q[:, hd * Dh:(hd + 1) * Dh].reshape(B, S, Dh).astype(bf16)
                kh = k[:, hd * Dh:(hd + 1) * Dh].reshape(B, S, Dh).astype(bf16)
                vh = v[:, hd * Dh:(hd + 1) * Dh].reshape(B, S, Dh).astype(bf16)
                s = jnp.einsum('bqd,bkd->bqk', qh, kh,
                               preferred_element_type=f32) + key_bias    # (B,S,S)
                m = jnp.max(s, axis=-1, keepdims=True)
                p = jnp.exp(s - m)
                p = p * pl.reciprocal(jnp.sum(p, axis=-1, keepdims=True),
                                      approx=True)
                oh = jnp.einsum('bqk,bkd->bqd', p.astype(bf16), vh,
                                preferred_element_type=f32)              # (B,S,Dh)
                head_outs.append(oh.reshape(BS, Dh))
            o_cat = jnp.concatenate(head_outs, axis=-1)                  # (B*S, E)

            # Single out-projection matmul on concatenated heads.
            attn = jnp.dot(o_cat.astype(bf16), wo_w[l],
                           preferred_element_type=f32) + ve[3:4]         # (B*S, E)

            # residual + norm1 (f32)
            y = ln(attn + h, ve[5:6], ve[6:7])

            # FFN: Linear(E,512) -> ReLU -> Linear(512,E)
            f = jnp.dot(y.astype(bf16), w1[l],
                        preferred_element_type=f32) + b1[l]
            f = jnp.maximum(f, 0.0)
            f = jnp.dot(f.astype(bf16), w2[l],
                        preferred_element_type=f32) + ve[4:5]

            # residual + norm2 (f32)
            h = ln(f + y, ve[7:8], ve[8:9])

        # Classifier: lane-dense (Cpad = 128) unmasked store.
        o_ref[...] = jnp.dot(h.astype(bf16), out_w[...],
                             preferred_element_type=f32) + out_b[...]

    return kernel


# ------------------------------ parameter init ------------------------------

def init_params(key, input_dim, num_heads, head_dim, num_layers, num_classes):
    E = num_heads * head_dim
    keys = list(jax.random.split(key, 4 + 8 * num_layers))
    ki = iter(keys)

    def lin(k, out_f, in_f):
        bound = 1.0 / math.sqrt(in_f)
        k1, k2 = jax.random.split(k)
        w = jax.random.uniform(k1, (out_f, in_f), jnp.float32, -bound, bound)
        b = jax.random.uniform(k2, (out_f,), jnp.float32, -bound, bound)
        return w, b

    params = {}
    params["in_w"], params["in_b"] = lin(next(ki), E, input_dim)
    layers = []
    for _ in range(num_layers):
        lw = {}
        # nn.MultiheadAttention: xavier-uniform in_proj_weight, zero biases
        xav = math.sqrt(6.0 / (E + E))
        lw["attn_in_w"] = jax.random.uniform(next(ki), (3 * E, E), jnp.float32, -xav, xav)
        lw["attn_in_b"] = jnp.zeros((3 * E,), jnp.float32)
        lw["attn_out_w"], _ = lin(next(ki), E, E)
        lw["attn_out_b"] = jnp.zeros((E,), jnp.float32)
        lw["ffn_w1"], lw["ffn_b1"] = lin(next(ki), 512, E)
        lw["ffn_w2"], lw["ffn_b2"] = lin(next(ki), E, 512)
        lw["norm1_g"] = jnp.ones((E,), jnp.float32)
        lw["norm1_b"] = jnp.zeros((E,), jnp.float32)
        lw["norm2_g"] = jnp.ones((E,), jnp.float32)
        lw["norm2_b"] = jnp.zeros((E,), jnp.float32)
        layers.append(lw)
    params["layers"] = layers
    params["out_w"], params["out_b"] = lin(next(ki), num_classes, E)
    return params


# ----------------- one-time weight prep (OUTSIDE the per-call path) -----------------

def prepare_inputs(params, num_heads, head_dim):
    """Transpose / head-fuse / bf16-cast / pad / stack weights once."""
    E = num_heads * head_dim
    scale = 1.0 / math.sqrt(head_dim)
    bf16, f32 = jnp.bfloat16, jnp.float32
    C = params["out_w"].shape[0]
    Cpad = ((C + 127) // 128) * 128            # lane-dense classifier output

    qkv_w_l, wo_l, w1_l, w2_l, vece_l, b1_l = [], [], [], [], [], []
    for layer in params["layers"]:
        wqkv = layer["attn_in_w"]              # (3E, E) rows [Wq; Wk; Wv]
        bqkv = layer["attn_in_b"]              # (3E,)
        wT = wqkv.T                            # (E, 3E) = [Wq^T | Wk^T | Wv^T]
        wT = wT.at[:, :E].multiply(scale)      # fold 1/sqrt(Dh) into Q weights
        bq = bqkv[:E] * scale                  # ... and into the Q bias
        bk = bqkv[E:2 * E]
        bv = bqkv[2 * E:]
        qkv_w_l.append(wT.astype(bf16))
        wo_l.append(layer["attn_out_w"].T.astype(bf16))
        w1_l.append(layer["ffn_w1"].T.astype(bf16))
        w2_l.append(layer["ffn_w2"].T.astype(bf16))
        vece_l.append(jnp.stack([bq, bk, bv,
                                 layer["attn_out_b"], layer["ffn_b2"],
                                 layer["norm1_g"], layer["norm1_b"],
                                 layer["norm2_g"], layer["norm2_b"]],
                                axis=0).astype(f32))          # (9, E)
        b1_l.append(layer["ffn_b1"].reshape(1, -1).astype(f32))  # (1, 512)

    prepped = dict(
        in_w=params["in_w"].T.astype(bf16),                    # (Din, E)
        in_b=params["in_b"].reshape(1, E).astype(f32),         # (1, E)
        qkv_w=jnp.stack(qkv_w_l),                              # (L, E, 3E)
        wo_w=jnp.stack(wo_l),                                  # (L, E, E)
        w1=jnp.stack(w1_l),                                    # (L, E, 512)
        w2=jnp.stack(w2_l),                                    # (L, 512, E)
        vec_e=jnp.stack(vece_l),                               # (L, 9, E)
        b1=jnp.stack(b1_l),                                    # (L, 1, 512)
        out_w=jnp.pad(params["out_w"].T,
                      ((0, 0), (0, Cpad - C))).astype(bf16),   # (E, Cpad)
        out_b=jnp.pad(params["out_b"],
                      (0, Cpad - C)).reshape(1, Cpad).astype(f32),
    )
    return prepped


# ------------------------------ forward wrapper ------------------------------

def custom_model_forward(prepped, x, num_heads, head_dim, num_classes,
                         return_probabilities=False):
    x = x.astype(jnp.float32)
    B, S, _ = x.shape
    L = prepped["qkv_w"].shape[0]
    Cpad = prepped["out_w"].shape[1]

    kernel = _make_fused_kernel(L, num_heads, head_dim, B, S)

    # Single kernel step (grid=()): all arrays full-block resident in VMEM,
    # no per-step grid overhead (dominant cost at these shapes on v5e/v6e).
    out_flat = pl.pallas_call(
        kernel,
        out_shape=jax.ShapeDtypeStruct((B * S, Cpad), jnp.float32),
    )(x, prepped["in_w"], prepped["in_b"], prepped["qkv_w"], prepped["wo_w"],
      prepped["w1"], prepped["w2"], prepped["vec_e"], prepped["b1"],
      prepped["out_w"], prepped["out_b"])

    out = out_flat.reshape(B, S, Cpad)[..., :num_classes]
    if return_probabilities:
        out = jax.nn.softmax(out, axis=-1)
    return out


# --------------------------------- main ---------------------------------

if __name__ == "__main__":
    input_dim = 16
    num_heads = 4
    head_dim = 8
    num_layers = 2
    num_classes = 10
    B, S = 2, 8

    root = jax.random.PRNGKey(0)
    k_param, k_x = jax.random.split(root)
    params = init_params(k_param, input_dim, num_heads, head_dim, num_layers, num_classes)
    x = jax.random.normal(k_x, (B, S, input_dim), dtype=jnp.float32)

    # One-time weight prep (NOT part of the jitted per-call path).
    prepped = jax.block_until_ready(prepare_inputs(params, num_heads, head_dim))

    fwd = jax.jit(functools.partial(custom_model_forward,
                                    num_heads=num_heads,
                                    head_dim=head_dim,
                                    num_classes=num_classes,
                                    return_probabilities=False))
    out = fwd(prepped, x)
    out = jax.block_until_ready(out)
    assert out.shape == (B, S, num_classes)
    assert bool(jnp.all(jnp.isfinite(out)))
    print("KERNEL_OK")
</pallas_src>

<mosaic_0001>
module attributes {stable_mosaic.version = 11 : i64} {
  func.func @kernel(%arg0: memref<2x8x16xf32, #tpu.memory_space<vmem>>, %arg1: memref<16x32xbf16, #tpu.memory_space<vmem>>, %arg2: memref<1x32xf32, #tpu.memory_space<vmem>>, %arg3: memref<2x32x96xbf16, #tpu.memory_space<vmem>>, %arg4: memref<2x32x32xbf16, #tpu.memory_space<vmem>>, %arg5: memref<2x32x512xbf16, #tpu.memory_space<vmem>>, %arg6: memref<2x512x32xbf16, #tpu.memory_space<vmem>>, %arg7: memref<2x9x32xf32, #tpu.memory_space<vmem>>, %arg8: memref<2x1x512xf32, #tpu.memory_space<vmem>>, %arg9: memref<32x128xbf16, #tpu.memory_space<vmem>>, %arg10: memref<1x128xf32, #tpu.memory_space<vmem>>, %arg11: memref<16x128xf32, #tpu.memory_space<vmem>>) attributes {dimension_semantics = [], scalar_prefetch = 0 : i64, scratch_operands = 0 : i64, tpu.core_type = #tpu.core_type<tc>} {
    %c0 = arith.constant 0 : index
    %c0_0 = arith.constant 0 : index
    %c0_1 = arith.constant 0 : index
    %0 = vector.load %arg0[%c0, %c0_0, %c0_1] : memref<2x8x16xf32, #tpu.memory_space<vmem>>, vector<2x8x16xf32>
    %1 = vector.shape_cast %0 : vector<2x8x16xf32> to vector<16x16xf32>
    %cst = arith.constant dense<0.000000e+00> : vector<2x8xf32>
    %2 = vector.multi_reduction <add>, %0, %cst [2] : vector<2x8x16xf32> to vector<2x8xf32>
    %cst_2 = arith.constant 0.000000e+00 : f32
    %3 = vector.broadcast %cst_2 : f32 to vector<2x8xf32>
    %4 = arith.cmpf oeq, %2, %3 : vector<2x8xf32>
    %cst_3 = arith.constant -1.000000e+30 : f32
    %cst_4 = arith.constant 0.000000e+00 : f32
    %5 = vector.broadcast %cst_3 : f32 to vector<2x8xf32>
    %6 = vector.broadcast %cst_4 : f32 to vector<2x8xf32>
    %7 = arith.select %4, %5, %6 : vector<2x8xi1>, vector<2x8xf32>
    %8 = vector.shape_cast %7 : vector<2x8xf32> to vector<2x1x8xf32>
    %9 = arith.truncf %1 : vector<16x16xf32> to vector<16x16xbf16>
    %c0_5 = arith.constant 0 : index
    %c0_6 = arith.constant 0 : index
    %10 = vector.load %arg1[%c0_5, %c0_6] : memref<16x32xbf16, #tpu.memory_space<vmem>>, vector<16x32xbf16>
    %cst_7 = arith.constant dense<0.000000e+00> : vector<16x32xf32>
    %11 = tpu.matmul %9, %10, %cst_7 {dimension_numbers = #tpu.dot_dimension_numbers<[1], [0], [0], [1], [0, 0, 1, 1], [], []>} : vector<16x16xbf16>, vector<16x32xbf16>, vector<16x32xf32> -> vector<16x32xf32>
    %c0_8 = arith.constant 0 : index
    %c0_9 = arith.constant 0 : index
    %12 = vector.load %arg2[%c0_8, %c0_9] : memref<1x32xf32, #tpu.memory_space<vmem>>, vector<1x32xf32>
    %13 = vector.broadcast %12 : vector<1x32xf32> to vector<16x32xf32>
    %14 = arith.addf %11, %13 : vector<16x32xf32>
    %c0_10 = arith.constant 0 : index
    %c0_11 = arith.constant 0 : index
    %c0_12 = arith.constant 0 : index
    %15 = vector.load %arg7[%c0_10, %c0_11, %c0_12] : memref<2x9x32xf32, #tpu.memory_space<vmem>>, vector<1x9x32xf32>
    %16 = vector.shape_cast %15 : vector<1x9x32xf32> to vector<9x32xf32>
    %17 = arith.truncf %14 : vector<16x32xf32> to vector<16x32xbf16>
    %c0_13 = arith.constant 0 : index
    %c0_14 = arith.constant 0 : index
    %c0_15 = arith.constant 0 : index
    %18 = vector.load %arg3[%c0_13, %c0_14, %c0_15] : memref<2x32x96xbf16, #tpu.memory_space<vmem>>, vector<1x32x96xbf16>
    %19 = vector.shape_cast %18 : vector<1x32x96xbf16> to vector<32x96xbf16>
    %cst_16 = arith.constant dense<0.000000e+00> : vector<16x96xf32>
    %20 = tpu.matmul %17, %19, %cst_16 {dimension_numbers = #tpu.dot_dimension_numbers<[1], [0], [0], [1], [0, 0, 1, 1], [], []>} : vector<16x32xbf16>, vector<32x96xbf16>, vector<16x96xf32> -> vector<16x96xf32>
    %21 = vector.extract_strided_slice %20 {offsets = [0, 0], sizes = [16, 32], strides = [1, 1]} : vector<16x96xf32> to vector<16x32xf32>
    %22 = vector.extract_strided_slice %16 {offsets = [0, 0], sizes = [1, 32], strides = [1, 1]} : vector<9x32xf32> to vector<1x32xf32>
    %23 = vector.broadcast %22 : vector<1x32xf32> to vector<16x32xf32>
    %24 = arith.addf %21, %23 : vector<16x32xf32>
    %25 = vector.extract_strided_slice %20 {offsets = [0, 32], sizes = [16, 32], strides = [1, 1]} : vector<16x96xf32> to vector<16x32xf32>
    %26 = vector.extract_strided_slice %16 {offsets = [1, 0], sizes = [1, 32], strides = [1, 1]} : vector<9x32xf32> to vector<1x32xf32>
    %27 = vector.broadcast %26 : vector<1x32xf32> to vector<16x32xf32>
    %28 = arith.addf %25, %27 : vector<16x32xf32>
    %29 = vector.extract_strided_slice %20 {offsets = [0, 64], sizes = [16, 32], strides = [1, 1]} : vector<16x96xf32> to vector<16x32xf32>
    %30 = vector.extract_strided_slice %16 {offsets = [2, 0], sizes = [1, 32], strides = [1, 1]} : vector<9x32xf32> to vector<1x32xf32>
    %31 = vector.broadcast %30 : vector<1x32xf32> to vector<16x32xf32>
    %32 = arith.addf %29, %31 : vector<16x32xf32>
    %33 = vector.extract_strided_slice %24 {offsets = [0, 0], sizes = [16, 8], strides = [1, 1]} : vector<16x32xf32> to vector<16x8xf32>
    %34 = vector.shape_cast %33 : vector<16x8xf32> to vector<2x8x8xf32>
    %35 = arith.truncf %34 : vector<2x8x8xf32> to vector<2x8x8xbf16>
    %36 = vector.extract_strided_slice %28 {offsets = [0, 0], sizes = [16, 8], strides = [1, 1]} : vector<16x32xf32> to vector<16x8xf32>
    %37 = vector.shape_cast %36 : vector<16x8xf32> to vector<2x8x8xf32>
    %38 = arith.truncf %37 : vector<2x8x8xf32> to vector<2x8x8xbf16>
    %39 = vector.extract_strided_slice %32 {offsets = [0, 0], sizes = [16, 8], strides = [1, 1]} : vector<16x32xf32> to vector<16x8xf32>
    %40 = vector.shape_cast %39 : vector<16x8xf32> to vector<2x8x8xf32>
    %41 = arith.truncf %40 : vector<2x8x8xf32> to vector<2x8x8xbf16>
    "tpu.trace_start"() <{level = 10 : i32, message = "bqd,bkd->bqk"}> : () -> ()
    %cst_17 = arith.constant dense<0.000000e+00> : vector<2x8x8xf32>
    %42 = tpu.matmul %35, %38, %cst_17 {dimension_numbers = #tpu.dot_dimension_numbers<[2], [2], [1], [1], [0, 0, 0, 1, 1, 1], [0], [0]>} : vector<2x8x8xbf16>, vector<2x8x8xbf16>, vector<2x8x8xf32> -> vector<2x8x8xf32>
    "tpu.trace_stop"() : () -> ()
    %43 = vector.broadcast %8 : vector<2x1x8xf32> to vector<2x8x8xf32>
    %44 = arith.addf %42, %43 : vector<2x8x8xf32>
    %cst_18 = arith.constant dense<0xFF800000> : vector<2x8xf32>
    %45 = vector.multi_reduction <maximumf>, %44, %cst_18 [2] : vector<2x8x8xf32> to vector<2x8xf32>
    %46 = vector.shape_cast %45 : vector<2x8xf32> to vector<2x8x1xf32>
    %47 = vector.broadcast %46 : vector<2x8x1xf32> to vector<2x8x8xf32>
    %48 = arith.subf %44, %47 : vector<2x8x8xf32>
    %49 = math.exp %48 : vector<2x8x8xf32>
    %cst_19 = arith.constant dense<0.000000e+00> : vector<2x8xf32>
    %50 = vector.multi_reduction <add>, %49, %cst_19 [2] : vector<2x8x8xf32> to vector<2x8xf32>
    %51 = vector.shape_cast %50 : vector<2x8xf32> to vector<2x8x1xf32>
    %52 = tpu.reciprocal %51 {approx = true} : vector<2x8x1xf32> -> vector<2x8x1xf32>
    %53 = vector.broadcast %52 : vector<2x8x1xf32> to vector<2x8x8xf32>
    %54 = arith.mulf %49, %53 : vector<2x8x8xf32>
    %55 = arith.truncf %54 : vector<2x8x8xf32> to vector<2x8x8xbf16>
    "tpu.trace_start"() <{level = 10 : i32, message = "bqk,bkd->bqd"}> : () -> ()
    %cst_20 = arith.constant dense<0.000000e+00> : vector<2x8x8xf32>
    %56 = tpu.matmul %55, %41, %cst_20 {dimension_numbers = #tpu.dot_dimension_numbers<[2], [1], [1], [2], [0, 0, 0, 1, 1, 2], [0], [0]>} : vector<2x8x8xbf16>, vector<2x8x8xbf16>, vector<2x8x8xf32> -> vector<2x8x8xf32>
    "tpu.trace_stop"() : () -> ()
    %57 = vector.shape_cast %56 : vector<2x8x8xf32> to vector<16x8xf32>
    %58 = vector.extract_strided_slice %24 {offsets = [0, 8], sizes = [16, 8], strides = [1, 1]} : vector<16x32xf32> to vector<16x8xf32>
    %59 = vector.shape_cast %58 : vector<16x8xf32> to vector<2x8x8xf32>
    %60 = arith.truncf %59 : vector<2x8x8xf32> to vector<2x8x8xbf16>
    %61 = vector.extract_strided_slice %28 {offsets = [0, 8], sizes = [16, 8], strides = [1, 1]} : vector<16x32xf32> to vector<16x8xf32>
    %62 = vector.shape_cast %61 : vector<16x8xf32> to vector<2x8x8xf32>
    %63 = arith.truncf %62 : vector<2x8x8xf32> to vector<2x8x8xbf16>
    %64 = vector.extract_strided_slice %32 {offsets = [0, 8], sizes = [16, 8], strides = [1, 1]} : vector<16x32xf32> to vector<16x8xf32>
    %65 = vector.shape_cast %64 : vector<16x8xf32> to vector<2x8x8xf32>
    %66 = arith.truncf %65 : vector<2x8x8xf32> to vector<2x8x8xbf16>
    "tpu.trace_start"() <{level = 10 : i32, message = "bqd,bkd->bqk"}> : () -> ()
    %cst_21 = arith.constant dense<0.000000e+00> : vector<2x8x8xf32>
    %67 = tpu.matmul %60, %63, %cst_21 {dimension_numbers = #tpu.dot_dimension_numbers<[2], [2], [1], [1], [0, 0, 0, 1, 1, 1], [0], [0]>} : vector<2x8x8xbf16>, vector<2x8x8xbf16>, vector<2x8x8xf32> -> vector<2x8x8xf32>
    "tpu.trace_stop"() : () -> ()
    %68 = vector.broadcast %8 : vector<2x1x8xf32> to vector<2x8x8xf32>
    %69 = arith.addf %67, %68 : vector<2x8x8xf32>
    %cst_22 = arith.constant dense<0xFF800000> : vector<2x8xf32>
    %70 = vector.multi_reduction <maximumf>, %69, %cst_22 [2] : vector<2x8x8xf32> to vector<2x8xf32>
    %71 = vector.shape_cast %70 : vector<2x8xf32> to vector<2x8x1xf32>
    %72 = vector.broadcast %71 : vector<2x8x1xf32> to vector<2x8x8xf32>
    %73 = arith.subf %69, %72 : vector<2x8x8xf32>
    %74 = math.exp %73 : vector<2x8x8xf32>
    %cst_23 = arith.constant dense<0.000000e+00> : vector<2x8xf32>
    %75 = vector.multi_reduction <add>, %74, %cst_23 [2] : vector<2x8x8xf32> to vector<2x8xf32>
    %76 = vector.shape_cast %75 : vector<2x8xf32> to vector<2x8x1xf32>
    %77 = tpu.reciprocal %76 {approx = true} : vector<2x8x1xf32> -> vector<2x8x1xf32>
    %78 = vector.broadcast %77 : vector<2x8x1xf32> to vector<2x8x8xf32>
    %79 = arith.mulf %74, %78 : vector<2x8x8xf32>
    %80 = arith.truncf %79 : vector<2x8x8xf32> to vector<2x8x8xbf16>
    "tpu.trace_start"() <{level = 10 : i32, message = "bqk,bkd->bqd"}> : () -> ()
    %cst_24 = arith.constant dense<0.000000e+00> : vector<2x8x8xf32>
    %81 = tpu.matmul %80, %66, %cst_24 {dimension_numbers = #tpu.dot_dimension_numbers<[2], [1], [1], [2], [0, 0, 0, 1, 1, 2], [0], [0]>} : vector<2x8x8xbf16>, vector<2x8x8xbf16>, vector<2x8x8xf32> -> vector<2x8x8xf32>
    "tpu.trace_stop"() : () -> ()
    %82 = vector.shape_cast %81 : vector<2x8x8xf32> to vector<16x8xf32>
    %83 = vector.extract_strided_slice %24 {offsets = [0, 16], sizes = [16, 8], strides = [1, 1]} : vector<16x32xf32> to vector<16x8xf32>
    %84 = vector.shape_cast %83 : vector<16x8xf32> to vector<2x8x8xf32>
    %85 = arith.truncf %84 : vector<2x8x8xf32> to vector<2x8x8xbf16>
    %86 = vector.extract_strided_slice %28 {offsets = [0, 16], sizes = [16, 8], strides = [1, 1]} : vector<16x32xf32> to vector<16x8xf32>
    %87 = vector.shape_cast %86 : vector<16x8xf32> to vector<2x8x8xf32>
    %88 = arith.truncf %87 : vector<2x8x8xf32> to vector<2x8x8xbf16>
    %89 = vector.extract_strided_slice %32 {offsets = [0, 16], sizes = [16, 8], strides = [1, 1]} : vector<16x32xf32> to vector<16x8xf32>
    %90 = vector.shape_cast %89 : vector<16x8xf32> to vector<2x8x8xf32>
    %91 = arith.truncf %90 : vector<2x8x8xf32> to vector<2x8x8xbf16>
    "tpu.trace_start"() <{level = 10 : i32, message = "bqd,bkd->bqk"}> : () -> ()
    %cst_25 = arith.constant dense<0.000000e+00> : vector<2x8x8xf32>
    %92 = tpu.matmul %85, %88, %cst_25 {dimension_numbers = #tpu.dot_dimension_numbers<[2], [2], [1], [1], [0, 0, 0, 1, 1, 1], [0], [0]>} : vector<2x8x8xbf16>, vector<2x8x8xbf16>, vector<2x8x8xf32> -> vector<2x8x8xf32>
    "tpu.trace_stop"() : () -> ()
    %93 = vector.broadcast %8 : vector<2x1x8xf32> to vector<2x8x8xf32>
    %94 = arith.addf %92, %93 : vector<2x8x8xf32>
    %cst_26 = arith.constant dense<0xFF800000> : vector<2x8xf32>
    %95 = vector.multi_reduction <maximumf>, %94, %cst_26 [2] : vector<2x8x8xf32> to vector<2x8xf32>
    %96 = vector.shape_cast %95 : vector<2x8xf32> to vector<2x8x1xf32>
    %97 = vector.broadcast %96 : vector<2x8x1xf32> to vector<2x8x8xf32>
    %98 = arith.subf %94, %97 : vector<2x8x8xf32>
    %99 = math.exp %98 : vector<2x8x8xf32>
    %cst_27 = arith.constant dense<0.000000e+00> : vector<2x8xf32>
    %100 = vector.multi_reduction <add>, %99, %cst_27 [2] : vector<2x8x8xf32> to vector<2x8xf32>
    %101 = vector.shape_cast %100 : vector<2x8xf32> to vector<2x8x1xf32>
    %102 = tpu.reciprocal %101 {approx = true} : vector<2x8x1xf32> -> vector<2x8x1xf32>
    %103 = vector.broadcast %102 : vector<2x8x1xf32> to vector<2x8x8xf32>
    %104 = arith.mulf %99, %103 : vector<2x8x8xf32>
    %105 = arith.truncf %104 : vector<2x8x8xf32> to vector<2x8x8xbf16>
    "tpu.trace_start"() <{level = 10 : i32, message = "bqk,bkd->bqd"}> : () -> ()
    %cst_28 = arith.constant dense<0.000000e+00> : vector<2x8x8xf32>
    %106 = tpu.matmul %105, %91, %cst_28 {dimension_numbers = #tpu.dot_dimension_numbers<[2], [1], [1], [2], [0, 0, 0, 1, 1, 2], [0], [0]>} : vector<2x8x8xbf16>, vector<2x8x8xbf16>, vector<2x8x8xf32> -> vector<2x8x8xf32>
    "tpu.trace_stop"() : () -> ()
    %107 = vector.shape_cast %106 : vector<2x8x8xf32> to vector<16x8xf32>
    %108 = vector.extract_strided_slice %24 {offsets = [0, 24], sizes = [16, 8], strides = [1, 1]} : vector<16x32xf32> to vector<16x8xf32>
    %109 = vector.shape_cast %108 : vector<16x8xf32> to vector<2x8x8xf32>
    %110 = arith.truncf %109 : vector<2x8x8xf32> to vector<2x8x8xbf16>
    %111 = vector.extract_strided_slice %28 {offsets = [0, 24], sizes = [16, 8], strides = [1, 1]} : vector<16x32xf32> to vector<16x8xf32>
    %112 = vector.shape_cast %111 : vector<16x8xf32> to vector<2x8x8xf32>
    %113 = arith.truncf %112 : vector<2x8x8xf32> to vector<2x8x8xbf16>
    %114 = vector.extract_strided_slice %32 {offsets = [0, 24], sizes = [16, 8], strides = [1, 1]} : vector<16x32xf32> to vector<16x8xf32>
    %115 = vector.shape_cast %114 : vector<16x8xf32> to vector<2x8x8xf32>
    %116 = arith.truncf %115 : vector<2x8x8xf32> to vector<2x8x8xbf16>
    "tpu.trace_start"() <{level = 10 : i32, message = "bqd,bkd->bqk"}> : () -> ()
    %cst_29 = arith.constant dense<0.000000e+00> : vector<2x8x8xf32>
    %117 = tpu.matmul %110, %113, %cst_29 {dimension_numbers = #tpu.dot_dimension_numbers<[2], [2], [1], [1], [0, 0, 0, 1, 1, 1], [0], [0]>} : vector<2x8x8xbf16>, vector<2x8x8xbf16>, vector<2x8x8xf32> -> vector<2x8x8xf32>
    "tpu.trace_stop"() : () -> ()
    %118 = vector.broadcast %8 : vector<2x1x8xf32> to vector<2x8x8xf32>
    %119 = arith.addf %117, %118 : vector<2x8x8xf32>
    %cst_30 = arith.constant dense<0xFF800000> : vector<2x8xf32>
    %120 = vector.multi_reduction <maximumf>, %119, %cst_30 [2] : vector<2x8x8xf32> to vector<2x8xf32>
    %121 = vector.shape_cast %120 : vector<2x8xf32> to vector<2x8x1xf32>
    %122 = vector.broadcast %121 : vector<2x8x1xf32> to vector<2x8x8xf32>
    %123 = arith.subf %119, %122 : vector<2x8x8xf32>
    %124 = math.exp %123 : vector<2x8x8xf32>
    %cst_31 = arith.constant dense<0.000000e+00> : vector<2x8xf32>
    %125 = vector.multi_reduction <add>, %124, %cst_31 [2] : vector<2x8x8xf32> to vector<2x8xf32>
    %126 = vector.shape_cast %125 : vector<2x8xf32> to vector<2x8x1xf32>
    %127 = tpu.reciprocal %126 {approx = true} : vector<2x8x1xf32> -> vector<2x8x1xf32>
    %128 = vector.broadcast %127 : vector<2x8x1xf32> to vector<2x8x8xf32>
    %129 = arith.mulf %124, %128 : vector<2x8x8xf32>
    %130 = arith.truncf %129 : vector<2x8x8xf32> to vector<2x8x8xbf16>
    "tpu.trace_start"() <{level = 10 : i32, message = "bqk,bkd->bqd"}> : () -> ()
    %cst_32 = arith.constant dense<0.000000e+00> : vector<2x8x8xf32>
    %131 = tpu.matmul %130, %116, %cst_32 {dimension_numbers = #tpu.dot_dimension_numbers<[2], [1], [1], [2], [0, 0, 0, 1, 1, 2], [0], [0]>} : vector<2x8x8xbf16>, vector<2x8x8xbf16>, vector<2x8x8xf32> -> vector<2x8x8xf32>
    "tpu.trace_stop"() : () -> ()
    %132 = vector.shape_cast %131 : vector<2x8x8xf32> to vector<16x8xf32>
    %133 = tpu.concatenate %57, %82, %107, %132 in 1 : vector<16x8xf32>, vector<16x8xf32>, vector<16x8xf32>, vector<16x8xf32> -> vector<16x32xf32>
    %134 = arith.truncf %133 : vector<16x32xf32> to vector<16x32xbf16>
    %c0_33 = arith.constant 0 : index
    %c0_34 = arith.constant 0 : index
    %c0_35 = arith.constant 0 : index
    %135 = vector.load %arg4[%c0_33, %c0_34, %c0_35] : memref<2x32x32xbf16, #tpu.memory_space<vmem>>, vector<1x32x32xbf16>
    %136 = vector.shape_cast %135 : vector<1x32x32xbf16> to vector<32x32xbf16>
    %cst_36 = arith.constant dense<0.000000e+00> : vector<16x32xf32>
    %137 = tpu.matmul %134, %136, %cst_36 {dimension_numbers = #tpu.dot_dimension_numbers<[1], [0], [0], [1], [0, 0, 1, 1], [], []>} : vector<16x32xbf16>, vector<32x32xbf16>, vector<16x32xf32> -> vector<16x32xf32>
    %138 = vector.extract_strided_slice %16 {offsets = [3, 0], sizes = [1, 32], strides = [1, 1]} : vector<9x32xf32> to vector<1x32xf32>
    %139 = vector.broadcast %138 : vector<1x32xf32> to vector<16x32xf32>
    %140 = arith.addf %137, %139 : vector<16x32xf32>
    %141 = arith.addf %140, %14 : vector<16x32xf32>
    %142 = vector.extract_strided_slice %16 {offsets = [5, 0], sizes = [1, 32], strides = [1, 1]} : vector<9x32xf32> to vector<1x32xf32>
    %143 = vector.extract_strided_slice %16 {offsets = [6, 0], sizes = [1, 32], strides = [1, 1]} : vector<9x32xf32> to vector<1x32xf32>
    %cst_37 = arith.constant dense<0.000000e+00> : vector<16xf32>
    %144 = vector.multi_reduction <add>, %141, %cst_37 [1] : vector<16x32xf32> to vector<16xf32>
    %145 = vector.shape_cast %144 : vector<16xf32> to vector<16x1xf32>
    %cst_38 = arith.constant 3.200000e+01 : f32
    %146 = vector.broadcast %cst_38 : f32 to vector<16x1xf32>
    %147 = arith.divf %145, %146 : vector<16x1xf32>
    %148 = vector.broadcast %147 : vector<16x1xf32> to vector<16x32xf32>
    %149 = arith.subf %141, %148 : vector<16x32xf32>
    %150 = arith.mulf %149, %149 : vector<16x32xf32>
    %cst_39 = arith.constant dense<0.000000e+00> : vector<16xf32>
    %151 = vector.multi_reduction <add>, %150, %cst_39 [1] : vector<16x32xf32> to vector<16xf32>
    %152 = vector.shape_cast %151 : vector<16xf32> to vector<16x1xf32>
    %cst_40 = arith.constant 3.200000e+01 : f32
    %153 = vector.broadcast %cst_40 : f32 to vector<16x1xf32>
    %154 = arith.divf %152, %153 : vector<16x1xf32>
    %155 = vector.broadcast %147 : vector<16x1xf32> to vector<16x32xf32>
    %156 = arith.subf %141, %155 : vector<16x32xf32>
    %cst_41 = arith.constant 9.99999974E-6 : f32
    %157 = vector.broadcast %cst_41 : f32 to vector<16x1xf32>
    %158 = arith.addf %154, %157 : vector<16x1xf32>
    %159 = math.rsqrt %158 : vector<16x1xf32>
    %160 = vector.broadcast %159 : vector<16x1xf32> to vector<16x32xf32>
    %161 = arith.mulf %156, %160 : vector<16x32xf32>
    %162 = vector.broadcast %142 : vector<1x32xf32> to vector<16x32xf32>
    %163 = arith.mulf %161, %162 : vector<16x32xf32>
    %164 = vector.broadcast %143 : vector<1x32xf32> to vector<16x32xf32>
    %165 = arith.addf %163, %164 : vector<16x32xf32>
    %166 = arith.truncf %165 : vector<16x32xf32> to vector<16x32xbf16>
    %c0_42 = arith.constant 0 : index
    %c0_43 = arith.constant 0 : index
    %c0_44 = arith.constant 0 : index
    %167 = vector.load %arg5[%c0_42, %c0_43, %c0_44] : memref<2x32x512xbf16, #tpu.memory_space<vmem>>, vector<1x32x512xbf16>
    %168 = vector.shape_cast %167 : vector<1x32x512xbf16> to vector<32x512xbf16>
    %cst_45 = arith.constant dense<0.000000e+00> : vector<16x512xf32>
    %169 = tpu.matmul %166, %168, %cst_45 {dimension_numbers = #tpu.dot_dimension_numbers<[1], [0], [0], [1], [0, 0, 1, 1], [], []>} : vector<16x32xbf16>, vector<32x512xbf16>, vector<16x512xf32> -> vector<16x512xf32>
    %c0_46 = arith.constant 0 : index
    %c0_47 = arith.constant 0 : index
    %c0_48 = arith.constant 0 : index
    %170 = vector.load %arg8[%c0_46, %c0_47, %c0_48] : memref<2x1x512xf32, #tpu.memory_space<vmem>>, vector<1x1x512xf32>
    %171 = vector.shape_cast %170 : vector<1x1x512xf32> to vector<1x512xf32>
    %172 = vector.broadcast %171 : vector<1x512xf32> to vector<16x512xf32>
    %173 = arith.addf %169, %172 : vector<16x512xf32>
    %cst_49 = arith.constant 0.000000e+00 : f32
    %174 = vector.broadcast %cst_49 : f32 to vector<16x512xf32>
    %175 = arith.maximumf %173, %174 : vector<16x512xf32>
    %176 = arith.truncf %175 : vector<16x512xf32> to vector<16x512xbf16>
    %c0_50 = arith.constant 0 : index
    %c0_51 = arith.constant 0 : index
    %c0_52 = arith.constant 0 : index
    %177 = vector.load %arg6[%c0_50, %c0_51, %c0_52] : memref<2x512x32xbf16, #tpu.memory_space<vmem>>, vector<1x512x32xbf16>
    %178 = vector.shape_cast %177 : vector<1x512x32xbf16> to vector<512x32xbf16>
    %cst_53 = arith.constant dense<0.000000e+00> : vector<16x32xf32>
    %179 = tpu.matmul %176, %178, %cst_53 {dimension_numbers = #tpu.dot_dimension_numbers<[1], [0], [0], [1], [0, 0, 1, 1], [], []>} : vector<16x512xbf16>, vector<512x32xbf16>, vector<16x32xf32> -> vector<16x32xf32>
    %180 = vector.extract_strided_slice %16 {offsets = [4, 0], sizes = [1, 32], strides = [1, 1]} : vector<9x32xf32> to vector<1x32xf32>
    %181 = vector.broadcast %180 : vector<1x32xf32> to vector<16x32xf32>
    %182 = arith.addf %179, %181 : vector<16x32xf32>
    %183 = arith.addf %182, %165 : vector<16x32xf32>
    %184 = vector.extract_strided_slice %16 {offsets = [7, 0], sizes = [1, 32], strides = [1, 1]} : vector<9x32xf32> to vector<1x32xf32>
    %185 = vector.extract_strided_slice %16 {offsets = [8, 0], sizes = [1, 32], strides = [1, 1]} : vector<9x32xf32> to vector<1x32xf32>
    %cst_54 = arith.constant dense<0.000000e+00> : vector<16xf32>
    %186 = vector.multi_reduction <add>, %183, %cst_54 [1] : vector<16x32xf32> to vector<16xf32>
    %187 = vector.shape_cast %186 : vector<16xf32> to vector<16x1xf32>
    %cst_55 = arith.constant 3.200000e+01 : f32
    %188 = vector.broadcast %cst_55 : f32 to vector<16x1xf32>
    %189 = arith.divf %187, %188 : vector<16x1xf32>
    %190 = vector.broadcast %189 : vector<16x1xf32> to vector<16x32xf32>
    %191 = arith.subf %183, %190 : vector<16x32xf32>
    %192 = arith.mulf %191, %191 : vector<16x32xf32>
    %cst_56 = arith.constant dense<0.000000e+00> : vector<16xf32>
    %193 = vector.multi_reduction <add>, %192, %cst_56 [1] : vector<16x32xf32> to vector<16xf32>
    %194 = vector.shape_cast %193 : vector<16xf32> to vector<16x1xf32>
    %cst_57 = arith.constant 3.200000e+01 : f32
    %195 = vector.broadcast %cst_57 : f32 to vector<16x1xf32>
    %196 = arith.divf %194, %195 : vector<16x1xf32>
    %197 = vector.broadcast %189 : vector<16x1xf32> to vector<16x32xf32>
    %198 = arith.subf %183, %197 : vector<16x32xf32>
    %cst_58 = arith.constant 9.99999974E-6 : f32
    %199 = vector.broadcast %cst_58 : f32 to vector<16x1xf32>
    %200 = arith.addf %196, %199 : vector<16x1xf32>
    %201 = math.rsqrt %200 : vector<16x1xf32>
    %202 = vector.broadcast %201 : vector<16x1xf32> to vector<16x32xf32>
    %203 = arith.mulf %198, %202 : vector<16x32xf32>
    %204 = vector.broadcast %184 : vector<1x32xf32> to vector<16x32xf32>
    %205 = arith.mulf %203, %204 : vector<16x32xf32>
    %206 = vector.broadcast %185 : vector<1x32xf32> to vector<16x32xf32>
    %207 = arith.addf %205, %206 : vector<16x32xf32>
    %c1 = arith.constant 1 : index
    %c0_59 = arith.constant 0 : index
    %c0_60 = arith.constant 0 : index
    %208 = vector.load %arg7[%c1, %c0_59, %c0_60] : memref<2x9x32xf32, #tpu.memory_space<vmem>>, vector<1x9x32xf32>
    %209 = vector.shape_cast %208 : vector<1x9x32xf32> to vector<9x32xf32>
    %210 = arith.truncf %207 : vector<16x32xf32> to vector<16x32xbf16>
    %c1_61 = arith.constant 1 : index
    %c0_62 = arith.constant 0 : index
    %c0_63 = arith.constant 0 : index
    %211 = vector.load %arg3[%c1_61, %c0_62, %c0_63] : memref<2x32x96xbf16, #tpu.memory_space<vmem>>, vector<1x32x96xbf16>
    %212 = vector.shape_cast %211 : vector<1x32x96xbf16> to vector<32x96xbf16>
    %cst_64 = arith.constant dense<0.000000e+00> : vector<16x96xf32>
    %213 = tpu.matmul %210, %212, %cst_64 {dimension_numbers = #tpu.dot_dimension_numbers<[1], [0], [0], [1], [0, 0, 1, 1], [], []>} : vector<16x32xbf16>, vector<32x96xbf16>, vector<16x96xf32> -> vector<16x96xf32>
    %214 = vector.extract_strided_slice %213 {offsets = [0, 0], sizes = [16, 32], strides = [1, 1]} : vector<16x96xf32> to vector<16x32xf32>
    %215 = vector.extract_strided_slice %209 {offsets = [0, 0], sizes = [1, 32], strides = [1, 1]} : vector<9x32xf32> to vector<1x32xf32>
    %216 = vector.broadcast %215 : vector<1x32xf32> to vector<16x32xf32>
    %217 = arith.addf %214, %216 : vector<16x32xf32>
    %218 = vector.extract_strided_slice %213 {offsets = [0, 32], sizes = [16, 32], strides = [1, 1]} : vector<16x96xf32> to vector<16x32xf32>
    %219 = vector.extract_strided_slice %209 {offsets = [1, 0], sizes = [1, 32], strides = [1, 1]} : vector<9x32xf32> to vector<1x32xf32>
    %220 = vector.broadcast %219 : vector<1x32xf32> to vector<16x32xf32>
    %221 = arith.addf %218, %220 : vector<16x32xf32>
    %222 = vector.extract_strided_slice %213 {offsets = [0, 64], sizes = [16, 32], strides = [1, 1]} : vector<16x96xf32> to vector<16x32xf32>
    %223 = vector.extract_strided_slice %209 {offsets = [2, 0], sizes = [1, 32], strides = [1, 1]} : vector<9x32xf32> to vector<1x32xf32>
    %224 = vector.broadcast %223 : vector<1x32xf32> to vector<16x32xf32>
    %225 = arith.addf %222, %224 : vector<16x32xf32>
    %226 = vector.extract_strided_slice %217 {offsets = [0, 0], sizes = [16, 8], strides = [1, 1]} : vector<16x32xf32> to vector<16x8xf32>
    %227 = vector.shape_cast %226 : vector<16x8xf32> to vector<2x8x8xf32>
    %228 = arith.truncf %227 : vector<2x8x8xf32> to vector<2x8x8xbf16>
    %229 = vector.extract_strided_slice %221 {offsets = [0, 0], sizes = [16, 8], strides = [1, 1]} : vector<16x32xf32> to vector<16x8xf32>
    %230 = vector.shape_cast %229 : vector<16x8xf32> to vector<2x8x8xf32>
    %231 = arith.truncf %230 : vector<2x8x8xf32> to vector<2x8x8xbf16>
    %232 = vector.extract_strided_slice %225 {offsets = [0, 0], sizes = [16, 8], strides = [1, 1]} : vector<16x32xf32> to vector<16x8xf32>
    %233 = vector.shape_cast %232 : vector<16x8xf32> to vector<2x8x8xf32>
    %234 = arith.truncf %233 : vector<2x8x8xf32> to vector<2x8x8xbf16>
    "tpu.trace_start"() <{level = 10 : i32, message = "bqd,bkd->bqk"}> : () -> ()
    %cst_65 = arith.constant dense<0.000000e+00> : vector<2x8x8xf32>
    %235 = tpu.matmul %228, %231, %cst_65 {dimension_numbers = #tpu.dot_dimension_numbers<[2], [2], [1], [1], [0, 0, 0, 1, 1, 1], [0], [0]>} : vector<2x8x8xbf16>, vector<2x8x8xbf16>, vector<2x8x8xf32> -> vector<2x8x8xf32>
    "tpu.trace_stop"() : () -> ()
    %236 = vector.broadcast %8 : vector<2x1x8xf32> to vector<2x8x8xf32>
    %237 = arith.addf %235, %236 : vector<2x8x8xf32>
    %cst_66 = arith.constant dense<0xFF800000> : vector<2x8xf32>
    %238 = vector.multi_reduction <maximumf>, %237, %cst_66 [2] : vector<2x8x8xf32> to vector<2x8xf32>
    %239 = vector.shape_cast %238 : vector<2x8xf32> to vector<2x8x1xf32>
    %240 = vector.broadcast %239 : vector<2x8x1xf32> to vector<2x8x8xf32>
    %241 = arith.subf %237, %240 : vector<2x8x8xf32>
    %242 = math.exp %241 : vector<2x8x8xf32>
    %cst_67 = arith.constant dense<0.000000e+00> : vector<2x8xf32>
    %243 = vector.multi_reduction <add>, %242, %cst_67 [2] : vector<2x8x8xf32> to vector<2x8xf32>
    %244 = vector.shape_cast %243 : vector<2x8xf32> to vector<2x8x1xf32>
    %245 = tpu.reciprocal %244 {approx = true} : vector<2x8x1xf32> -> vector<2x8x1xf32>
    %246 = vector.broadcast %245 : vector<2x8x1xf32> to vector<2x8x8xf32>
    %247 = arith.mulf %242, %246 : vector<2x8x8xf32>
    %248 = arith.truncf %247 : vector<2x8x8xf32> to vector<2x8x8xbf16>
    "tpu.trace_start"() <{level = 10 : i32, message = "bqk,bkd->bqd"}> : () -> ()
    %cst_68 = arith.constant dense<0.000000e+00> : vector<2x8x8xf32>
    %249 = tpu.matmul %248, %234, %cst_68 {dimension_numbers = #tpu.dot_dimension_numbers<[2], [1], [1], [2], [0, 0, 0, 1, 1, 2], [0], [0]>} : vector<2x8x8xbf16>, vector<2x8x8xbf16>, vector<2x8x8xf32> -> vector<2x8x8xf32>
    "tpu.trace_stop"() : () -> ()
    %250 = vector.shape_cast %249 : vector<2x8x8xf32> to vector<16x8xf32>
    %251 = vector.extract_strided_slice %217 {offsets = [0, 8], sizes = [16, 8], strides = [1, 1]} : vector<16x32xf32> to vector<16x8xf32>
    %252 = vector.shape_cast %251 : vector<16x8xf32> to vector<2x8x8xf32>
    %253 = arith.truncf %252 : vector<2x8x8xf32> to vector<2x8x8xbf16>
    %254 = vector.extract_strided_slice %221 {offsets = [0, 8], sizes = [16, 8], strides = [1, 1]} : vector<16x32xf32> to vector<16x8xf32>
    %255 = vector.shape_cast %254 : vector<16x8xf32> to vector<2x8x8xf32>
    %256 = arith.truncf %255 : vector<2x8x8xf32> to vector<2x8x8xbf16>
    %257 = vector.extract_strided_slice %225 {offsets = [0, 8], sizes = [16, 8], strides = [1, 1]} : vector<16x32xf32> to vector<16x8xf32>
    %258 = vector.shape_cast %257 : vector<16x8xf32> to vector<2x8x8xf32>
    %259 = arith.truncf %258 : vector<2x8x8xf32> to vector<2x8x8xbf16>
    "tpu.trace_start"() <{level = 10 : i32, message = "bqd,bkd->bqk"}> : () -> ()
    %cst_69 = arith.constant dense<0.000000e+00> : vector<2x8x8xf32>
    %260 = tpu.matmul %253, %256, %cst_69 {dimension_numbers = #tpu.dot_dimension_numbers<[2], [2], [1], [1], [0, 0, 0, 1, 1, 1], [0], [0]>} : vector<2x8x8xbf16>, vector<2x8x8xbf16>, vector<2x8x8xf32> -> vector<2x8x8xf32>
    "tpu.trace_stop"() : () -> ()
    %261 = vector.broadcast %8 : vector<2x1x8xf32> to vector<2x8x8xf32>
    %262 = arith.addf %260, %261 : vector<2x8x8xf32>
    %cst_70 = arith.constant dense<0xFF800000> : vector<2x8xf32>
    %263 = vector.multi_reduction <maximumf>, %262, %cst_70 [2] : vector<2x8x8xf32> to vector<2x8xf32>
    %264 = vector.shape_cast %263 : vector<2x8xf32> to vector<2x8x1xf32>
    %265 = vector.broadcast %264 : vector<2x8x1xf32> to vector<2x8x8xf32>
    %266 = arith.subf %262, %265 : vector<2x8x8xf32>
    %267 = math.exp %266 : vector<2x8x8xf32>
    %cst_71 = arith.constant dense<0.000000e+00> : vector<2x8xf32>
    %268 = vector.multi_reduction <add>, %267, %cst_71 [2] : vector<2x8x8xf32> to vector<2x8xf32>
    %269 = vector.shape_cast %268 : vector<2x8xf32> to vector<2x8x1xf32>
    %270 = tpu.reciprocal %269 {approx = true} : vector<2x8x1xf32> -> vector<2x8x1xf32>
    %271 = vector.broadcast %270 : vector<2x8x1xf32> to vector<2x8x8xf32>
    %272 = arith.mulf %267, %271 : vector<2x8x8xf32>
    %273 = arith.truncf %272 : vector<2x8x8xf32> to vector<2x8x8xbf16>
    "tpu.trace_start"() <{level = 10 : i32, message = "bqk,bkd->bqd"}> : () -> ()
    %cst_72 = arith.constant dense<0.000000e+00> : vector<2x8x8xf32>
    %274 = tpu.matmul %273, %259, %cst_72 {dimension_numbers = #tpu.dot_dimension_numbers<[2], [1], [1], [2], [0, 0, 0, 1, 1, 2], [0], [0]>} : vector<2x8x8xbf16>, vector<2x8x8xbf16>, vector<2x8x8xf32> -> vector<2x8x8xf32>
    "tpu.trace_stop"() : () -> ()
    %275 = vector.shape_cast %274 : vector<2x8x8xf32> to vector<16x8xf32>
    %276 = vector.extract_strided_slice %217 {offsets = [0, 16], sizes = [16, 8], strides = [1, 1]} : vector<16x32xf32> to vector<16x8xf32>
    %277 = vector.shape_cast %276 : vector<16x8xf32> to vector<2x8x8xf32>
    %278 = arith.truncf %277 : vector<2x8x8xf32> to vector<2x8x8xbf16>
    %279 = vector.extract_strided_slice %221 {offsets = [0, 16], sizes = [16, 8], strides = [1, 1]} : vector<16x32xf32> to vector<16x8xf32>
    %280 = vector.shape_cast %279 : vector<16x8xf32> to vector<2x8x8xf32>
    %281 = arith.truncf %280 : vector<2x8x8xf32> to vector<2x8x8xbf16>
    %282 = vector.extract_strided_slice %225 {offsets = [0, 16], sizes = [16, 8], strides = [1, 1]} : vector<16x32xf32> to vector<16x8xf32>
    %283 = vector.shape_cast %282 : vector<16x8xf32> to vector<2x8x8xf32>
    %284 = arith.truncf %283 : vector<2x8x8xf32> to vector<2x8x8xbf16>
    "tpu.trace_start"() <{level = 10 : i32, message = "bqd,bkd->bqk"}> : () -> ()
    %cst_73 = arith.constant dense<0.000000e+00> : vector<2x8x8xf32>
    %285 = tpu.matmul %278, %281, %cst_73 {dimension_numbers = #tpu.dot_dimension_numbers<[2], [2], [1], [1], [0, 0, 0, 1, 1, 1], [0], [0]>} : vector<2x8x8xbf16>, vector<2x8x8xbf16>, vector<2x8x8xf32> -> vector<2x8x8xf32>
    "tpu.trace_stop"() : () -> ()
    %286 = vector.broadcast %8 : vector<2x1x8xf32> to vector<2x8x8xf32>
    %287 = arith.addf %285, %286 : vector<2x8x8xf32>
    %cst_74 = arith.constant dense<0xFF800000> : vector<2x8xf32>
    %288 = vector.multi_reduction <maximumf>, %287, %cst_74 [2] : vector<2x8x8xf32> to vector<2x8xf32>
    %289 = vector.shape_cast %288 : vector<2x8xf32> to vector<2x8x1xf32>
    %290 = vector.broadcast %289 : vector<2x8x1xf32> to vector<2x8x8xf32>
    %291 = arith.subf %287, %290 : vector<2x8x8xf32>
    %292 = math.exp %291 : vector<2x8x8xf32>
    %cst_75 = arith.constant dense<0.000000e+00> : vector<2x8xf32>
    %293 = vector.multi_reduction <add>, %292, %cst_75 [2] : vector<2x8x8xf32> to vector<2x8xf32>
    %294 = vector.shape_cast %293 : vector<2x8xf32> to vector<2x8x1xf32>
    %295 = tpu.reciprocal %294 {approx = true} : vector<2x8x1xf32> -> vector<2x8x1xf32>
    %296 = vector.broadcast %295 : vector<2x8x1xf32> to vector<2x8x8xf32>
    %297 = arith.mulf %292, %296 : vector<2x8x8xf32>
    %298 = arith.truncf %297 : vector<2x8x8xf32> to vector<2x8x8xbf16>
    "tpu.trace_start"() <{level = 10 : i32, message = "bqk,bkd->bqd"}> : () -> ()
    %cst_76 = arith.constant dense<0.000000e+00> : vector<2x8x8xf32>
    %299 = tpu.matmul %298, %284, %cst_76 {dimension_numbers = #tpu.dot_dimension_numbers<[2], [1], [1], [2], [0, 0, 0, 1, 1, 2], [0], [0]>} : vector<2x8x8xbf16>, vector<2x8x8xbf16>, vector<2x8x8xf32> -> vector<2x8x8xf32>
    "tpu.trace_stop"() : () -> ()
    %300 = vector.shape_cast %299 : vector<2x8x8xf32> to vector<16x8xf32>
    %301 = vector.extract_strided_slice %217 {offsets = [0, 24], sizes = [16, 8], strides = [1, 1]} : vector<16x32xf32> to vector<16x8xf32>
    %302 = vector.shape_cast %301 : vector<16x8xf32> to vector<2x8x8xf32>
    %303 = arith.truncf %302 : vector<2x8x8xf32> to vector<2x8x8xbf16>
    %304 = vector.extract_strided_slice %221 {offsets = [0, 24], sizes = [16, 8], strides = [1, 1]} : vector<16x32xf32> to vector<16x8xf32>
    %305 = vector.shape_cast %304 : vector<16x8xf32> to vector<2x8x8xf32>
    %306 = arith.truncf %305 : vector<2x8x8xf32> to vector<2x8x8xbf16>
    %307 = vector.extract_strided_slice %225 {offsets = [0, 24], sizes = [16, 8], strides = [1, 1]} : vector<16x32xf32> to vector<16x8xf32>
    %308 = vector.shape_cast %307 : vector<16x8xf32> to vector<2x8x8xf32>
    %309 = arith.truncf %308 : vector<2x8x8xf32> to vector<2x8x8xbf16>
    "tpu.trace_start"() <{level = 10 : i32, message = "bqd,bkd->bqk"}> : () -> ()
    %cst_77 = arith.constant dense<0.000000e+00> : vector<2x8x8xf32>
    %310 = tpu.matmul %303, %306, %cst_77 {dimension_numbers = #tpu.dot_dimension_numbers<[2], [2], [1], [1], [0, 0, 0, 1, 1, 1], [0], [0]>} : vector<2x8x8xbf16>, vector<2x8x8xbf16>, vector<2x8x8xf32> -> vector<2x8x8xf32>
    "tpu.trace_stop"() : () -> ()
    %311 = vector.broadcast %8 : vector<2x1x8xf32> to vector<2x8x8xf32>
    %312 = arith.addf %310, %311 : vector<2x8x8xf32>
    %cst_78 = arith.constant dense<0xFF800000> : vector<2x8xf32>
    %313 = vector.multi_reduction <maximumf>, %312, %cst_78 [2] : vector<2x8x8xf32> to vector<2x8xf32>
    %314 = vector.shape_cast %313 : vector<2x8xf32> to vector<2x8x1xf32>
    %315 = vector.broadcast %314 : vector<2x8x1xf32> to vector<2x8x8xf32>
    %316 = arith.subf %312, %315 : vector<2x8x8xf32>
    %317 = math.exp %316 : vector<2x8x8xf32>
    %cst_79 = arith.constant dense<0.000000e+00> : vector<2x8xf32>
    %318 = vector.multi_reduction <add>, %317, %cst_79 [2] : vector<2x8x8xf32> to vector<2x8xf32>
    %319 = vector.shape_cast %318 : vector<2x8xf32> to vector<2x8x1xf32>
    %320 = tpu.reciprocal %319 {approx = true} : vector<2x8x1xf32> -> vector<2x8x1xf32>
    %321 = vector.broadcast %320 : vector<2x8x1xf32> to vector<2x8x8xf32>
    %322 = arith.mulf %317, %321 : vector<2x8x8xf32>
    %323 = arith.truncf %322 : vector<2x8x8xf32> to vector<2x8x8xbf16>
    "tpu.trace_start"() <{level = 10 : i32, message = "bqk,bkd->bqd"}> : () -> ()
    %cst_80 = arith.constant dense<0.000000e+00> : vector<2x8x8xf32>
    %324 = tpu.matmul %323, %309, %cst_80 {dimension_numbers = #tpu.dot_dimension_numbers<[2], [1], [1], [2], [0, 0, 0, 1, 1, 2], [0], [0]>} : vector<2x8x8xbf16>, vector<2x8x8xbf16>, vector<2x8x8xf32> -> vector<2x8x8xf32>
    "tpu.trace_stop"() : () -> ()
    %325 = vector.shape_cast %324 : vector<2x8x8xf32> to vector<16x8xf32>
    %326 = tpu.concatenate %250, %275, %300, %325 in 1 : vector<16x8xf32>, vector<16x8xf32>, vector<16x8xf32>, vector<16x8xf32> -> vector<16x32xf32>
    %327 = arith.truncf %326 : vector<16x32xf32> to vector<16x32xbf16>
    %c1_81 = arith.constant 1 : index
    %c0_82 = arith.constant 0 : index
    %c0_83 = arith.constant 0 : index
    %328 = vector.load %arg4[%c1_81, %c0_82, %c0_83] : memref<2x32x32xbf16, #tpu.memory_space<vmem>>, vector<1x32x32xbf16>
    %329 = vector.shape_cast %328 : vector<1x32x32xbf16> to vector<32x32xbf16>
    %cst_84 = arith.constant dense<0.000000e+00> : vector<16x32xf32>
    %330 = tpu.matmul %327, %329, %cst_84 {dimension_numbers = #tpu.dot_dimension_numbers<[1], [0], [0], [1], [0, 0, 1, 1], [], []>} : vector<16x32xbf16>, vector<32x32xbf16>, vector<16x32xf32> -> vector<16x32xf32>
    %331 = vector.extract_strided_slice %209 {offsets = [3, 0], sizes = [1, 32], strides = [1, 1]} : vector<9x32xf32> to vector<1x32xf32>
    %332 = vector.broadcast %331 : vector<1x32xf32> to vector<16x32xf32>
    %333 = arith.addf %330, %332 : vector<16x32xf32>
    %334 = arith.addf %333, %207 : vector<16x32xf32>
    %335 = vector.extract_strided_slice %209 {offsets = [5, 0], sizes = [1, 32], strides = [1, 1]} : vector<9x32xf32> to vector<1x32xf32>
    %336 = vector.extract_strided_slice %209 {offsets = [6, 0], sizes = [1, 32], strides = [1, 1]} : vector<9x32xf32> to vector<1x32xf32>
    %cst_85 = arith.constant dense<0.000000e+00> : vector<16xf32>
    %337 = vector.multi_reduction <add>, %334, %cst_85 [1] : vector<16x32xf32> to vector<16xf32>
    %338 = vector.shape_cast %337 : vector<16xf32> to vector<16x1xf32>
    %cst_86 = arith.constant 3.200000e+01 : f32
    %339 = vector.broadcast %cst_86 : f32 to vector<16x1xf32>
    %340 = arith.divf %338, %339 : vector<16x1xf32>
    %341 = vector.broadcast %340 : vector<16x1xf32> to vector<16x32xf32>
    %342 = arith.subf %334, %341 : vector<16x32xf32>
    %343 = arith.mulf %342, %342 : vector<16x32xf32>
    %cst_87 = arith.constant dense<0.000000e+00> : vector<16xf32>
    %344 = vector.multi_reduction <add>, %343, %cst_87 [1] : vector<16x32xf32> to vector<16xf32>
    %345 = vector.shape_cast %344 : vector<16xf32> to vector<16x1xf32>
    %cst_88 = arith.constant 3.200000e+01 : f32
    %346 = vector.broadcast %cst_88 : f32 to vector<16x1xf32>
    %347 = arith.divf %345, %346 : vector<16x1xf32>
    %348 = vector.broadcast %340 : vector<16x1xf32> to vector<16x32xf32>
    %349 = arith.subf %334, %348 : vector<16x32xf32>
    %cst_89 = arith.constant 9.99999974E-6 : f32
    %350 = vector.broadcast %cst_89 : f32 to vector<16x1xf32>
    %351 = arith.addf %347, %350 : vector<16x1xf32>
    %352 = math.rsqrt %351 : vector<16x1xf32>
    %353 = vector.broadcast %352 : vector<16x1xf32> to vector<16x32xf32>
    %354 = arith.mulf %349, %353 : vector<16x32xf32>
    %355 = vector.broadcast %335 : vector<1x32xf32> to vector<16x32xf32>
    %356 = arith.mulf %354, %355 : vector<16x32xf32>
    %357 = vector.broadcast %336 : vector<1x32xf32> to vector<16x32xf32>
    %358 = arith.addf %356, %357 : vector<16x32xf32>
    %359 = arith.truncf %358 : vector<16x32xf32> to vector<16x32xbf16>
    %c1_90 = arith.constant 1 : index
    %c0_91 = arith.constant 0 : index
    %c0_92 = arith.constant 0 : index
    %360 = vector.load %arg5[%c1_90, %c0_91, %c0_92] : memref<2x32x512xbf16, #tpu.memory_space<vmem>>, vector<1x32x512xbf16>
    %361 = vector.shape_cast %360 : vector<1x32x512xbf16> to vector<32x512xbf16>
    %cst_93 = arith.constant dense<0.000000e+00> : vector<16x512xf32>
    %362 = tpu.matmul %359, %361, %cst_93 {dimension_numbers = #tpu.dot_dimension_numbers<[1], [0], [0], [1], [0, 0, 1, 1], [], []>} : vector<16x32xbf16>, vector<32x512xbf16>, vector<16x512xf32> -> vector<16x512xf32>
    %c1_94 = arith.constant 1 : index
    %c0_95 = arith.constant 0 : index
    %c0_96 = arith.constant 0 : index
    %363 = vector.load %arg8[%c1_94, %c0_95, %c0_96] : memref<2x1x512xf32, #tpu.memory_space<vmem>>, vector<1x1x512xf32>
    %364 = vector.shape_cast %363 : vector<1x1x512xf32> to vector<1x512xf32>
    %365 = vector.broadcast %364 : vector<1x512xf32> to vector<16x512xf32>
    %366 = arith.addf %362, %365 : vector<16x512xf32>
    %cst_97 = arith.constant 0.000000e+00 : f32
    %367 = vector.broadcast %cst_97 : f32 to vector<16x512xf32>
    %368 = arith.maximumf %366, %367 : vector<16x512xf32>
    %369 = arith.truncf %368 : vector<16x512xf32> to vector<16x512xbf16>
    %c1_98 = arith.constant 1 : index
    %c0_99 = arith.constant 0 : index
    %c0_100 = arith.constant 0 : index
    %370 = vector.load %arg6[%c1_98, %c0_99, %c0_100] : memref<2x512x32xbf16, #tpu.memory_space<vmem>>, vector<1x512x32xbf16>
    %371 = vector.shape_cast %370 : vector<1x512x32xbf16> to vector<512x32xbf16>
    %cst_101 = arith.constant dense<0.000000e+00> : vector<16x32xf32>
    %372 = tpu.matmul %369, %371, %cst_101 {dimension_numbers = #tpu.dot_dimension_numbers<[1], [0], [0], [1], [0, 0, 1, 1], [], []>} : vector<16x512xbf16>, vector<512x32xbf16>, vector<16x32xf32> -> vector<16x32xf32>
    %373 = vector.extract_strided_slice %209 {offsets = [4, 0], sizes = [1, 32], strides = [1, 1]} : vector<9x32xf32> to vector<1x32xf32>
    %374 = vector.broadcast %373 : vector<1x32xf32> to vector<16x32xf32>
    %375 = arith.addf %372, %374 : vector<16x32xf32>
    %376 = arith.addf %375, %358 : vector<16x32xf32>
    %377 = vector.extract_strided_slice %209 {offsets = [7, 0], sizes = [1, 32], strides = [1, 1]} : vector<9x32xf32> to vector<1x32xf32>
    %378 = vector.extract_strided_slice %209 {offsets = [8, 0], sizes = [1, 32], strides = [1, 1]} : vector<9x32xf32> to vector<1x32xf32>
    %cst_102 = arith.constant dense<0.000000e+00> : vector<16xf32>
    %379 = vector.multi_reduction <add>, %376, %cst_102 [1] : vector<16x32xf32> to vector<16xf32>
    %380 = vector.shape_cast %379 : vector<16xf32> to vector<16x1xf32>
    %cst_103 = arith.constant 3.200000e+01 : f32
    %381 = vector.broadcast %cst_103 : f32 to vector<16x1xf32>
    %382 = arith.divf %380, %381 : vector<16x1xf32>
    %383 = vector.broadcast %382 : vector<16x1xf32> to vector<16x32xf32>
    %384 = arith.subf %376, %383 : vector<16x32xf32>
    %385 = arith.mulf %384, %384 : vector<16x32xf32>
    %cst_104 = arith.constant dense<0.000000e+00> : vector<16xf32>
    %386 = vector.multi_reduction <add>, %385, %cst_104 [1] : vector<16x32xf32> to vector<16xf32>
    %387 = vector.shape_cast %386 : vector<16xf32> to vector<16x1xf32>
    %cst_105 = arith.constant 3.200000e+01 : f32
    %388 = vector.broadcast %cst_105 : f32 to vector<16x1xf32>
    %389 = arith.divf %387, %388 : vector<16x1xf32>
    %390 = vector.broadcast %382 : vector<16x1xf32> to vector<16x32xf32>
    %391 = arith.subf %376, %390 : vector<16x32xf32>
    %cst_106 = arith.constant 9.99999974E-6 : f32
    %392 = vector.broadcast %cst_106 : f32 to vector<16x1xf32>
    %393 = arith.addf %389, %392 : vector<16x1xf32>
    %394 = math.rsqrt %393 : vector<16x1xf32>
    %395 = vector.broadcast %394 : vector<16x1xf32> to vector<16x32xf32>
    %396 = arith.mulf %391, %395 : vector<16x32xf32>
    %397 = vector.broadcast %377 : vector<1x32xf32> to vector<16x32xf32>
    %398 = arith.mulf %396, %397 : vector<16x32xf32>
    %399 = vector.broadcast %378 : vector<1x32xf32> to vector<16x32xf32>
    %400 = arith.addf %398, %399 : vector<16x32xf32>
    %401 = arith.truncf %400 : vector<16x32xf32> to vector<16x32xbf16>
    %c0_107 = arith.constant 0 : index
    %c0_108 = arith.constant 0 : index
    %402 = vector.load %arg9[%c0_107, %c0_108] : memref<32x128xbf16, #tpu.memory_space<vmem>>, vector<32x128xbf16>
    %cst_109 = arith.constant dense<0.000000e+00> : vector<16x128xf32>
    %403 = tpu.matmul %401, %402, %cst_109 {dimension_numbers = #tpu.dot_dimension_numbers<[1], [0], [0], [1], [0, 0, 1, 1], [], []>} : vector<16x32xbf16>, vector<32x128xbf16>, vector<16x128xf32> -> vector<16x128xf32>
    %c0_110 = arith.constant 0 : index
    %c0_111 = arith.constant 0 : index
    %404 = vector.load %arg10[%c0_110, %c0_111] : memref<1x128xf32, #tpu.memory_space<vmem>>, vector<1x128xf32>
    %405 = vector.broadcast %404 : vector<1x128xf32> to vector<16x128xf32>
    %406 = arith.addf %403, %405 : vector<16x128xf32>
    %c0_112 = arith.constant 0 : index
    %c0_113 = arith.constant 0 : index
    %407 = vector.load %arg11[%c0_112, %c0_113] : memref<16x128xf32, #tpu.memory_space<vmem>>, vector<16x128xf32>
    tpu.vector_store %arg11[%c0_112, %c0_113], %406 {strides = array<i32>} : memref<16x128xf32, #tpu.memory_space<vmem>>, vector<16x128xf32>,
    return
  }
}

</mosaic_0001>

<llo_original>
// kernel: custom_model_forward.1
$region0: #{custom_model_forward.1}
  #allocation0 [shape = 'u32[]', space=smem, size = 0x4, offset = 0x4, fixed_abs, tag = 'smem constant byte address 0x4 - core index']
  #allocation1 [shape = 'u32[144,128]{1,0:T(1,128)}', space=vmem, size = 0x12000, scoped, tag = 'internal scratch']
  %s0 = inlined_call_operand.vmem [shape: f32[2,8,16], index: 0, kind: input, shape index: {}]
  %s1 = inlined_call_operand.vmem [shape: bf16[16,32], index: 1, kind: input, shape index: {}]
  %s2 = inlined_call_operand.vmem [shape: f32[1,32], index: 2, kind: input, shape index: {}]
  %s3 = inlined_call_operand.vmem [shape: bf16[2,32,96], index: 3, kind: input, shape index: {}]
  %s4 = inlined_call_operand.vmem [shape: bf16[2,32,32], index: 4, kind: input, shape index: {}]
  %s5 = inlined_call_operand.vmem [shape: bf16[2,32,512], index: 5, kind: input, shape index: {}]
  %s6 = inlined_call_operand.vmem [shape: bf16[2,512,32], index: 6, kind: input, shape index: {}]
  %s7 = inlined_call_operand.vmem [shape: f32[2,9,32], index: 7, kind: input, shape index: {}]
  %s8 = inlined_call_operand.vmem [shape: f32[2,1,512], index: 8, kind: input, shape index: {}]
  %s9 = inlined_call_operand.vmem [shape: bf16[32,128], index: 9, kind: input, shape index: {}]
  %s10 = inlined_call_operand.vmem [shape: f32[1,128], index: 10, kind: input, shape index: {}]
  %s11 = inlined_call_operand.hbm [shape: f32[16,128], index: 11, kind: output, shape index: {}]
  %s12 = sld [smem:[#allocation0]]
  $region54: #{custom_model_forward.1} parent=0
    _
  %s14 = ssub.s32 1, %s12
  %s15 = scalar_select 0, %s14, %s12
  $region1: #{custom_model_forward.1} parent=0
    #allocation2 [shape = 'u8[8192]{0}', space=vmem, size = 0x2000, scoped, tag = 'output window, operand 0, single buffered']
    #allocation3 [shape = 's32[1]{0}', space=sflag, size = 0x4, scoped, tag = 'scoped memory for custom_model_forward.1']
    %16 = vsyncpa [#allocation3], 0
    // Predicated region
    $region2: #{custom_model_forward.1} parent=1 // pred_check
      _
    $region3: #{custom_model_forward.1} parent=1 // pred_check_branch
      %18 = sbr.rel (0) target = $region5
    $region4: #{custom_model_forward.1} parent=1 // pred_region
      _
    $region5: #{custom_model_forward.1} parent=1 // pred_fallthru
      _
    // Predicated region
    $region6: #{custom_model_forward.1} parent=1 // pred_check
      _
    $region7: #{custom_model_forward.1} parent=1 // pred_check_branch
      %20 = sbr.rel (0) target = $region9
    $region8: #{custom_model_forward.1} parent=1 // pred_region
      _
    $region9: #{custom_model_forward.1} parent=1 // pred_fallthru
      _
    // Predicated region
    $region10: #{custom_model_forward.1} parent=1 // pred_check
      _
    $region11: #{custom_model_forward.1} parent=1 // pred_check_branch
      %22 = sbr.rel (0) target = $region13
    $region12: #{custom_model_forward.1} parent=1 // pred_region
      _
    $region13: #{custom_model_forward.1} parent=1 // pred_fallthru
      _
    // Predicated region
    $region14: #{custom_model_forward.1} parent=1 // pred_check
      _
    $region15: #{custom_model_forward.1} parent=1 // pred_check_branch
      %24 = sbr.rel (0) target = $region17
    $region16: #{custom_model_forward.1} parent=1 // pred_region
      _
    $region17: #{custom_model_forward.1} parent=1 // pred_fallthru
      _
    // Predicated region
    $region18: #{custom_model_forward.1} parent=1 // pred_check
      _
    $region19: #{custom_model_forward.1} parent=1 // pred_check_branch
      %26 = sbr.rel (0) target = $region21
    $region20: #{custom_model_forward.1} parent=1 // pred_region
      _
    $region21: #{custom_model_forward.1} parent=1 // pred_fallthru
      _
    // Predicated region
    $region22: #{custom_model_forward.1} parent=1 // pred_check
      _
    $region23: #{custom_model_forward.1} parent=1 // pred_check_branch
      %28 = sbr.rel (0) target = $region25
    $region24: #{custom_model_forward.1} parent=1 // pred_region
      _
    $region25: #{custom_model_forward.1} parent=1 // pred_fallthru
      _
    // Predicated region
    $region26: #{custom_model_forward.1} parent=1 // pred_check
      _
    $region27: #{custom_model_forward.1} parent=1 // pred_check_branch
      %30 = sbr.rel (0) target = $region29
    $region28: #{custom_model_forward.1} parent=1 // pred_region
      _
    $region29: #{custom_model_forward.1} parent=1 // pred_fallthru
      _
    // Predicated region
    $region30: #{custom_model_forward.1} parent=1 // pred_check
      _
    $region31: #{custom_model_forward.1} parent=1 // pred_check_branch
      %32 = sbr.rel (0) target = $region33
    $region32: #{custom_model_forward.1} parent=1 // pred_region
      _
    $region33: #{custom_model_forward.1} parent=1 // pred_fallthru
      _
    // Predicated region
    $region34: #{custom_model_forward.1} parent=1 // pred_check
      _
    $region35: #{custom_model_forward.1} parent=1 // pred_check_branch
      %34 = sbr.rel (0) target = $region37
    $region36: #{custom_model_forward.1} parent=1 // pred_region
      _
    $region37: #{custom_model_forward.1} parent=1 // pred_fallthru
      _
    // Predicated region
    $region38: #{custom_model_forward.1} parent=1 // pred_check
      _
    $region39: #{custom_model_forward.1} parent=1 // pred_check_branch
      %36 = sbr.rel (0) target = $region41
    $region40: #{custom_model_forward.1} parent=1 // pred_region
      _
    $region41: #{custom_model_forward.1} parent=1 // pred_fallthru
      _
    // Predicated region
    $region42: #{custom_model_forward.1} parent=1 // pred_check
      _
    $region43: #{custom_model_forward.1} parent=1 // pred_check_branch
      %38 = sbr.rel (0) target = $region45
    $region44: #{custom_model_forward.1} parent=1 // pred_region
      _
    $region45: #{custom_model_forward.1} parent=1 // pred_fallthru
      _
    %v40 = vld [vmem:[%s0] sm:$0xff]
    %v41 = vld [vmem:[%s0 + $0x8] sm:$0xff]
    %vm42 = vcmask 130048
    %v43 = vsel %vm42, %v40, 0.0
    %44 = vadd.xlane.f32.xlu0 %v43
    %v45 = vpop.xlane.xlu0 %44
    %v46 = vsel %vm42, %v41, 0.0
    %47 = vadd.xlane.f32.xlu0 %v46
    %v48 = vpop.xlane.xlu0 %47
    %vm49 = vcmp.eq.f32.partialorder %v45, 0.0
    %vm50 = vcmp.eq.f32.partialorder %v48, 0.0
    %v51 = vsel %vm49, -1e+30, 0.0
    %v52 = vsel %vm50, -1e+30, 0.0
    %v53 = vpack.c.bf16 %v41, %v40
    %v54 = vld [vmem:[%s1] sm:$0xf]
    %v55 = vld [vmem:[%s1 + $0x4] sm:$0xf]
    %v56 = vld [vmem:[%s2] sm:$0x1]
    %v58 = vlaneseq
    %v59 = vshrl.u32 %v58, 7
    %v60 = vsub.s32 0, %v59
    %v61 = vrot.slane %v56, %v60
    %v65 = vunpack.c.l.b16 %v54
    %v66 = vunpack.c.l.b16 %v55
    %v67 = vpack.c.b16 %v66, %v65
    %v70 = vsel %vm42, %v53, 0
    %72 = vmatprep.subr.bf16.mxu0 0
    %73 = vmatpush1.bf16.msra.mxu0 0
    %74 = vmatprep.subr.bf16.mxu0 0
    %75 = vmatpush1.bf16.msra.mxu0 0
    %76 = vmatprep.subr.bf16.mxu0 0
    %77 = vmatpush1.bf16.msra.mxu0 0
    %78 = vmatprep.subr.bf16.mxu0 0
    %79 = vmatpush1.bf16.msra.mxu0 0
    %80 = vmatprep.subr.bf16.mxu0 0
    %81 = vmatpush1.bf16.msra.mxu0 0
    %82 = vmatprep.subr.bf16.mxu0 0
    %83 = vmatpush1.bf16.msra.mxu0 0
    %84 = vmatprep.subr.bf16.mxu0 0
    %85 = vmatpush1.bf16.msra.mxu0 0
    %86 = vmatprep.subr.bf16.mxu0 0
    %87 = vmatpush1.bf16.msra.mxu0 %v67
    %88 = vmatprep.subr.bf16.mxu0 0
    %89 = vmatpush2.bf16.msra.mxu0 0
    %90 = vmatprep.subr.bf16.mxu0 0
    %91 = vmatpush2.bf16.msra.mxu0 0
    %92 = vmatprep.subr.bf16.mxu0 0
    %93 = vmatpush2.bf16.msra.mxu0 0
    %94 = vmatprep.subr.bf16.mxu0 0
    %95 = vmatpush2.bf16.msra.mxu0 0
    %96 = vmatprep.subr.bf16.mxu0 0
    %97 = vmatpush2.bf16.msra.mxu0 0
    %98 = vmatprep.subr.bf16.mxu0 0
    %99 = vmatpush2.bf16.msra.mxu0 0
    %100 = vmatprep.subr.bf16.mxu0 0
    %101 = vmatpush2.bf16.msra.mxu0 0
    %102 = vmatprep.subr.bf16.mxu0 0
    %103 = vmatpush2.bf16.msra.mxu0 0
    %104 = vmatprep.mubr.bf16.mxu0 0
    %105 = vmatmul.mubr.bf16.gmra.mxu0 %v70
    %v106 = vpop.f32.mrf.mxu0
    %v107 = vadd.f32 %v61, %v106
    %v108 = vpop.f32.mrf.mxu0
    %v109 = vpop.f32.mrf.mxu0
    %v110 = vadd.f32 %v61, %v109
    %v111 = vpop.f32.mrf.mxu0
    %112 = vdwg.mxu0
    %v113 = vld [vmem:[%s7] sm:$0xff]
    %v114 = vld [vmem:[%s7 + $0x8] sm:$0x1]
    %v115 = vpack.c.bf16 %v110, %v107
    %v116 = vld [vmem:[%s3] sm:$0xf]
    %v117 = vld [vmem:[%s3 + $0x4] sm:$0xf]
    %v118 = vld [vmem:[%s3 + $0x8] sm:$0xf]
    %v119 = vld [vmem:[%s3 + $0xc] sm:$0xf]
    %v124 = vunpack.c.l.b16 %v116
    %v125 = vunpack.c.l.b16 %v117
    %v126 = vunpack.c.l.b16 %v118
    %v127 = vunpack.c.l.b16 %v119
    %v128 = vpack.c.b16 %v125, %v124
    %v129 = vpack.c.b16 %v127, %v126
    %vm132 = vcmask 261120
    %v134 = vsel %vm132, %v115, 0
    %136 = vmatprep.subr.bf16.mxu0 0
    %137 = vmatpush1.bf16.msra.mxu0 0
    %138 = vmatprep.subr.bf16.mxu0 0
    %139 = vmatpush1.bf16.msra.mxu0 0
    %140 = vmatprep.subr.bf16.mxu0 0
    %141 = vmatpush1.bf16.msra.mxu0 0
    %142 = vmatprep.subr.bf16.mxu0 0
    %143 = vmatpush1.bf16.msra.mxu0 0
    %144 = vmatprep.subr.bf16.mxu0 0
    %145 = vmatpush1.bf16.msra.mxu0 0
    %146 = vmatprep.subr.bf16.mxu0 0
    %147 = vmatpush1.bf16.msra.mxu0 0
    %148 = vmatprep.subr.bf16.mxu0 0
    %149 = vmatpush1.bf16.msra.mxu0 %v129
    %150 = vmatprep.subr.bf16.mxu0 0
    %151 = vmatpush1.bf16.msra.mxu0 %v128
    %152 = vmatprep.subr.bf16.mxu0 0
    %153 = vmatpush2.bf16.msra.mxu0 0
    %154 = vmatprep.subr.bf16.mxu0 0
    %155 = vmatpush2.bf16.msra.mxu0 0
    %156 = vmatprep.subr.bf16.mxu0 0
    %157 = vmatpush2.bf16.msra.mxu0 0
    %158 = vmatprep.subr.bf16.mxu0 0
    %159 = vmatpush2.bf16.msra.mxu0 0
    %160 = vmatprep.subr.bf16.mxu0 0
    %161 = vmatpush2.bf16.msra.mxu0 0
    %162 = vmatprep.subr.bf16.mxu0 0
    %163 = vmatpush2.bf16.msra.mxu0 0
    %164 = vmatprep.subr.bf16.mxu0 0
    %165 = vmatpush2.bf16.msra.mxu0 0
    %166 = vmatprep.subr.bf16.mxu0 0
    %167 = vmatpush2.bf16.msra.mxu0 0
    %168 = vmatprep.mubr.bf16.mxu0 0
    %169 = vmatmul.mubr.bf16.gmra.mxu0 %v134
    %v170 = vpop.f32.mrf.mxu0
    %v171 = vadd.f32 0.0, %v170
    %v172 = vpop.f32.mrf.mxu0
    %v173 = vpop.f32.mrf.mxu0
    %v174 = vadd.f32 0.0, %v173
    %v175 = vpop.f32.mrf.mxu0
    %176 = vdwg.mxu0
    %v177 = vlaneseq
    %v178 = vshrl.u32 %v177, 7
    %v179 = vsub.s32 0, %v178
    %v180 = vrot.slane %v113, %v179
    %v181 = vadd.f32 %v171, %v180
    %v182 = vadd.f32 %v174, %v180
    %v183 = vlaneseq
    %v184 = vshrl.u32 %v183, 7
    %v185 = vsub.s32 1, %v184
    %v186 = vrot.slane %v113, %v185
    %188 = vrot.lane.b32.xlu0 %v186, 32
    %v189 = vpop.permute.xlu0 %188
    %v191 = vadd.f32 %v171, %v189
    %v192 = vadd.f32 %v174, %v189
    %v193 = vlaneseq
    %v194 = vshrl.u32 %v193, 7
    %v195 = vsub.s32 2, %v194
    %v196 = vrot.slane %v113, %v195
    %198 = vrot.lane.b32.xlu0 %v196, 64
    %v199 = vpop.permute.xlu0 %198
    %v201 = vadd.f32 %v171, %v199
    %v202 = vadd.f32 %v174, %v199
    %v203 = vpack.c.bf16 %v181, %v181
    %v204 = vpack.c.bf16 %v182, %v182
    %v205 = vpack.c.bf16 %v191, %v191
    %v206 = vpack.c.bf16 %v192, %v192
    %v207 = vpack.c.bf16 %v201, %v201
    %v208 = vpack.c.bf16 %v202, %v202
    %210 = vrot.lane.b32.xlu0 %v205, 96
    %v211 = vpop.permute.xlu0 %210
    %v213 = vlaneseq
    %v214 = vand.u32 %v213, 127
    %v215 = vlaneseq
    %v216 = vshrl.u32 %v215, 7
    %v217 = vsub.s32 %v214, %v216
    %v218 = vrot.slane %v51, %v217
    %vm219 = vcmask 1042434
    %v220 = vsel %vm219, %v218, %v218
    %vm221 = vcmask 1043459
    %v222 = vsel %vm221, %v218, %v220
    %vm223 = vcmask 1044484
    %v224 = vsel %vm223, %v218, %v222
    %vm225 = vcmask 1045509
    %v226 = vsel %vm225, %v218, %v224
    %vm227 = vcmask 1046534
    %v228 = vsel %vm227, %v218, %v226
    %vm229 = vcmask 1047559
    %v230 = vsel %vm229, %v218, %v228
    %vm232 = vcmask 64512
    %v234 = vsel %vm232, %v203, 0
    %v237 = vsel %vm232, %v211, 0
    %239 = vmatprep.subr.bf16.mxu0 0
    %240 = vmatpush1.bf16.xpose.msra.mxu0 0
    %241 = vmatprep.subr.bf16.mxu0 0
    %242 = vmatpush1.bf16.xpose.msra.mxu0 0
    %243 = vmatprep.subr.bf16.mxu0 0
    %244 = vmatpush1.bf16.xpose.msra.mxu0 0
    %245 = vmatprep.subr.bf16.mxu0 0
    %246 = vmatpush1.bf16.xpose.msra.mxu0 0
    %247 = vmatprep.subr.bf16.mxu0 0
    %248 = vmatpush1.bf16.xpose.msra.mxu0 0
    %249 = vmatprep.subr.bf16.mxu0 0
    %250 = vmatpush1.bf16.xpose.msra.mxu0 0
    %251 = vmatprep.subr.bf16.mxu0 0
    %252 = vmatpush1.bf16.xpose.msra.mxu0 0
    %253 = vmatprep.subr.bf16.mxu0 0
    %254 = vmatpush1.bf16.xpose.msra.mxu0 %v237
    %255 = vmatprep.subr.bf16.mxu0 0
    %256 = vmatpush2.bf16.xpose.msra.mxu0 0
    %257 = vmatprep.subr.bf16.mxu0 0
    %258 = vmatpush2.bf16.xpose.msra.mxu0 0
    %259 = vmatprep.subr.bf16.mxu0 0
    %260 = vmatpush2.bf16.xpose.msra.mxu0 0
    %261 = vmatprep.subr.bf16.mxu0 0
    %262 = vmatpush2.bf16.xpose.msra.mxu0 0
    %263 = vmatprep.subr.bf16.mxu0 0
    %264 = vmatpush2.bf16.xpose.msra.mxu0 0
    %265 = vmatprep.subr.bf16.mxu0 0
    %266 = vmatpush2.bf16.xpose.msra.mxu0 0
    %267 = vmatprep.subr.bf16.mxu0 0
    %268 = vmatpush2.bf16.xpose.msra.mxu0 0
    %269 = vmatprep.subr.bf16.mxu0 0
    %270 = vmatpush2.bf16.xpose.msra.mxu0 0
    %271 = vmatprep.mubr.bf16.mxu0 0
    %272 = vmatmul.mubr.bf16.gmra.mxu0 %v234
    %v273 = vpop.f32.mrf.mxu0
    %v274 = vadd.f32 %v230, %v273
    %v275 = vpop.f32.mrf.mxu0
    %v276 = vpop.f32.mrf.mxu0
    %v277 = vpop.f32.mrf.mxu0
    %278 = vdwg.mxu0
    %280 = vrot.lane.b32.xlu0 %v206, 96
    %v281 = vpop.permute.xlu0 %280
    %v283 = vlaneseq
    %v284 = vshrl.u32 %v283, 7
    %v285 = vsub.s32 %v214, %v284
    %v286 = vrot.slane %v52, %v285
    %v287 = vsel %vm219, %v286, %v286
    %v288 = vsel %vm221, %v286, %v287
    %v289 = vsel %vm223, %v286, %v288
    %v290 = vsel %vm225, %v286, %v289
    %v291 = vsel %vm227, %v286, %v290
    %v292 = vsel %vm229, %v286, %v291
    %v295 = vsel %vm232, %v204, 0
    %v298 = vsel %vm232, %v281, 0
    %300 = vmatprep.subr.bf16.mxu0 0
    %301 = vmatpush1.bf16.xpose.msra.mxu0 0
    %302 = vmatprep.subr.bf16.mxu0 0
    %303 = vmatpush1.bf16.xpose.msra.mxu0 0
    %304 = vmatprep.subr.bf16.mxu0 0
    %305 = vmatpush1.bf16.xpose.msra.mxu0 0
    %306 = vmatprep.subr.bf16.mxu0 0
    %307 = vmatpush1.bf16.xpose.msra.mxu0 0
    %308 = vmatprep.subr.bf16.mxu0 0
    %309 = vmatpush1.bf16.xpose.msra.mxu0 0
    %310 = vmatprep.subr.bf16.mxu0 0
    %311 = vmatpush1.bf16.xpose.msra.mxu0 0
    %312 = vmatprep.subr.bf16.mxu0 0
    %313 = vmatpush1.bf16.xpose.msra.mxu0 0
    %314 = vmatprep.subr.bf16.mxu0 0
    %315 = vmatpush1.bf16.xpose.msra.mxu0 %v298
    %316 = vmatprep.subr.bf16.mxu0 0
    %317 = vmatpush2.bf16.xpose.msra.mxu0 0
    %318 = vmatprep.subr.bf16.mxu0 0
    %319 = vmatpush2.bf16.xpose.msra.mxu0 0
    %320 = vmatprep.subr.bf16.mxu0 0
    %321 = vmatpush2.bf16.xpose.msra.mxu0 0
    %322 = vmatprep.subr.bf16.mxu0 0
    %323 = vmatpush2.bf16.xpose.msra.mxu0 0
    %324 = vmatprep.subr.bf16.mxu0 0
    %325 = vmatpush2.bf16.xpose.msra.mxu0 0
    %326 = vmatprep.subr.bf16.mxu0 0
    %327 = vmatpush2.bf16.xpose.msra.mxu0 0
    %328 = vmatprep.subr.bf16.mxu0 0
    %329 = vmatpush2.bf16.xpose.msra.mxu0 0
    %330 = vmatprep.subr.bf16.mxu0 0
    %331 = vmatpush2.bf16.xpose.msra.mxu0 0
    %332 = vmatprep.mubr.bf16.mxu0 0
    %333 = vmatmul.mubr.bf16.gmra.mxu0 %v295
    %v334 = vpop.f32.mrf.mxu0
    %v335 = vadd.f32 %v292, %v334
    %v336 = vpop.f32.mrf.mxu0
    %v337 = vpop.f32.mrf.mxu0
    %v338 = vpop.f32.mrf.mxu0
    %339 = vdwg.mxu0
    %v340 = vsel %vm232, %v274, -inf
    %341 = vmax.xlane.f32.xlu0 %v340
    %v342 = vpop.xlane.xlu0 %341
    %v343 = vsel %vm232, %v335, -inf
    %344 = vmax.xlane.f32.xlu0 %v343
    %v345 = vpop.xlane.xlu0 %344
    %v346 = vsub.f32 %v274, %v342
    %v347 = vsub.f32 %v335, %v345
    %v348 = vmul.f32 %v346, 1.442695
    %v349 = vpow.pop %v348
    %v350 = vmul.f32 %v347, 1.442695
    %v351 = vpow.pop %v350
    %v352 = vsel %vm232, %v349, 0.0
    %353 = vadd.xlane.f32.xlu0 %v352
    %v354 = vpop.xlane.xlu0 %353
    %v355 = vsel %vm232, %v351, 0.0
    %356 = vadd.xlane.f32.xlu0 %v355
    %v357 = vpop.xlane.xlu0 %356
    %v358 = vrcp.pop %v354
    %v359 = vrcp.pop %v357
    %v360 = vmul.f32 %v349, %v358
    %v361 = vmul.f32 %v351, %v359
    %v362 = vpack.c.bf16 %v360, %v360
    %v363 = vpack.c.bf16 %v361, %v361
    %365 = vrot.lane.b32.xlu0 %v207, 64
    %v366 = vpop.permute.xlu0 %365
    %v368 = vsel %vm232, %v362, 0
    %vm370 = vcmask 1043456
    %v372 = vsel %vm370, %v366, 0
    %374 = vmatprep.subr.bf16.mxu0 0
    %375 = vmatpush1.bf16.msra.mxu0 0
    %376 = vmatprep.subr.bf16.mxu0 0
    %377 = vmatpush1.bf16.msra.mxu0 0
    %378 = vmatprep.subr.bf16.mxu0 0
    %379 = vmatpush1.bf16.msra.mxu0 0
    %380 = vmatprep.subr.bf16.mxu0 0
    %381 = vmatpush1.bf16.msra.mxu0 0
    %382 = vmatprep.subr.bf16.mxu0 0
    %383 = vmatpush1.bf16.msra.mxu0 0
    %384 = vmatprep.subr.bf16.mxu0 0
    %385 = vmatpush1.bf16.msra.mxu0 0
    %386 = vmatprep.subr.bf16.mxu0 0
    %387 = vmatpush1.bf16.msra.mxu0 0
    %388 = vmatprep.subr.bf16.mxu0 0
    %389 = vmatpush1.bf16.msra.mxu0 %v372
    %390 = vmatprep.subr.bf16.mxu0 0
    %391 = vmatpush2.bf16.msra.mxu0 0
    %392 = vmatprep.subr.bf16.mxu0 0
    %393 = vmatpush2.bf16.msra.mxu0 0
    %394 = vmatprep.subr.bf16.mxu0 0
    %395 = vmatpush2.bf16.msra.mxu0 0
    %396 = vmatprep.subr.bf16.mxu0 0
    %397 = vmatpush2.bf16.msra.mxu0 0
    %398 = vmatprep.subr.bf16.mxu0 0
    %399 = vmatpush2.bf16.msra.mxu0 0
    %400 = vmatprep.subr.bf16.mxu0 0
    %401 = vmatpush2.bf16.msra.mxu0 0
    %402 = vmatprep.subr.bf16.mxu0 0
    %403 = vmatpush2.bf16.msra.mxu0 0
    %404 = vmatprep.subr.bf16.mxu0 0
    %405 = vmatpush2.bf16.msra.mxu0 0
    %406 = vmatprep.mubr.bf16.mxu0 0
    %407 = vmatmul.mubr.bf16.gmra.mxu0 %v368
    %v408 = vpop.f32.mrf.mxu0
    %v409 = vadd.f32 0.0, %v408
    %v410 = vpop.f32.mrf.mxu0
    %v411 = vpop.f32.mrf.mxu0
    %v412 = vpop.f32.mrf.mxu0
    %413 = vdwg.mxu0
    %415 = vrot.lane.b32.xlu0 %v208, 64
    %v416 = vpop.permute.xlu0 %415
    %v418 = vsel %vm232, %v363, 0
    %v421 = vsel %vm370, %v416, 0
    %423 = vmatprep.subr.bf16.mxu0 0
    %424 = vmatpush1.bf16.msra.mxu0 0
    %425 = vmatprep.subr.bf16.mxu0 0
    %426 = vmatpush1.bf16.msra.mxu0 0
    %427 = vmatprep.subr.bf16.mxu0 0
    %428 = vmatpush1.bf16.msra.mxu0 0
    %429 = vmatprep.subr.bf16.mxu0 0
    %430 = vmatpush1.bf16.msra.mxu0 0
    %431 = vmatprep.subr.bf16.mxu0 0
    %432 = vmatpush1.bf16.msra.mxu0 0
    %433 = vmatprep.subr.bf16.mxu0 0
    %434 = vmatpush1.bf16.msra.mxu0 0
    %435 = vmatprep.subr.bf16.mxu0 0
    %436 = vmatpush1.bf16.msra.mxu0 0
    %437 = vmatprep.subr.bf16.mxu0 0
    %438 = vmatpush1.bf16.msra.mxu0 %v421
    %439 = vmatprep.subr.bf16.mxu0 0
    %440 = vmatpush2.bf16.msra.mxu0 0
    %441 = vmatprep.subr.bf16.mxu0 0
    %442 = vmatpush2.bf16.msra.mxu0 0
    %443 = vmatprep.subr.bf16.mxu0 0
    %444 = vmatpush2.bf16.msra.mxu0 0
    %445 = vmatprep.subr.bf16.mxu0 0
    %446 = vmatpush2.bf16.msra.mxu0 0
    %447 = vmatprep.subr.bf16.mxu0 0
    %448 = vmatpush2.bf16.msra.mxu0 0
    %449 = vmatprep.subr.bf16.mxu0 0
    %450 = vmatpush2.bf16.msra.mxu0 0
    %451 = vmatprep.subr.bf16.mxu0 0
    %452 = vmatpush2.bf16.msra.mxu0 0
    %453 = vmatprep.subr.bf16.mxu0 0
    %454 = vmatpush2.bf16.msra.mxu0 0
    %455 = vmatprep.mubr.bf16.mxu0 0
    %456 = vmatmul.mubr.bf16.gmra.mxu0 %v418
    %v457 = vpop.f32.mrf.mxu0
    %v458 = vadd.f32 0.0, %v457
    %v459 = vpop.f32.mrf.mxu0
    %v460 = vpop.f32.mrf.mxu0
    %v461 = vpop.f32.mrf.mxu0
    %462 = vdwg.mxu0
    %464 = vrot.lane.b32.xlu0 %v203, 120
    %v465 = vpop.permute.xlu0 %464
    %466 = vrot.lane.b32.xlu0 %v205, 88
    %v467 = vpop.permute.xlu0 %466
    %v469 = vsel %vm232, %v465, 0
    %v472 = vsel %vm232, %v467, 0
    %474 = vmatprep.subr.bf16.mxu0 0
    %475 = vmatpush1.bf16.xpose.msra.mxu0 0
    %476 = vmatprep.subr.bf16.mxu0 0
    %477 = vmatpush1.bf16.xpose.msra.mxu0 0
    %478 = vmatprep.subr.bf16.mxu0 0
    %479 = vmatpush1.bf16.xpose.msra.mxu0 0
    %480 = vmatprep.subr.bf16.mxu0 0
    %481 = vmatpush1.bf16.xpose.msra.mxu0 0
    %482 = vmatprep.subr.bf16.mxu0 0
    %483 = vmatpush1.bf16.xpose.msra.mxu0 0
    %484 = vmatprep.subr.bf16.mxu0 0
    %485 = vmatpush1.bf16.xpose.msra.mxu0 0
    %486 = vmatprep.subr.bf16.mxu0 0
    %487 = vmatpush1.bf16.xpose.msra.mxu0 0
    %488 = vmatprep.subr.bf16.mxu0 0
    %489 = vmatpush1.bf16.xpose.msra.mxu0 %v472
    %490 = vmatprep.subr.bf16.mxu0 0
    %491 = vmatpush2.bf16.xpose.msra.mxu0 0
    %492 = vmatprep.subr.bf16.mxu0 0
    %493 = vmatpush2.bf16.xpose.msra.mxu0 0
    %494 = vmatprep.subr.bf16.mxu0 0
    %495 = vmatpush2.bf16.xpose.msra.mxu0 0
    %496 = vmatprep.subr.bf16.mxu0 0
    %497 = vmatpush2.bf16.xpose.msra.mxu0 0
    %498 = vmatprep.subr.bf16.mxu0 0
    %499 = vmatpush2.bf16.xpose.msra.mxu0 0
    %500 = vmatprep.subr.bf16.mxu0 0
    %501 = vmatpush2.bf16.xpose.msra.mxu0 0
    %502 = vmatprep.subr.bf16.mxu0 0
    %503 = vmatpush2.bf16.xpose.msra.mxu0 0
    %504 = vmatprep.subr.bf16.mxu0 0
    %505 = vmatpush2.bf16.xpose.msra.mxu0 0
    %506 = vmatprep.mubr.bf16.mxu0 0
    %507 = vmatmul.mubr.bf16.gmra.mxu0 %v469
    %v508 = vpop.f32.mrf.mxu0
    %v509 = vadd.f32 %v230, %v508
    %v510 = vpop.f32.mrf.mxu0
    %v511 = vpop.f32.mrf.mxu0
    %v512 = vpop.f32.mrf.mxu0
    %513 = vdwg.mxu0
    %515 = vrot.lane.b32.xlu0 %v204, 120
    %v516 = vpop.permute.xlu0 %515
    %517 = vrot.lane.b32.xlu0 %v206, 88
    %v518 = vpop.permute.xlu0 %517
    %v520 = vsel %vm232, %v516, 0
    %v523 = vsel %vm232, %v518, 0
    %525 = vmatprep.subr.bf16.mxu0 0
    %526 = vmatpush1.bf16.xpose.msra.mxu0 0
    %527 = vmatprep.subr.bf16.mxu0 0
    %528 = vmatpush1.bf16.xpose.msra.mxu0 0
    %529 = vmatprep.subr.bf16.mxu0 0
    %530 = vmatpush1.bf16.xpose.msra.mxu0 0
    %531 = vmatprep.subr.bf16.mxu0 0
    %532 = vmatpush1.bf16.xpose.msra.mxu0 0
    %533 = vmatprep.subr.bf16.mxu0 0
    %534 = vmatpush1.bf16.xpose.msra.mxu0 0
    %535 = vmatprep.subr.bf16.mxu0 0
    %536 = vmatpush1.bf16.xpose.msra.mxu0 0
    %537 = vmatprep.subr.bf16.mxu0 0
    %538 = vmatpush1.bf16.xpose.msra.mxu0 0
    %539 = vmatprep.subr.bf16.mxu0 0
    %540 = vmatpush1.bf16.xpose.msra.mxu0 %v523
    %541 = vmatprep.subr.bf16.mxu0 0
    %542 = vmatpush2.bf16.xpose.msra.mxu0 0
    %543 = vmatprep.subr.bf16.mxu0 0
    %544 = vmatpush2.bf16.xpose.msra.mxu0 0
    %545 = vmatprep.subr.bf16.mxu0 0
    %546 = vmatpush2.bf16.xpose.msra.mxu0 0
    %547 = vmatprep.subr.bf16.mxu0 0
    %548 = vmatpush2.bf16.xpose.msra.mxu0 0
    %549 = vmatprep.subr.bf16.mxu0 0
    %550 = vmatpush2.bf16.xpose.msra.mxu0 0
    %551 = vmatprep.subr.bf16.mxu0 0
    %552 = vmatpush2.bf16.xpose.msra.mxu0 0
    %553 = vmatprep.subr.bf16.mxu0 0
    %554 = vmatpush2.bf16.xpose.msra.mxu0 0
    %555 = vmatprep.subr.bf16.mxu0 0
    %556 = vmatpush2.bf16.xpose.msra.mxu0 0
    %557 = vmatprep.mubr.bf16.mxu0 0
    %558 = vmatmul.mubr.bf16.gmra.mxu0 %v520
    %v559 = vpop.f32.mrf.mxu0
    %v560 = vadd.f32 %v292, %v559
    %v561 = vpop.f32.mrf.mxu0
    %v562 = vpop.f32.mrf.mxu0
    %v563 = vpop.f32.mrf.mxu0
    %564 = vdwg.mxu0
    %v565 = vsel %vm232, %v509, -inf
    %566 = vmax.xlane.f32.xlu0 %v565
    %v567 = vpop.xlane.xlu0 %566
    %v568 = vsel %vm232, %v560, -inf
    %569 = vmax.xlane.f32.xlu0 %v568
    %v570 = vpop.xlane.xlu0 %569
    %v571 = vsub.f32 %v509, %v567
    %v572 = vsub.f32 %v560, %v570
    %v573 = vmul.f32 %v571, 1.442695
    %v574 = vpow.pop %v573
    %v575 = vmul.f32 %v572, 1.442695
    %v576 = vpow.pop %v575
    %v577 = vsel %vm232, %v574, 0.0
    %578 = vadd.xlane.f32.xlu0 %v577
    %v579 = vpop.xlane.xlu0 %578
    %v580 = vsel %vm232, %v576, 0.0
    %581 = vadd.xlane.f32.xlu0 %v580
    %v582 = vpop.xlane.xlu0 %581
    %v583 = vrcp.pop %v579
    %v584 = vrcp.pop %v582
    %v585 = vmul.f32 %v574, %v583
    %v586 = vmul.f32 %v576, %v584
    %v587 = vpack.c.bf16 %v585, %v585
    %v588 = vpack.c.bf16 %v586, %v586
    %589 = vrot.lane.b32.xlu0 %v207, 56
    %v590 = vpop.permute.xlu0 %589
    %v592 = vsel %vm232, %v587, 0
    %v595 = vsel %vm370, %v590, 0
    %597 = vmatprep.subr.bf16.mxu0 0
    %598 = vmatpush1.bf16.msra.mxu0 0
    %599 = vmatprep.subr.bf16.mxu0 0
    %600 = vmatpush1.bf16.msra.mxu0 0
    %601 = vmatprep.subr.bf16.mxu0 0
    %602 = vmatpush1.bf16.msra.mxu0 0
    %603 = vmatprep.subr.bf16.mxu0 0
    %604 = vmatpush1.bf16.msra.mxu0 0
    %605 = vmatprep.subr.bf16.mxu0 0
    %606 = vmatpush1.bf16.msra.mxu0 0
    %607 = vmatprep.subr.bf16.mxu0 0
    %608 = vmatpush1.bf16.msra.mxu0 0
    %609 = vmatprep.subr.bf16.mxu0 0
    %610 = vmatpush1.bf16.msra.mxu0 0
    %611 = vmatprep.subr.bf16.mxu0 0
    %612 = vmatpush1.bf16.msra.mxu0 %v595
    %613 = vmatprep.subr.bf16.mxu0 0
    %614 = vmatpush2.bf16.msra.mxu0 0
    %615 = vmatprep.subr.bf16.mxu0 0
    %616 = vmatpush2.bf16.msra.mxu0 0
    %617 = vmatprep.subr.bf16.mxu0 0
    %618 = vmatpush2.bf16.msra.mxu0 0
    %619 = vmatprep.subr.bf16.mxu0 0
    %620 = vmatpush2.bf16.msra.mxu0 0
    %621 = vmatprep.subr.bf16.mxu0 0
    %622 = vmatpush2.bf16.msra.mxu0 0
    %623 = vmatprep.subr.bf16.mxu0 0
    %624 = vmatpush2.bf16.msra.mxu0 0
    %625 = vmatprep.subr.bf16.mxu0 0
    %626 = vmatpush2.bf16.msra.mxu0 0
    %627 = vmatprep.subr.bf16.mxu0 0
    %628 = vmatpush2.bf16.msra.mxu0 0
    %629 = vmatprep.mubr.bf16.mxu0 0
    %630 = vmatmul.mubr.bf16.gmra.mxu0 %v592
    %v631 = vpop.f32.mrf.mxu0
    %v632 = vadd.f32 0.0, %v631
    %v633 = vpop.f32.mrf.mxu0
    %v634 = vpop.f32.mrf.mxu0
    %v635 = vpop.f32.mrf.mxu0
    %636 = vdwg.mxu0
    %637 = vrot.lane.b32.xlu0 %v208, 56
    %v638 = vpop.permute.xlu0 %637
    %v640 = vsel %vm232, %v588, 0
    %v643 = vsel %vm370, %v638, 0
    %645 = vmatprep.subr.bf16.mxu0 0
    %646 = vmatpush1.bf16.msra.mxu0 0
    %647 = vmatprep.subr.bf16.mxu0 0
    %648 = vmatpush1.bf16.msra.mxu0 0
    %649 = vmatprep.subr.bf16.mxu0 0
    %650 = vmatpush1.bf16.msra.mxu0 0
    %651 = vmatprep.subr.bf16.mxu0 0
    %652 = vmatpush1.bf16.msra.mxu0 0
    %653 = vmatprep.subr.bf16.mxu0 0
    %654 = vmatpush1.bf16.msra.mxu0 0
    %655 = vmatprep.subr.bf16.mxu0 0
    %656 = vmatpush1.bf16.msra.mxu0 0
    %657 = vmatprep.subr.bf16.mxu0 0
    %658 = vmatpush1.bf16.msra.mxu0 0
    %659 = vmatprep.subr.bf16.mxu0 0
    %660 = vmatpush1.bf16.msra.mxu0 %v643
    %661 = vmatprep.subr.bf16.mxu0 0
    %662 = vmatpush2.bf16.msra.mxu0 0
    %663 = vmatprep.subr.bf16.mxu0 0
    %664 = vmatpush2.bf16.msra.mxu0 0
    %665 = vmatprep.subr.bf16.mxu0 0
    %666 = vmatpush2.bf16.msra.mxu0 0
    %667 = vmatprep.subr.bf16.mxu0 0
    %668 = vmatpush2.bf16.msra.mxu0 0
    %669 = vmatprep.subr.bf16.mxu0 0
    %670 = vmatpush2.bf16.msra.mxu0 0
    %671 = vmatprep.subr.bf16.mxu0 0
    %672 = vmatpush2.bf16.msra.mxu0 0
    %673 = vmatprep.subr.bf16.mxu0 0
    %674 = vmatpush2.bf16.msra.mxu0 0
    %675 = vmatprep.subr.bf16.mxu0 0
    %676 = vmatpush2.bf16.msra.mxu0 0
    %677 = vmatprep.mubr.bf16.mxu0 0
    %678 = vmatmul.mubr.bf16.gmra.mxu0 %v640
    %v679 = vpop.f32.mrf.mxu0
    %v680 = vadd.f32 0.0, %v679
    %v681 = vpop.f32.mrf.mxu0
    %v682 = vpop.f32.mrf.mxu0
    %v683 = vpop.f32.mrf.mxu0
    %684 = vdwg.mxu0
    %685 = vrot.lane.b32.xlu0 %v203, 112
    %v686 = vpop.permute.xlu0 %685
    %687 = vrot.lane.b32.xlu0 %v205, 80
    %v688 = vpop.permute.xlu0 %687
    %v690 = vsel %vm232, %v686, 0
    %v693 = vsel %vm232, %v688, 0
    %695 = vmatprep.subr.bf16.mxu0 0
    %696 = vmatpush1.bf16.xpose.msra.mxu0 0
    %697 = vmatprep.subr.bf16.mxu0 0
    %698 = vmatpush1.bf16.xpose.msra.mxu0 0
    %699 = vmatprep.subr.bf16.mxu0 0
    %700 = vmatpush1.bf16.xpose.msra.mxu0 0
    %701 = vmatprep.subr.bf16.mxu0 0
    %702 = vmatpush1.bf16.xpose.msra.mxu0 0
    %703 = vmatprep.subr.bf16.mxu0 0
    %704 = vmatpush1.bf16.xpose.msra.mxu0 0
    %705 = vmatprep.subr.bf16.mxu0 0
    %706 = vmatpush1.bf16.xpose.msra.mxu0 0
    %707 = vmatprep.subr.bf16.mxu0 0
    %708 = vmatpush1.bf16.xpose.msra.mxu0 0
    %709 = vmatprep.subr.bf16.mxu0 0
    %710 = vmatpush1.bf16.xpose.msra.mxu0 %v693
    %711 = vmatprep.subr.bf16.mxu0 0
    %712 = vmatpush2.bf16.xpose.msra.mxu0 0
    %713 = vmatprep.subr.bf16.mxu0 0
    %714 = vmatpush2.bf16.xpose.msra.mxu0 0
    %715 = vmatprep.subr.bf16.mxu0 0
    %716 = vmatpush2.bf16.xpose.msra.mxu0 0
    %717 = vmatprep.subr.bf16.mxu0 0
    %718 = vmatpush2.bf16.xpose.msra.mxu0 0
    %719 = vmatprep.subr.bf16.mxu0 0
    %720 = vmatpush2.bf16.xpose.msra.mxu0 0
    %721 = vmatprep.subr.bf16.mxu0 0
    %722 = vmatpush2.bf16.xpose.msra.mxu0 0
    %723 = vmatprep.subr.bf16.mxu0 0
    %724 = vmatpush2.bf16.xpose.msra.mxu0 0
    %725 = vmatprep.subr.bf16.mxu0 0
    %726 = vmatpush2.bf16.xpose.msra.mxu0 0
    %727 = vmatprep.mubr.bf16.mxu0 0
    %728 = vmatmul.mubr.bf16.gmra.mxu0 %v690
    %v729 = vpop.f32.mrf.mxu0
    %v730 = vadd.f32 %v230, %v729
    %v731 = vpop.f32.mrf.mxu0
    %v732 = vpop.f32.mrf.mxu0
    %v733 = vpop.f32.mrf.mxu0
    %734 = vdwg.mxu0
    %735 = vrot.lane.b32.xlu0 %v204, 112
    %v736 = vpop.permute.xlu0 %735
    %737 = vrot.lane.b32.xlu0 %v206, 80
    %v738 = vpop.permute.xlu0 %737
    %v740 = vsel %vm232, %v736, 0
    %v743 = vsel %vm232, %v738, 0
    %745 = vmatprep.subr.bf16.mxu0 0
    %746 = vmatpush1.bf16.xpose.msra.mxu0 0
    %747 = vmatprep.subr.bf16.mxu0 0
    %748 = vmatpush1.bf16.xpose.msra.mxu0 0
    %749 = vmatprep.subr.bf16.mxu0 0
    %750 = vmatpush1.bf16.xpose.msra.mxu0 0
    %751 = vmatprep.subr.bf16.mxu0 0
    %752 = vmatpush1.bf16.xpose.msra.mxu0 0
    %753 = vmatprep.subr.bf16.mxu0 0
    %754 = vmatpush1.bf16.xpose.msra.mxu0 0
    %755 = vmatprep.subr.bf16.mxu0 0
    %756 = vmatpush1.bf16.xpose.msra.mxu0 0
    %757 = vmatprep.subr.bf16.mxu0 0
    %758 = vmatpush1.bf16.xpose.msra.mxu0 0
    %759 = vmatprep.subr.bf16.mxu0 0
    %760 = vmatpush1.bf16.xpose.msra.mxu0 %v743
    %761 = vmatprep.subr.bf16.mxu0 0
    %762 = vmatpush2.bf16.xpose.msra.mxu0 0
    %763 = vmatprep.subr.bf16.mxu0 0
    %764 = vmatpush2.bf16.xpose.msra.mxu0 0
    %765 = vmatprep.subr.bf16.mxu0 0
    %766 = vmatpush2.bf16.xpose.msra.mxu0 0
    %767 = vmatprep.subr.bf16.mxu0 0
    %768 = vmatpush2.bf16.xpose.msra.mxu0 0
    %769 = vmatprep.subr.bf16.mxu0 0
    %770 = vmatpush2.bf16.xpose.msra.mxu0 0
    %771 = vmatprep.subr.bf16.mxu0 0
    %772 = vmatpush2.bf16.xpose.msra.mxu0 0
    %773 = vmatprep.subr.bf16.mxu0 0
    %774 = vmatpush2.bf16.xpose.msra.mxu0 0
    %775 = vmatprep.subr.bf16.mxu0 0
    %776 = vmatpush2.bf16.xpose.msra.mxu0 0
    %777 = vmatprep.mubr.bf16.mxu0 0
    %778 = vmatmul.mubr.bf16.gmra.mxu0 %v740
    %v779 = vpop.f32.mrf.mxu0
    %v780 = vadd.f32 %v292, %v779
    %v781 = vpop.f32.mrf.mxu0
    %v782 = vpop.f32.mrf.mxu0
    %v783 = vpop.f32.mrf.mxu0
    %784 = vdwg.mxu0
    %v785 = vsel %vm232, %v730, -inf
    %786 = vmax.xlane.f32.xlu0 %v785
    %v787 = vpop.xlane.xlu0 %786
    %v788 = vsel %vm232, %v780, -inf
    %789 = vmax.xlane.f32.xlu0 %v788
    %v790 = vpop.xlane.xlu0 %789
    %v791 = vsub.f32 %v730, %v787
    %v792 = vsub.f32 %v780, %v790
    %v793 = vmul.f32 %v791, 1.442695
    %v794 = vpow.pop %v793
    %v795 = vmul.f32 %v792, 1.442695
    %v796 = vpow.pop %v795
    %v797 = vsel %vm232, %v794, 0.0
    %798 = vadd.xlane.f32.xlu0 %v797
    %v799 = vpop.xlane.xlu0 %798
    %v800 = vsel %vm232, %v796, 0.0
    %801 = vadd.xlane.f32.xlu0 %v800
    %v802 = vpop.xlane.xlu0 %801
    %v803 = vrcp.pop %v799
    %v804 = vrcp.pop %v802
    %v805 = vmul.f32 %v794, %v803
    %v806 = vmul.f32 %v796, %v804
    %v807 = vpack.c.bf16 %v805, %v805
    %v808 = vpack.c.bf16 %v806, %v806
    %809 = vrot.lane.b32.xlu0 %v207, 48
    %v810 = vpop.permute.xlu0 %809
    %v812 = vsel %vm232, %v807, 0
    %v815 = vsel %vm370, %v810, 0
    %817 = vmatprep.subr.bf16.mxu0 0
    %818 = vmatpush1.bf16.msra.mxu0 0
    %819 = vmatprep.subr.bf16.mxu0 0
    %820 = vmatpush1.bf16.msra.mxu0 0
    %821 = vmatprep.subr.bf16.mxu0 0
    %822 = vmatpush1.bf16.msra.mxu0 0
    %823 = vmatprep.subr.bf16.mxu0 0
    %824 = vmatpush1.bf16.msra.mxu0 0
    %825 = vmatprep.subr.bf16.mxu0 0
    %826 = vmatpush1.bf16.msra.mxu0 0
    %827 = vmatprep.subr.bf16.mxu0 0
    %828 = vmatpush1.bf16.msra.mxu0 0
    %829 = vmatprep.subr.bf16.mxu0 0
    %830 = vmatpush1.bf16.msra.mxu0 0
    %831 = vmatprep.subr.bf16.mxu0 0
    %832 = vmatpush1.bf16.msra.mxu0 %v815
    %833 = vmatprep.subr.bf16.mxu0 0
    %834 = vmatpush2.bf16.msra.mxu0 0
    %835 = vmatprep.subr.bf16.mxu0 0
    %836 = vmatpush2.bf16.msra.mxu0 0
    %837 = vmatprep.subr.bf16.mxu0 0
    %838 = vmatpush2.bf16.msra.mxu0 0
    %839 = vmatprep.subr.bf16.mxu0 0
    %840 = vmatpush2.bf16.msra.mxu0 0
    %841 = vmatprep.subr.bf16.mxu0 0
    %842 = vmatpush2.bf16.msra.mxu0 0
    %843 = vmatprep.subr.bf16.mxu0 0
    %844 = vmatpush2.bf16.msra.mxu0 0
    %845 = vmatprep.subr.bf16.mxu0 0
    %846 = vmatpush2.bf16.msra.mxu0 0
    %847 = vmatprep.subr.bf16.mxu0 0
    %848 = vmatpush2.bf16.msra.mxu0 0
    %849 = vmatprep.mubr.bf16.mxu0 0
    %850 = vmatmul.mubr.bf16.gmra.mxu0 %v812
    %v851 = vpop.f32.mrf.mxu0
    %v852 = vadd.f32 0.0, %v851
    %v853 = vpop.f32.mrf.mxu0
    %v854 = vpop.f32.mrf.mxu0
    %v855 = vpop.f32.mrf.mxu0
    %856 = vdwg.mxu0
    %857 = vrot.lane.b32.xlu0 %v208, 48
    %v858 = vpop.permute.xlu0 %857
    %v860 = vsel %vm232, %v808, 0
    %v863 = vsel %vm370, %v858, 0
    %865 = vmatprep.subr.bf16.mxu0 0
    %866 = vmatpush1.bf16.msra.mxu0 0
    %867 = vmatprep.subr.bf16.mxu0 0
    %868 = vmatpush1.bf16.msra.mxu0 0
    %869 = vmatprep.subr.bf16.mxu0 0
    %870 = vmatpush1.bf16.msra.mxu0 0
    %871 = vmatprep.subr.bf16.mxu0 0
    %872 = vmatpush1.bf16.msra.mxu0 0
    %873 = vmatprep.subr.bf16.mxu0 0
    %874 = vmatpush1.bf16.msra.mxu0 0
    %875 = vmatprep.subr.bf16.mxu0 0
    %876 = vmatpush1.bf16.msra.mxu0 0
    %877 = vmatprep.subr.bf16.mxu0 0
    %878 = vmatpush1.bf16.msra.mxu0 0
    %879 = vmatprep.subr.bf16.mxu0 0
    %880 = vmatpush1.bf16.msra.mxu0 %v863
    %881 = vmatprep.subr.bf16.mxu0 0
    %882 = vmatpush2.bf16.msra.mxu0 0
    %883 = vmatprep.subr.bf16.mxu0 0
    %884 = vmatpush2.bf16.msra.mxu0 0
    %885 = vmatprep.subr.bf16.mxu0 0
    %886 = vmatpush2.bf16.msra.mxu0 0
    %887 = vmatprep.subr.bf16.mxu0 0
    %888 = vmatpush2.bf16.msra.mxu0 0
    %889 = vmatprep.subr.bf16.mxu0 0
    %890 = vmatpush2.bf16.msra.mxu0 0
    %891 = vmatprep.subr.bf16.mxu0 0
    %892 = vmatpush2.bf16.msra.mxu0 0
    %893 = vmatprep.subr.bf16.mxu0 0
    %894 = vmatpush2.bf16.msra.mxu0 0
    %895 = vmatprep.subr.bf16.mxu0 0
    %896 = vmatpush2.bf16.msra.mxu0 0
    %897 = vmatprep.mubr.bf16.mxu0 0
    %898 = vmatmul.mubr.bf16.gmra.mxu0 %v860
    %v899 = vpop.f32.mrf.mxu0
    %v900 = vadd.f32 0.0, %v899
    %v901 = vpop.f32.mrf.mxu0
    %v902 = vpop.f32.mrf.mxu0
    %v903 = vpop.f32.mrf.mxu0
    %904 = vdwg.mxu0
    %905 = vrot.lane.b32.xlu0 %v203, 104
    %v906 = vpop.permute.xlu0 %905
    %907 = vrot.lane.b32.xlu0 %v205, 72
    %v908 = vpop.permute.xlu0 %907
    %v910 = vsel %vm232, %v906, 0
    %v913 = vsel %vm232, %v908, 0
    %915 = vmatprep.subr.bf16.mxu0 0
    %916 = vmatpush1.bf16.xpose.msra.mxu0 0
    %917 = vmatprep.subr.bf16.mxu0 0
    %918 = vmatpush1.bf16.xpose.msra.mxu0 0
    %919 = vmatprep.subr.bf16.mxu0 0
    %920 = vmatpush1.bf16.xpose.msra.mxu0 0
    %921 = vmatprep.subr.bf16.mxu0 0
    %922 = vmatpush1.bf16.xpose.msra.mxu0 0
    %923 = vmatprep.subr.bf16.mxu0 0
    %924 = vmatpush1.bf16.xpose.msra.mxu0 0
    %925 = vmatprep.subr.bf16.mxu0 0
    %926 = vmatpush1.bf16.xpose.msra.mxu0 0
    %927 = vmatprep.subr.bf16.mxu0 0
    %928 = vmatpush1.bf16.xpose.msra.mxu0 0
    %929 = vmatprep.subr.bf16.mxu0 0
    %930 = vmatpush1.bf16.xpose.msra.mxu0 %v913
    %931 = vmatprep.subr.bf16.mxu0 0
    %932 = vmatpush2.bf16.xpose.msra.mxu0 0
    %933 = vmatprep.subr.bf16.mxu0 0
    %934 = vmatpush2.bf16.xpose.msra.mxu0 0
    %935 = vmatprep.subr.bf16.mxu0 0
    %936 = vmatpush2.bf16.xpose.msra.mxu0 0
    %937 = vmatprep.subr.bf16.mxu0 0
    %938 = vmatpush2.bf16.xpose.msra.mxu0 0
    %939 = vmatprep.subr.bf16.mxu0 0
    %940 = vmatpush2.bf16.xpose.msra.mxu0 0
    %941 = vmatprep.subr.bf16.mxu0 0
    %942 = vmatpush2.bf16.xpose.msra.mxu0 0
    %943 = vmatprep.subr.bf16.mxu0 0
    %944 = vmatpush2.bf16.xpose.msra.mxu0 0
    %945 = vmatprep.subr.bf16.mxu0 0
    %946 = vmatpush2.bf16.xpose.msra.mxu0 0
    %947 = vmatprep.mubr.bf16.mxu0 0
    %948 = vmatmul.mubr.bf16.gmra.mxu0 %v910
    %v949 = vpop.f32.mrf.mxu0
    %v950 = vadd.f32 %v230, %v949
    %v951 = vpop.f32.mrf.mxu0
    %v952 = vpop.f32.mrf.mxu0
    %v953 = vpop.f32.mrf.mxu0
    %954 = vdwg.mxu0
    %955 = vrot.lane.b32.xlu0 %v204, 104
    %v956 = vpop.permute.xlu0 %955
    %957 = vrot.lane.b32.xlu0 %v206, 72
    %v958 = vpop.permute.xlu0 %957
    %v960 = vsel %vm232, %v956, 0
    %v963 = vsel %vm232, %v958, 0
    %965 = vmatprep.subr.bf16.mxu0 0
    %966 = vmatpush1.bf16.xpose.msra.mxu0 0
    %967 = vmatprep.subr.bf16.mxu0 0
    %968 = vmatpush1.bf16.xpose.msra.mxu0 0
    %969 = vmatprep.subr.bf16.mxu0 0
    %970 = vmatpush1.bf16.xpose.msra.mxu0 0
    %971 = vmatprep.subr.bf16.mxu0 0
    %972 = vmatpush1.bf16.xpose.msra.mxu0 0
    %973 = vmatprep.subr.bf16.mxu0 0
    %974 = vmatpush1.bf16.xpose.msra.mxu0 0
    %975 = vmatprep.subr.bf16.mxu0 0
    %976 = vmatpush1.bf16.xpose.msra.mxu0 0
    %977 = vmatprep.subr.bf16.mxu0 0
    %978 = vmatpush1.bf16.xpose.msra.mxu0 0
    %979 = vmatprep.subr.bf16.mxu0 0
    %980 = vmatpush1.bf16.xpose.msra.mxu0 %v963
    %981 = vmatprep.subr.bf16.mxu0 0
    %982 = vmatpush2.bf16.xpose.msra.mxu0 0
    %983 = vmatprep.subr.bf16.mxu0 0
    %984 = vmatpush2.bf16.xpose.msra.mxu0 0
    %985 = vmatprep.subr.bf16.mxu0 0
    %986 = vmatpush2.bf16.xpose.msra.mxu0 0
    %987 = vmatprep.subr.bf16.mxu0 0
    %988 = vmatpush2.bf16.xpose.msra.mxu0 0
    %989 = vmatprep.subr.bf16.mxu0 0
    %990 = vmatpush2.bf16.xpose.msra.mxu0 0
    %991 = vmatprep.subr.bf16.mxu0 0
    %992 = vmatpush2.bf16.xpose.msra.mxu0 0
    %993 = vmatprep.subr.bf16.mxu0 0
    %994 = vmatpush2.bf16.xpose.msra.mxu0 0
    %995 = vmatprep.subr.bf16.mxu0 0
    %996 = vmatpush2.bf16.xpose.msra.mxu0 0
    %997 = vmatprep.mubr.bf16.mxu0 0
    %998 = vmatmul.mubr.bf16.gmra.mxu0 %v960
    %v999 = vpop.f32.mrf.mxu0
    %v1000 = vadd.f32 %v292, %v999
    %v1001 = vpop.f32.mrf.mxu0
    %v1002 = vpop.f32.mrf.mxu0
    %v1003 = vpop.f32.mrf.mxu0
    %1004 = vdwg.mxu0
    %v1005 = vsel %vm232, %v950, -inf
    %1006 = vmax.xlane.f32.xlu0 %v1005
    %v1007 = vpop.xlane.xlu0 %1006
    %v1008 = vsel %vm232, %v1000, -inf
    %1009 = vmax.xlane.f32.xlu0 %v1008
    %v1010 = vpop.xlane.xlu0 %1009
    %v1011 = vsub.f32 %v950, %v1007
    %v1012 = vsub.f32 %v1000, %v1010
    %v1013 = vmul.f32 %v1011, 1.442695
    %v1014 = vpow.pop %v1013
    %v1015 = vmul.f32 %v1012, 1.442695
    %v1016 = vpow.pop %v1015
    %v1017 = vsel %vm232, %v1014, 0.0
    %1018 = vadd.xlane.f32.xlu0 %v1017
    %v1019 = vpop.xlane.xlu0 %1018
    %v1020 = vsel %vm232, %v1016, 0.0
    %1021 = vadd.xlane.f32.xlu0 %v1020
    %v1022 = vpop.xlane.xlu0 %1021
    %v1023 = vrcp.pop %v1019
    %v1024 = vrcp.pop %v1022
    %v1025 = vmul.f32 %v1014, %v1023
    %v1026 = vmul.f32 %v1016, %v1024
    %v1027 = vpack.c.bf16 %v1025, %v1025
    %v1028 = vpack.c.bf16 %v1026, %v1026
    %1029 = vrot.lane.b32.xlu0 %v207, 40
    %v1030 = vpop.permute.xlu0 %1029
    %v1032 = vsel %vm232, %v1027, 0
    %v1035 = vsel %vm370, %v1030, 0
    %1037 = vmatprep.subr.bf16.mxu0 0
    %1038 = vmatpush1.bf16.msra.mxu0 0
    %1039 = vmatprep.subr.bf16.mxu0 0
    %1040 = vmatpush1.bf16.msra.mxu0 0
    %1041 = vmatprep.subr.bf16.mxu0 0
    %1042 = vmatpush1.bf16.msra.mxu0 0
    %1043 = vmatprep.subr.bf16.mxu0 0
    %1044 = vmatpush1.bf16.msra.mxu0 0
    %1045 = vmatprep.subr.bf16.mxu0 0
    %1046 = vmatpush1.bf16.msra.mxu0 0
    %1047 = vmatprep.subr.bf16.mxu0 0
    %1048 = vmatpush1.bf16.msra.mxu0 0
    %1049 = vmatprep.subr.bf16.mxu0 0
    %1050 = vmatpush1.bf16.msra.mxu0 0
    %1051 = vmatprep.subr.bf16.mxu0 0
    %1052 = vmatpush1.bf16.msra.mxu0 %v1035
    %1053 = vmatprep.subr.bf16.mxu0 0
    %1054 = vmatpush2.bf16.msra.mxu0 0
    %1055 = vmatprep.subr.bf16.mxu0 0
    %1056 = vmatpush2.bf16.msra.mxu0 0
    %1057 = vmatprep.subr.bf16.mxu0 0
    %1058 = vmatpush2.bf16.msra.mxu0 0
    %1059 = vmatprep.subr.bf16.mxu0 0
    %1060 = vmatpush2.bf16.msra.mxu0 0
    %1061 = vmatprep.subr.bf16.mxu0 0
    %1062 = vmatpush2.bf16.msra.mxu0 0
    %1063 = vmatprep.subr.bf16.mxu0 0
    %1064 = vmatpush2.bf16.msra.mxu0 0
    %1065 = vmatprep.subr.bf16.mxu0 0
    %1066 = vmatpush2.bf16.msra.mxu0 0
    %1067 = vmatprep.subr.bf16.mxu0 0
    %1068 = vmatpush2.bf16.msra.mxu0 0
    %1069 = vmatprep.mubr.bf16.mxu0 0
    %1070 = vmatmul.mubr.bf16.gmra.mxu0 %v1032
    %v1071 = vpop.f32.mrf.mxu0
    %v1072 = vadd.f32 0.0, %v1071
    %v1073 = vpop.f32.mrf.mxu0
    %v1074 = vpop.f32.mrf.mxu0
    %v1075 = vpop.f32.mrf.mxu0
    %1076 = vdwg.mxu0
    %1077 = vrot.lane.b32.xlu0 %v208, 40
    %v1078 = vpop.permute.xlu0 %1077
    %v1080 = vsel %vm232, %v1028, 0
    %v1083 = vsel %vm370, %v1078, 0
    %1085 = vmatprep.subr.bf16.mxu0 0
    %1086 = vmatpush1.bf16.msra.mxu0 0
    %1087 = vmatprep.subr.bf16.mxu0 0
    %1088 = vmatpush1.bf16.msra.mxu0 0
    %1089 = vmatprep.subr.bf16.mxu0 0
    %1090 = vmatpush1.bf16.msra.mxu0 0
    %1091 = vmatprep.subr.bf16.mxu0 0
    %1092 = vmatpush1.bf16.msra.mxu0 0
    %1093 = vmatprep.subr.bf16.mxu0 0
    %1094 = vmatpush1.bf16.msra.mxu0 0
    %1095 = vmatprep.subr.bf16.mxu0 0
    %1096 = vmatpush1.bf16.msra.mxu0 0
    %1097 = vmatprep.subr.bf16.mxu0 0
    %1098 = vmatpush1.bf16.msra.mxu0 0
    %1099 = vmatprep.subr.bf16.mxu0 0
    %1100 = vmatpush1.bf16.msra.mxu0 %v1083
    %1101 = vmatprep.subr.bf16.mxu0 0
    %1102 = vmatpush2.bf16.msra.mxu0 0
    %1103 = vmatprep.subr.bf16.mxu0 0
    %1104 = vmatpush2.bf16.msra.mxu0 0
    %1105 = vmatprep.subr.bf16.mxu0 0
    %1106 = vmatpush2.bf16.msra.mxu0 0
    %1107 = vmatprep.subr.bf16.mxu0 0
    %1108 = vmatpush2.bf16.msra.mxu0 0
    %1109 = vmatprep.subr.bf16.mxu0 0
    %1110 = vmatpush2.bf16.msra.mxu0 0
    %1111 = vmatprep.subr.bf16.mxu0 0
    %1112 = vmatpush2.bf16.msra.mxu0 0
    %1113 = vmatprep.subr.bf16.mxu0 0
    %1114 = vmatpush2.bf16.msra.mxu0 0
    %1115 = vmatprep.subr.bf16.mxu0 0
    %1116 = vmatpush2.bf16.msra.mxu0 0
    %1117 = vmatprep.mubr.bf16.mxu0 0
    %1118 = vmatmul.mubr.bf16.gmra.mxu0 %v1080
    %v1119 = vpop.f32.mrf.mxu0
    %v1120 = vadd.f32 0.0, %v1119
    %v1121 = vpop.f32.mrf.mxu0
    %v1122 = vpop.f32.mrf.mxu0
    %v1123 = vpop.f32.mrf.mxu0
    %1124 = vdwg.mxu0
    %1127 = vrot.lane.b32.xlu0 %v632, 8
    %v1128 = vpop.permute.xlu0 %1127
    %1129 = vrot.lane.b32.xlu0 %v680, 8
    %v1130 = vpop.permute.xlu0 %1129
    %1135 = vrot.lane.b32.xlu0 %v852, 16
    %v1136 = vpop.permute.xlu0 %1135
    %1137 = vrot.lane.b32.xlu0 %v900, 16
    %v1138 = vpop.permute.xlu0 %1137
    %1143 = vrot.lane.b32.xlu0 %v1072, 24
    %v1144 = vpop.permute.xlu0 %1143
    %1145 = vrot.lane.b32.xlu0 %v1120, 24
    %v1146 = vpop.permute.xlu0 %1145
    %v1149 = vsel %vm232, %v409, %v1128
    %v1150 = vsel %vm232, %v458, %v1130
    %v1151 = vsel %vm42, %v1149, %v1136
    %v1152 = vsel %vm42, %v1150, %v1138
    %vm1153 = vcmask 195584
    %v1154 = vsel %vm1153, %v1151, %v1144
    %v1155 = vsel %vm1153, %v1152, %v1146
    %v1156 = vpack.c.bf16 %v1155, %v1154
    %v1157 = vld [vmem:[%s4] sm:$0xf]
    %v1158 = vld [vmem:[%s4 + $0x4] sm:$0xf]
    %v1159 = vld [vmem:[%s4 + $0x8] sm:$0xf]
    %v1160 = vld [vmem:[%s4 + $0xc] sm:$0xf]
    %v1161 = vlaneseq
    %v1162 = vshrl.u32 %v1161, 7
    %v1163 = vsub.s32 3, %v1162
    %v1164 = vrot.slane %v113, %v1163
    %v1169 = vunpack.c.l.b16 %v1157
    %v1170 = vunpack.c.l.b16 %v1158
    %v1171 = vunpack.c.l.b16 %v1159
    %v1172 = vunpack.c.l.b16 %v1160
    %v1173 = vpack.c.b16 %v1170, %v1169
    %v1174 = vpack.c.b16 %v1172, %v1171
    %v1178 = vsel %vm132, %v1156, 0
    %1180 = vmatprep.subr.bf16.mxu0 0
    %1181 = vmatpush1.bf16.msra.mxu0 0
    %1182 = vmatprep.subr.bf16.mxu0 0
    %1183 = vmatpush1.bf16.msra.mxu0 0
    %1184 = vmatprep.subr.bf16.mxu0 0
    %1185 = vmatpush1.bf16.msra.mxu0 0
    %1186 = vmatprep.subr.bf16.mxu0 0
    %1187 = vmatpush1.bf16.msra.mxu0 0
    %1188 = vmatprep.subr.bf16.mxu0 0
    %1189 = vmatpush1.bf16.msra.mxu0 0
    %1190 = vmatprep.subr.bf16.mxu0 0
    %1191 = vmatpush1.bf16.msra.mxu0 0
    %1192 = vmatprep.subr.bf16.mxu0 0
    %1193 = vmatpush1.bf16.msra.mxu0 %v1174
    %1194 = vmatprep.subr.bf16.mxu0 0
    %1195 = vmatpush1.bf16.msra.mxu0 %v1173
    %1196 = vmatprep.subr.bf16.mxu0 0
    %1197 = vmatpush2.bf16.msra.mxu0 0
    %1198 = vmatprep.subr.bf16.mxu0 0
    %1199 = vmatpush2.bf16.msra.mxu0 0
    %1200 = vmatprep.subr.bf16.mxu0 0
    %1201 = vmatpush2.bf16.msra.mxu0 0
    %1202 = vmatprep.subr.bf16.mxu0 0
    %1203 = vmatpush2.bf16.msra.mxu0 0
    %1204 = vmatprep.subr.bf16.mxu0 0
    %1205 = vmatpush2.bf16.msra.mxu0 0
    %1206 = vmatprep.subr.bf16.mxu0 0
    %1207 = vmatpush2.bf16.msra.mxu0 0
    %1208 = vmatprep.subr.bf16.mxu0 0
    %1209 = vmatpush2.bf16.msra.mxu0 0
    %1210 = vmatprep.subr.bf16.mxu0 0
    %1211 = vmatpush2.bf16.msra.mxu0 0
    %1212 = vmatprep.mubr.bf16.mxu0 0
    %1213 = vmatmul.mubr.bf16.gmra.mxu0 %v1178
    %v1214 = vpop.f32.mrf.mxu0
    %v1215 = vadd.f32 %v1164, %v1214
    %v1216 = vpop.f32.mrf.mxu0
    %v1217 = vpop.f32.mrf.mxu0
    %v1218 = vadd.f32 %v1164, %v1217
    %v1219 = vpop.f32.mrf.mxu0
    %1220 = vdwg.mxu0
    %v1221 = vadd.f32 %v1215, %v107
    %v1222 = vadd.f32 %v1218, %v110
    %v1223 = vsel %vm132, %v1221, 0.0
    %1224 = vadd.xlane.f32.xlu0 %v1223
    %v1225 = vpop.xlane.xlu0 %1224
    %v1226 = vsel %vm132, %v1222, 0.0
    %1227 = vadd.xlane.f32.xlu0 %v1226
    %v1228 = vpop.xlane.xlu0 %1227
    %v1229 = vrcp.pop 32.0
    %v1230 = vmul.f32 %v1225, %v1229
    %v1231 = vmul.f32 %v1228, %v1229
    %v1232 = vsub.f32 %v1221, %v1230
    %v1233 = vsub.f32 %v1222, %v1231
    %v1234 = vmul.f32 %v1232, %v1232
    %v1235 = vmul.f32 %v1233, %v1233
    %v1236 = vsel %vm132, %v1234, 0.0
    %1237 = vadd.xlane.f32.xlu0 %v1236
    %v1238 = vpop.xlane.xlu0 %1237
    %v1239 = vsel %vm132, %v1235, 0.0
    %1240 = vadd.xlane.f32.xlu0 %v1239
    %v1241 = vpop.xlane.xlu0 %1240
    %v1242 = vmul.f32 %v1238, %v1229
    %v1243 = vmul.f32 %v1241, %v1229
    %v1244 = vadd.f32 %v1242, 1e-05
    %v1245 = vadd.f32 %v1243, 1e-05
    %v1246 = vrsqrt.pop %v1244
    %v1247 = vrsqrt.pop %v1245
    %v1248 = vmul.f32 %v1232, %v1246
    %v1249 = vmul.f32 %v1233, %v1247
    %v1250 = vlaneseq
    %v1251 = vshrl.u32 %v1250, 7
    %v1252 = vsub.s32 5, %v1251
    %v1253 = vrot.slane %v113, %v1252
    %v1254 = vmul.f32 %v1248, %v1253
    %v1255 = vmul.f32 %v1249, %v1253
    %v1256 = vlaneseq
    %v1257 = vshrl.u32 %v1256, 7
    %v1258 = vsub.s32 6, %v1257
    %v1259 = vrot.slane %v113, %v1258
    %v1260 = vadd.f32 %v1254, %v1259
    %v1261 = vadd.f32 %v1255, %v1259
    %v1262 = vpack.c.bf16 %v1261, %v1260
    %v1263 = vld [vmem:[%s5] sm:$0xff]
    %v1264 = vld [vmem:[%s5 + $0x8] sm:$0xff]
    %v1265 = vld [vmem:[%s5 + $0x10] sm:$0xff]
    %v1266 = vld [vmem:[%s5 + $0x18] sm:$0xff]
    %v1267 = vld [vmem:[%s5 + $0x20] sm:$0xff]
    %v1268 = vld [vmem:[%s5 + $0x28] sm:$0xff]
    %v1269 = vld [vmem:[%s5 + $0x30] sm:$0xff]
    %v1270 = vld [vmem:[%s5 + $0x38] sm:$0xff]
    %v1271 = vld [vmem:[%s8] sm:$0xf]
    %v1273 = vlaneseq
    %v1274 = vshrl.u32 %v1273, 7
    %v1275 = vsub.s32 0, %v1274
    %v1276 = vrot.slane %v1271, %v1275
    %v1277 = vlaneseq
    %v1278 = vshrl.u32 %v1277, 7
    %v1279 = vsub.s32 1, %v1278
    %v1280 = vrot.slane %v1271, %v1279
    %v1281 = vlaneseq
    %v1282 = vshrl.u32 %v1281, 7
    %v1283 = vsub.s32 2, %v1282
    %v1284 = vrot.slane %v1271, %v1283
    %v1285 = vlaneseq
    %v1286 = vshrl.u32 %v1285, 7
    %v1287 = vsub.s32 3, %v1286
    %v1288 = vrot.slane %v1271, %v1287
    %v1301 = vunpack.c.l.b16 %v1263
    %v1302 = vunpack.c.h.b16 %v1263
    %v1303 = vunpack.c.l.b16 %v1264
    %v1304 = vunpack.c.h.b16 %v1264
    %v1305 = vunpack.c.l.b16 %v1265
    %v1306 = vunpack.c.h.b16 %v1265
    %v1307 = vunpack.c.l.b16 %v1266
    %v1308 = vunpack.c.h.b16 %v1266
    %v1309 = vunpack.c.l.b16 %v1267
    %v1310 = vunpack.c.h.b16 %v1267
    %v1311 = vunpack.c.l.b16 %v1268
    %v1312 = vunpack.c.h.b16 %v1268
    %v1313 = vunpack.c.l.b16 %v1269
    %v1314 = vunpack.c.h.b16 %v1269
    %v1315 = vunpack.c.l.b16 %v1270
    %v1316 = vunpack.c.h.b16 %v1270
    %v1317 = vpack.c.b16 %v1305, %v1301
    %v1318 = vpack.c.b16 %v1306, %v1302
    %v1319 = vpack.c.b16 %v1307, %v1303
    %v1320 = vpack.c.b16 %v1308, %v1304
    %v1321 = vpack.c.b16 %v1313, %v1309
    %v1322 = vpack.c.b16 %v1314, %v1310
    %v1323 = vpack.c.b16 %v1315, %v1311
    %v1324 = vpack.c.b16 %v1316, %v1312
    %v1334 = vsel %vm132, %v1262, 0
    %1336 = vmatprep.subr.bf16.mxu0 0
    %1337 = vmatpush1.bf16.msra.mxu0 0
    %1338 = vmatprep.subr.bf16.mxu0 0
    %1339 = vmatpush1.bf16.msra.mxu0 0
    %1340 = vmatprep.subr.bf16.mxu0 0
    %1341 = vmatpush1.bf16.msra.mxu0 0
    %1342 = vmatprep.subr.bf16.mxu0 0
    %1343 = vmatpush1.bf16.msra.mxu0 0
    %1344 = vmatprep.subr.bf16.mxu0 0
    %1345 = vmatpush1.bf16.msra.mxu0 0
    %1346 = vmatprep.subr.bf16.mxu0 0
    %1347 = vmatpush1.bf16.msra.mxu0 0
    %1348 = vmatprep.subr.bf16.mxu0 %v1322
    %1349 = vmatpush1.bf16.msra.mxu0 %v1321
    %1350 = vmatprep.subr.bf16.mxu0 %v1318
    %1351 = vmatpush1.bf16.msra.mxu0 %v1317
    %1352 = vmatprep.subr.bf16.mxu0 0
    %1353 = vmatpush2.bf16.msra.mxu0 0
    %1354 = vmatprep.subr.bf16.mxu0 0
    %1355 = vmatpush2.bf16.msra.mxu0 0
    %1356 = vmatprep.subr.bf16.mxu0 0
    %1357 = vmatpush2.bf16.msra.mxu0 0
    %1358 = vmatprep.subr.bf16.mxu0 0
    %1359 = vmatpush2.bf16.msra.mxu0 0
    %1360 = vmatprep.subr.bf16.mxu0 0
    %1361 = vmatpush2.bf16.msra.mxu0 0
    %1362 = vmatprep.subr.bf16.mxu0 0
    %1363 = vmatpush2.bf16.msra.mxu0 0
    %1364 = vmatprep.subr.bf16.mxu0 0
    %1365 = vmatpush2.bf16.msra.mxu0 0
    %1366 = vmatprep.subr.bf16.mxu0 0
    %1367 = vmatpush2.bf16.msra.mxu0 0
    %1368 = vmatprep.mubr.bf16.mxu0 0
    %1369 = vmatmul.mubr.bf16.gmra.mxu0 %v1334
    %v1370 = vpop.f32.mrf.mxu0
    %v1371 = vadd.f32 %v1276, %v1370
    %v1372 = vpop.f32.mrf.mxu0
    %v1373 = vadd.f32 %v1280, %v1372
    %v1374 = vpop.f32.mrf.mxu0
    %v1375 = vadd.f32 %v1276, %v1374
    %v1376 = vpop.f32.mrf.mxu0
    %v1377 = vadd.f32 %v1280, %v1376
    %1378 = vdwg.mxu0
    %1379 = vmatprep.subr.bf16.mxu0 0
    %1380 = vmatpush1.bf16.msra.mxu0 0
    %1381 = vmatprep.subr.bf16.mxu0 0
    %1382 = vmatpush1.bf16.msra.mxu0 0
    %1383 = vmatprep.subr.bf16.mxu0 0
    %1384 = vmatpush1.bf16.msra.mxu0 0
    %1385 = vmatprep.subr.bf16.mxu0 0
    %1386 = vmatpush1.bf16.msra.mxu0 0
    %1387 = vmatprep.subr.bf16.mxu0 0
    %1388 = vmatpush1.bf16.msra.mxu0 0
    %1389 = vmatprep.subr.bf16.mxu0 0
    %1390 = vmatpush1.bf16.msra.mxu0 0
    %1391 = vmatprep.subr.bf16.mxu0 %v1324
    %1392 = vmatpush1.bf16.msra.mxu0 %v1323
    %1393 = vmatprep.subr.bf16.mxu0 %v1320
    %1394 = vmatpush1.bf16.msra.mxu0 %v1319
    %1395 = vmatprep.subr.bf16.mxu0 0
    %1396 = vmatpush2.bf16.msra.mxu0 0
    %1397 = vmatprep.subr.bf16.mxu0 0
    %1398 = vmatpush2.bf16.msra.mxu0 0
    %1399 = vmatprep.subr.bf16.mxu0 0
    %1400 = vmatpush2.bf16.msra.mxu0 0
    %1401 = vmatprep.subr.bf16.mxu0 0
    %1402 = vmatpush2.bf16.msra.mxu0 0
    %1403 = vmatprep.subr.bf16.mxu0 0
    %1404 = vmatpush2.bf16.msra.mxu0 0
    %1405 = vmatprep.subr.bf16.mxu0 0
    %1406 = vmatpush2.bf16.msra.mxu0 0
    %1407 = vmatprep.subr.bf16.mxu0 0
    %1408 = vmatpush2.bf16.msra.mxu0 0
    %1409 = vmatprep.subr.bf16.mxu0 0
    %1410 = vmatpush2.bf16.msra.mxu0 0
    %1411 = vmatprep.mubr.bf16.mxu0 0
    %1412 = vmatmul.mubr.bf16.gmra.mxu0 %v1334
    %v1413 = vpop.f32.mrf.mxu0
    %v1414 = vadd.f32 %v1284, %v1413
    %v1415 = vpop.f32.mrf.mxu0
    %v1416 = vadd.f32 %v1288, %v1415
    %v1417 = vpop.f32.mrf.mxu0
    %v1418 = vadd.f32 %v1284, %v1417
    %v1419 = vpop.f32.mrf.mxu0
    %v1420 = vadd.f32 %v1288, %v1419
    %1421 = vdwg.mxu0
    %v1422 = vmax.f32 %v1371, 0.0
    %v1423 = vmax.f32 %v1373, 0.0
    %v1424 = vmax.f32 %v1414, 0.0
    %v1425 = vmax.f32 %v1416, 0.0
    %v1426 = vmax.f32 %v1375, 0.0
    %v1427 = vmax.f32 %v1377, 0.0
    %v1428 = vmax.f32 %v1418, 0.0
    %v1429 = vmax.f32 %v1420, 0.0
    %v1430 = vpack.c.bf16 %v1426, %v1422
    %v1431 = vpack.c.bf16 %v1427, %v1423
    %v1432 = vpack.c.bf16 %v1428, %v1424
    %v1433 = vpack.c.bf16 %v1429, %v1425
    %v1434 = vld [vmem:[%s6] sm:$0xf]
    %v1435 = vld [vmem:[%s6 + $0x4] sm:$0xf]
    %v1436 = vld [vmem:[%s6 + $0x8] sm:$0xf]
    %v1437 = vld [vmem:[%s6 + $0xc] sm:$0xf]
    %v1438 = vld [vmem:[%s6 + $0x10] sm:$0xf]
    %v1439 = vld [vmem:[%s6 + $0x14] sm:$0xf]
    %v1440 = vld [vmem:[%s6 + $0x18] sm:$0xf]
    %v1441 = vld [vmem:[%s6 + $0x1c] sm:$0xf]
    %v1442 = vld [vmem:[%s6 + $0x20] sm:$0xf]
    %v1443 = vld [vmem:[%s6 + $0x24] sm:$0xf]
    %v1444 = vld [vmem:[%s6 + $0x28] sm:$0xf]
    %v1445 = vld [vmem:[%s6 + $0x2c] sm:$0xf]
    %v1446 = vld [vmem:[%s6 + $0x30] sm:$0xf]
    %v1447 = vld [vmem:[%s6 + $0x34] sm:$0xf]
    %v1448 = vld [vmem:[%s6 + $0x38] sm:$0xf]
    %v1449 = vld [vmem:[%s6 + $0x3c] sm:$0xf]
    %v1450 = vld [vmem:[%s6 + $0x40] sm:$0xf]
    %v1451 = vld [vmem:[%s6 + $0x44] sm:$0xf]
    %v1452 = vld [vmem:[%s6 + $0x48] sm:$0xf]
    %v1453 = vld [vmem:[%s6 + $0x4c] sm:$0xf]
    %v1454 = vld [vmem:[%s6 + $0x50] sm:$0xf]
    %v1455 = vld [vmem:[%s6 + $0x54] sm:$0xf]
    %v1456 = vld [vmem:[%s6 + $0x58] sm:$0xf]
    %v1457 = vld [vmem:[%s6 + $0x5c] sm:$0xf]
    %v1458 = vld [vmem:[%s6 + $0x60] sm:$0xf]
    %v1459 = vld [vmem:[%s6 + $0x64] sm:$0xf]
    %v1460 = vld [vmem:[%s6 + $0x68] sm:$0xf]
    %v1461 = vld [vmem:[%s6 + $0x6c] sm:$0xf]
    %v1462 = vld [vmem:[%s6 + $0x70] sm:$0xf]
    %v1463 = vld [vmem:[%s6 + $0x74] sm:$0xf]
    %v1464 = vld [vmem:[%s6 + $0x78] sm:$0xf]
    %v1465 = vld [vmem:[%s6 + $0x7c] sm:$0xf]
    %v1466 = vld [vmem:[%s6 + $0x80] sm:$0xf]
    %v1467 = vld [vmem:[%s6 + $0x84] sm:$0xf]
    %v1468 = vld [vmem:[%s6 + $0x88] sm:$0xf]
    %v1469 = vld [vmem:[%s6 + $0x8c] sm:$0xf]
    %v1470 = vld [vmem:[%s6 + $0x90] sm:$0xf]
    %v1471 = vld [vmem:[%s6 + $0x94] sm:$0xf]
    %v1472 = vld [vmem:[%s6 + $0x98] sm:$0xf]
    %v1473 = vld [vmem:[%s6 + $0x9c] sm:$0xf]
    %v1474 = vld [vmem:[%s6 + $0xa0] sm:$0xf]
    %v1475 = vld [vmem:[%s6 + $0xa4] sm:$0xf]
    %v1476 = vld [vmem:[%s6 + $0xa8] sm:$0xf]
    %v1477 = vld [vmem:[%s6 + $0xac] sm:$0xf]
    %v1478 = vld [vmem:[%s6 + $0xb0] sm:$0xf]
    %v1479 = vld [vmem:[%s6 + $0xb4] sm:$0xf]
    %v1480 = vld [vmem:[%s6 + $0xb8] sm:$0xf]
    %v1481 = vld [vmem:[%s6 + $0xbc] sm:$0xf]
    %v1482 = vld [vmem:[%s6 + $0xc0] sm:$0xf]
    %v1483 = vld [vmem:[%s6 + $0xc4] sm:$0xf]
    %v1484 = vld [vmem:[%s6 + $0xc8] sm:$0xf]
    %v1485 = vld [vmem:[%s6 + $0xcc] sm:$0xf]
    %v1486 = vld [vmem:[%s6 + $0xd0] sm:$0xf]
    %v1487 = vld [vmem:[%s6 + $0xd4] sm:$0xf]
    %v1488 = vld [vmem:[%s6 + $0xd8] sm:$0xf]
    %v1489 = vld [vmem:[%s6 + $0xdc] sm:$0xf]
    %v1490 = vld [vmem:[%s6 + $0xe0] sm:$0xf]
    %v1491 = vld [vmem:[%s6 + $0xe4] sm:$0xf]
    %v1492 = vld [vmem:[%s6 + $0xe8] sm:$0xf]
    %v1493 = vld [vmem:[%s6 + $0xec] sm:$0xf]
    %v1494 = vld [vmem:[%s6 + $0xf0] sm:$0xf]
    %v1495 = vld [vmem:[%s6 + $0xf4] sm:$0xf]
    %v1496 = vld [vmem:[%s6 + $0xf8] sm:$0xf]
    %v1497 = vld [vmem:[%s6 + $0xfc] sm:$0xf]
    %v1498 = vlaneseq
    %v1499 = vshrl.u32 %v1498, 7
    %v1500 = vsub.s32 4, %v1499
    %v1501 = vrot.slane %v113, %v1500
    %v1566 = vunpack.c.l.b16 %v1434
    %v1567 = vunpack.c.l.b16 %v1435
    %v1568 = vunpack.c.l.b16 %v1436
    %v1569 = vunpack.c.l.b16 %v1437
    %v1570 = vunpack.c.l.b16 %v1438
    %v1571 = vunpack.c.l.b16 %v1439
    %v1572 = vunpack.c.l.b16 %v1440
    %v1573 = vunpack.c.l.b16 %v1441
    %v1574 = vunpack.c.l.b16 %v1442
    %v1575 = vunpack.c.l.b16 %v1443
    %v1576 = vunpack.c.l.b16 %v1444
    %v1577 = vunpack.c.l.b16 %v1445
    %v1578 = vunpack.c.l.b16 %v1446
    %v1579 = vunpack.c.l.b16 %v1447
    %v1580 = vunpack.c.l.b16 %v1448
    %v1581 = vunpack.c.l.b16 %v1449
    %v1582 = vunpack.c.l.b16 %v1450
    %v1583 = vunpack.c.l.b16 %v1451
    %v1584 = vunpack.c.l.b16 %v1452
    %v1585 = vunpack.c.l.b16 %v1453
    %v1586 = vunpack.c.l.b16 %v1454
    %v1587 = vunpack.c.l.b16 %v1455
    %v1588 = vunpack.c.l.b16 %v1456
    %v1589 = vunpack.c.l.b16 %v1457
    %v1590 = vunpack.c.l.b16 %v1458
    %v1591 = vunpack.c.l.b16 %v1459
    %v1592 = vunpack.c.l.b16 %v1460
    %v1593 = vunpack.c.l.b16 %v1461
    %v1594 = vunpack.c.l.b16 %v1462
    %v1595 = vunpack.c.l.b16 %v1463
    %v1596 = vunpack.c.l.b16 %v1464
    %v1597 = vunpack.c.l.b16 %v1465
    %v1598 = vunpack.c.l.b16 %v1466
    %v1599 = vunpack.c.l.b16 %v1467
    %v1600 = vunpack.c.l.b16 %v1468
    %v1601 = vunpack.c.l.b16 %v1469
    %v1602 = vunpack.c.l.b16 %v1470
    %v1603 = vunpack.c.l.b16 %v1471
    %v1604 = vunpack.c.l.b16 %v1472
    %v1605 = vunpack.c.l.b16 %v1473
    %v1606 = vunpack.c.l.b16 %v1474
    %v1607 = vunpack.c.l.b16 %v1475
    %v1608 = vunpack.c.l.b16 %v1476
    %v1609 = vunpack.c.l.b16 %v1477
    %v1610 = vunpack.c.l.b16 %v1478
    %v1611 = vunpack.c.l.b16 %v1479
    %v1612 = vunpack.c.l.b16 %v1480
    %v1613 = vunpack.c.l.b16 %v1481
    %v1614 = vunpack.c.l.b16 %v1482
    %v1615 = vunpack.c.l.b16 %v1483
    %v1616 = vunpack.c.l.b16 %v1484
    %v1617 = vunpack.c.l.b16 %v1485
    %v1618 = vunpack.c.l.b16 %v1486
    %v1619 = vunpack.c.l.b16 %v1487
    %v1620 = vunpack.c.l.b16 %v1488
    %v1621 = vunpack.c.l.b16 %v1489
    %v1622 = vunpack.c.l.b16 %v1490
    %v1623 = vunpack.c.l.b16 %v1491
    %v1624 = vunpack.c.l.b16 %v1492
    %v1625 = vunpack.c.l.b16 %v1493
    %v1626 = vunpack.c.l.b16 %v1494
    %v1627 = vunpack.c.l.b16 %v1495
    %v1628 = vunpack.c.l.b16 %v1496
    %v1629 = vunpack.c.l.b16 %v1497
    %v1630 = vpack.c.b16 %v1567, %v1566
    %v1631 = vpack.c.b16 %v1569, %v1568
    %v1632 = vpack.c.b16 %v1571, %v1570
    %v1633 = vpack.c.b16 %v1573, %v1572
    %v1634 = vpack.c.b16 %v1575, %v1574
    %v1635 = vpack.c.b16 %v1577, %v1576
    %v1636 = vpack.c.b16 %v1579, %v1578
    %v1637 = vpack.c.b16 %v1581, %v1580
    %v1638 = vpack.c.b16 %v1583, %v1582
    %v1639 = vpack.c.b16 %v1585, %v1584
    %v1640 = vpack.c.b16 %v1587, %v1586
    %v1641 = vpack.c.b16 %v1589, %v1588
    %v1642 = vpack.c.b16 %v1591, %v1590
    %v1643 = vpack.c.b16 %v1593, %v1592
    %v1644 = vpack.c.b16 %v1595, %v1594
    %v1645 = vpack.c.b16 %v1597, %v1596
    %v1646 = vpack.c.b16 %v1599, %v1598
    %v1647 = vpack.c.b16 %v1601, %v1600
    %v1648 = vpack.c.b16 %v1603, %v1602
    %v1649 = vpack.c.b16 %v1605, %v1604
    %v1650 = vpack.c.b16 %v1607, %v1606
    %v1651 = vpack.c.b16 %v1609, %v1608
    %v1652 = vpack.c.b16 %v1611, %v1610
    %v1653 = vpack.c.b16 %v1613, %v1612
    %v1654 = vpack.c.b16 %v1615, %v1614
    %v1655 = vpack.c.b16 %v1617, %v1616
    %v1656 = vpack.c.b16 %v1619, %v1618
    %v1657 = vpack.c.b16 %v1621, %v1620
    %v1658 = vpack.c.b16 %v1623, %v1622
    %v1659 = vpack.c.b16 %v1625, %v1624
    %v1660 = vpack.c.b16 %v1627, %v1626
    %v1661 = vpack.c.b16 %v1629, %v1628
    %1694 = vmatprep.subr.bf16.mxu0 0
    %1695 = vmatpush1.bf16.msra.mxu0 %v1637
    %1696 = vmatprep.subr.bf16.mxu0 0
    %1697 = vmatpush1.bf16.msra.mxu0 %v1636
    %1698 = vmatprep.subr.bf16.mxu0 0
    %1699 = vmatpush1.bf16.msra.mxu0 %v1635
    %1700 = vmatprep.subr.bf16.mxu0 0
    %1701 = vmatpush1.bf16.msra.mxu0 %v1634
    %1702 = vmatprep.subr.bf16.mxu0 0
    %1703 = vmatpush1.bf16.msra.mxu0 %v1633
    %1704 = vmatprep.subr.bf16.mxu0 0
    %1705 = vmatpush1.bf16.msra.mxu0 %v1632
    %1706 = vmatprep.subr.bf16.mxu0 0
    %1707 = vmatpush1.bf16.msra.mxu0 %v1631
    %1708 = vmatprep.subr.bf16.mxu0 0
    %1709 = vmatpush1.bf16.msra.mxu0 %v1630
    %1710 = vmatprep.subr.bf16.mxu0 0
    %1711 = vmatpush2.bf16.msra.mxu0 %v1645
    %1712 = vmatprep.subr.bf16.mxu0 0
    %1713 = vmatpush2.bf16.msra.mxu0 %v1644
    %1714 = vmatprep.subr.bf16.mxu0 0
    %1715 = vmatpush2.bf16.msra.mxu0 %v1643
    %1716 = vmatprep.subr.bf16.mxu0 0
    %1717 = vmatpush2.bf16.msra.mxu0 %v1642
    %1718 = vmatprep.subr.bf16.mxu0 0
    %1719 = vmatpush2.bf16.msra.mxu0 %v1641
    %1720 = vmatprep.subr.bf16.mxu0 0
    %1721 = vmatpush2.bf16.msra.mxu0 %v1640
    %1722 = vmatprep.subr.bf16.mxu0 0
    %1723 = vmatpush2.bf16.msra.mxu0 %v1639
    %1724 = vmatprep.subr.bf16.mxu0 0
    %1725 = vmatpush2.bf16.msra.mxu0 %v1638
    %1726 = vmatprep.mubr.bf16.mxu0 %v1431
    %1727 = vmatmul.mubr.bf16.gmra.mxu0 %v1430
    %v1728 = vpop.f32.mrf.mxu0
    %v1729 = vadd.f32 %v1501, %v1728
    %v1730 = vpop.f32.mrf.mxu0
    %v1731 = vpop.f32.mrf.mxu0
    %v1732 = vadd.f32 %v1501, %v1731
    %v1733 = vpop.f32.mrf.mxu0
    %1734 = vdwg.mxu0
    %1735 = vmatprep.subr.bf16.mxu0 0
    %1736 = vmatpush1.bf16.msra.mxu0 %v1653
    %1737 = vmatprep.subr.bf16.mxu0 0
    %1738 = vmatpush1.bf16.msra.mxu0 %v1652
    %1739 = vmatprep.subr.bf16.mxu0 0
    %1740 = vmatpush1.bf16.msra.mxu0 %v1651
    %1741 = vmatprep.subr.bf16.mxu0 0
    %1742 = vmatpush1.bf16.msra.mxu0 %v1650
    %1743 = vmatprep.subr.bf16.mxu0 0
    %1744 = vmatpush1.bf16.msra.mxu0 %v1649
    %1745 = vmatprep.subr.bf16.mxu0 0
    %1746 = vmatpush1.bf16.msra.mxu0 %v1648
    %1747 = vmatprep.subr.bf16.mxu0 0
    %1748 = vmatpush1.bf16.msra.mxu0 %v1647
    %1749 = vmatprep.subr.bf16.mxu0 0
    %1750 = vmatpush1.bf16.msra.mxu0 %v1646
    %1751 = vmatprep.subr.bf16.mxu0 0
    %1752 = vmatpush2.bf16.msra.mxu0 %v1661
    %1753 = vmatprep.subr.bf16.mxu0 0
    %1754 = vmatpush2.bf16.msra.mxu0 %v1660
    %1755 = vmatprep.subr.bf16.mxu0 0
    %1756 = vmatpush2.bf16.msra.mxu0 %v1659
    %1757 = vmatprep.subr.bf16.mxu0 0
    %1758 = vmatpush2.bf16.msra.mxu0 %v1658
    %1759 = vmatprep.subr.bf16.mxu0 0
    %1760 = vmatpush2.bf16.msra.mxu0 %v1657
    %1761 = vmatprep.subr.bf16.mxu0 0
    %1762 = vmatpush2.bf16.msra.mxu0 %v1656
    %1763 = vmatprep.subr.bf16.mxu0 0
    %1764 = vmatpush2.bf16.msra.mxu0 %v1655
    %1765 = vmatprep.subr.bf16.mxu0 0
    %1766 = vmatpush2.bf16.msra.mxu0 %v1654
    %1767 = vmatprep.mubr.bf16.mxu0 %v1433
    %1768 = vmatmul.mubr.bf16.gmra.mxu0 %v1432
    %v1769 = vpop.f32.mrf.mxu0
    %v1770 = vadd.f32 %v1729, %v1769
    %v1771 = vpop.f32.mrf.mxu0
    %v1772 = vpop.f32.mrf.mxu0
    %v1773 = vadd.f32 %v1732, %v1772
    %v1774 = vpop.f32.mrf.mxu0
    %1775 = vdwg.mxu0
    %v1776 = vadd.f32 %v1770, %v1260
    %v1777 = vadd.f32 %v1773, %v1261
    %v1778 = vsel %vm132, %v1776, 0.0
    %1779 = vadd.xlane.f32.xlu0 %v1778
    %v1780 = vpop.xlane.xlu0 %1779
    %v1781 = vsel %vm132, %v1777, 0.0
    %1782 = vadd.xlane.f32.xlu0 %v1781
    %v1783 = vpop.xlane.xlu0 %1782
    %v1784 = vmul.f32 %v1780, %v1229
    %v1785 = vmul.f32 %v1783, %v1229
    %v1786 = vsub.f32 %v1776, %v1784
    %v1787 = vsub.f32 %v1777, %v1785
    %v1788 = vmul.f32 %v1786, %v1786
    %v1789 = vmul.f32 %v1787, %v1787
    %v1790 = vsel %vm132, %v1788, 0.0
    %1791 = vadd.xlane.f32.xlu0 %v1790
    %v1792 = vpop.xlane.xlu0 %1791
    %v1793 = vsel %vm132, %v1789, 0.0
    %1794 = vadd.xlane.f32.xlu0 %v1793
    %v1795 = vpop.xlane.xlu0 %1794
    %v1796 = vmul.f32 %v1792, %v1229
    %v1797 = vmul.f32 %v1795, %v1229
    %v1798 = vadd.f32 %v1796, 1e-05
    %v1799 = vadd.f32 %v1797, 1e-05
    %v1800 = vrsqrt.pop %v1798
    %v1801 = vrsqrt.pop %v1799
    %v1802 = vmul.f32 %v1786, %v1800
    %v1803 = vmul.f32 %v1787, %v1801
    %v1804 = vlaneseq
    %v1805 = vshrl.u32 %v1804, 7
    %v1806 = vsub.s32 7, %v1805
    %v1807 = vrot.slane %v113, %v1806
    %v1808 = vmul.f32 %v1802, %v1807
    %v1809 = vmul.f32 %v1803, %v1807
    %v1810 = vlaneseq
    %v1811 = vshrl.u32 %v1810, 7
    %v1812 = vsub.s32 0, %v1811
    %v1813 = vrot.slane %v114, %v1812
    %v1814 = vadd.f32 %v1808, %v1813
    %v1815 = vadd.f32 %v1809, %v1813
    %s1816 = scalar_lea.vmem %s7, 16
    %v1817 = vld [vmem:[%s1816] sm:$0xff]
    %v1818 = vld [vmem:[%s1816 + $0x8] sm:$0x1]
    %v1819 = vpack.c.bf16 %v1815, %v1814
    %s1820 = scalar_lea.vmem %s3, 16
    %v1821 = vld [vmem:[%s1820] sm:$0xf]
    %v1822 = vld [vmem:[%s1820 + $0x4] sm:$0xf]
    %v1823 = vld [vmem:[%s1820 + $0x8] sm:$0xf]
    %v1824 = vld [vmem:[%s1820 + $0xc] sm:$0xf]
    %v1829 = vunpack.c.l.b16 %v1821
    %v1830 = vunpack.c.l.b16 %v1822
    %v1831 = vunpack.c.l.b16 %v1823
    %v1832 = vunpack.c.l.b16 %v1824
    %v1833 = vpack.c.b16 %v1830, %v1829
    %v1834 = vpack.c.b16 %v1832, %v1831
    %v1838 = vsel %vm132, %v1819, 0
    %1840 = vmatprep.subr.bf16.mxu0 0
    %1841 = vmatpush1.bf16.msra.mxu0 0
    %1842 = vmatprep.subr.bf16.mxu0 0
    %1843 = vmatpush1.bf16.msra.mxu0 0
    %1844 = vmatprep.subr.bf16.mxu0 0
    %1845 = vmatpush1.bf16.msra.mxu0 0
    %1846 = vmatprep.subr.bf16.mxu0 0
    %1847 = vmatpush1.bf16.msra.mxu0 0
    %1848 = vmatprep.subr.bf16.mxu0 0
    %1849 = vmatpush1.bf16.msra.mxu0 0
    %1850 = vmatprep.subr.bf16.mxu0 0
    %1851 = vmatpush1.bf16.msra.mxu0 0
    %1852 = vmatprep.subr.bf16.mxu0 0
    %1853 = vmatpush1.bf16.msra.mxu0 %v1834
    %1854 = vmatprep.subr.bf16.mxu0 0
    %1855 = vmatpush1.bf16.msra.mxu0 %v1833
    %1856 = vmatprep.subr.bf16.mxu0 0
    %1857 = vmatpush2.bf16.msra.mxu0 0
    %1858 = vmatprep.subr.bf16.mxu0 0
    %1859 = vmatpush2.bf16.msra.mxu0 0
    %1860 = vmatprep.subr.bf16.mxu0 0
    %1861 = vmatpush2.bf16.msra.mxu0 0
    %1862 = vmatprep.subr.bf16.mxu0 0
    %1863 = vmatpush2.bf16.msra.mxu0 0
    %1864 = vmatprep.subr.bf16.mxu0 0
    %1865 = vmatpush2.bf16.msra.mxu0 0
    %1866 = vmatprep.subr.bf16.mxu0 0
    %1867 = vmatpush2.bf16.msra.mxu0 0
    %1868 = vmatprep.subr.bf16.mxu0 0
    %1869 = vmatpush2.bf16.msra.mxu0 0
    %1870 = vmatprep.subr.bf16.mxu0 0
    %1871 = vmatpush2.bf16.msra.mxu0 0
    %1872 = vmatprep.mubr.bf16.mxu0 0
    %1873 = vmatmul.mubr.bf16.gmra.mxu0 %v1838
    %v1874 = vpop.f32.mrf.mxu0
    %v1875 = vadd.f32 0.0, %v1874
    %v1876 = vpop.f32.mrf.mxu0
    %v1877 = vpop.f32.mrf.mxu0
    %v1878 = vadd.f32 0.0, %v1877
    %v1879 = vpop.f32.mrf.mxu0
    %1880 = vdwg.mxu0
    %v1881 = vlaneseq
    %v1882 = vshrl.u32 %v1881, 7
    %v1883 = vsub.s32 0, %v1882
    %v1884 = vrot.slane %v1817, %v1883
    %v1885 = vadd.f32 %v1875, %v1884
    %v1886 = vadd.f32 %v1878, %v1884
    %v1887 = vlaneseq
    %v1888 = vshrl.u32 %v1887, 7
    %v1889 = vsub.s32 1, %v1888
    %v1890 = vrot.slane %v1817, %v1889
    %1892 = vrot.lane.b32.xlu0 %v1890, 32
    %v1893 = vpop.permute.xlu0 %1892
    %v1895 = vadd.f32 %v1875, %v1893
    %v1896 = vadd.f32 %v1878, %v1893
    %v1897 = vlaneseq
    %v1898 = vshrl.u32 %v1897, 7
    %v1899 = vsub.s32 2, %v1898
    %v1900 = vrot.slane %v1817, %v1899
    %1902 = vrot.lane.b32.xlu0 %v1900, 64
    %v1903 = vpop.permute.xlu0 %1902
    %v1905 = vadd.f32 %v1875, %v1903
    %v1906 = vadd.f32 %v1878, %v1903
    %v1907 = vpack.c.bf16 %v1885, %v1885
    %v1908 = vpack.c.bf16 %v1886, %v1886
    %v1909 = vpack.c.bf16 %v1895, %v1895
    %v1910 = vpack.c.bf16 %v1896, %v1896
    %v1911 = vpack.c.bf16 %v1905, %v1905
    %v1912 = vpack.c.bf16 %v1906, %v1906
    %1914 = vrot.lane.b32.xlu0 %v1909, 96
    %v1915 = vpop.permute.xlu0 %1914
    %v1917 = vsel %vm232, %v1907, 0
    %v1920 = vsel %vm232, %v1915, 0
    %1922 = vmatprep.subr.bf16.mxu0 0
    %1923 = vmatpush1.bf16.xpose.msra.mxu0 0
    %1924 = vmatprep.subr.bf16.mxu0 0
    %1925 = vmatpush1.bf16.xpose.msra.mxu0 0
    %1926 = vmatprep.subr.bf16.mxu0 0
    %1927 = vmatpush1.bf16.xpose.msra.mxu0 0
    %1928 = vmatprep.subr.bf16.mxu0 0
    %1929 = vmatpush1.bf16.xpose.msra.mxu0 0
    %1930 = vmatprep.subr.bf16.mxu0 0
    %1931 = vmatpush1.bf16.xpose.msra.mxu0 0
    %1932 = vmatprep.subr.bf16.mxu0 0
    %1933 = vmatpush1.bf16.xpose.msra.mxu0 0
    %1934 = vmatprep.subr.bf16.mxu0 0
    %1935 = vmatpush1.bf16.xpose.msra.mxu0 0
    %1936 = vmatprep.subr.bf16.mxu0 0
    %1937 = vmatpush1.bf16.xpose.msra.mxu0 %v1920
    %1938 = vmatprep.subr.bf16.mxu0 0
    %1939 = vmatpush2.bf16.xpose.msra.mxu0 0
    %1940 = vmatprep.subr.bf16.mxu0 0
    %1941 = vmatpush2.bf16.xpose.msra.mxu0 0
    %1942 = vmatprep.subr.bf16.mxu0 0
    %1943 = vmatpush2.bf16.xpose.msra.mxu0 0
    %1944 = vmatprep.subr.bf16.mxu0 0
    %1945 = vmatpush2.bf16.xpose.msra.mxu0 0
    %1946 = vmatprep.subr.bf16.mxu0 0
    %1947 = vmatpush2.bf16.xpose.msra.mxu0 0
    %1948 = vmatprep.subr.bf16.mxu0 0
    %1949 = vmatpush2.bf16.xpose.msra.mxu0 0
    %1950 = vmatprep.subr.bf16.mxu0 0
    %1951 = vmatpush2.bf16.xpose.msra.mxu0 0
    %1952 = vmatprep.subr.bf16.mxu0 0
    %1953 = vmatpush2.bf16.xpose.msra.mxu0 0
    %1954 = vmatprep.mubr.bf16.mxu0 0
    %1955 = vmatmul.mubr.bf16.gmra.mxu0 %v1917
    %v1956 = vpop.f32.mrf.mxu0
    %v1957 = vadd.f32 %v230, %v1956
    %v1958 = vpop.f32.mrf.mxu0
    %v1959 = vpop.f32.mrf.mxu0
    %v1960 = vpop.f32.mrf.mxu0
    %1961 = vdwg.mxu0
    %1963 = vrot.lane.b32.xlu0 %v1910, 96
    %v1964 = vpop.permute.xlu0 %1963
    %v1966 = vsel %vm232, %v1908, 0
    %v1969 = vsel %vm232, %v1964, 0
    %1971 = vmatprep.subr.bf16.mxu0 0
    %1972 = vmatpush1.bf16.xpose.msra.mxu0 0
    %1973 = vmatprep.subr.bf16.mxu0 0
    %1974 = vmatpush1.bf16.xpose.msra.mxu0 0
    %1975 = vmatprep.subr.bf16.mxu0 0
    %1976 = vmatpush1.bf16.xpose.msra.mxu0 0
    %1977 = vmatprep.subr.bf16.mxu0 0
    %1978 = vmatpush1.bf16.xpose.msra.mxu0 0
    %1979 = vmatprep.subr.bf16.mxu0 0
    %1980 = vmatpush1.bf16.xpose.msra.mxu0 0
    %1981 = vmatprep.subr.bf16.mxu0 0
    %1982 = vmatpush1.bf16.xpose.msra.mxu0 0
    %1983 = vmatprep.subr.bf16.mxu0 0
    %1984 = vmatpush1.bf16.xpose.msra.mxu0 0
    %1985 = vmatprep.subr.bf16.mxu0 0
    %1986 = vmatpush1.bf16.xpose.msra.mxu0 %v1969
    %1987 = vmatprep.subr.bf16.mxu0 0
    %1988 = vmatpush2.bf16.xpose.msra.mxu0 0
    %1989 = vmatprep.subr.bf16.mxu0 0
    %1990 = vmatpush2.bf16.xpose.msra.mxu0 0
    %1991 = vmatprep.subr.bf16.mxu0 0
    %1992 = vmatpush2.bf16.xpose.msra.mxu0 0
    %1993 = vmatprep.subr.bf16.mxu0 0
    %1994 = vmatpush2.bf16.xpose.msra.mxu0 0
    %1995 = vmatprep.subr.bf16.mxu0 0
    %1996 = vmatpush2.bf16.xpose.msra.mxu0 0
    %1997 = vmatprep.subr.bf16.mxu0 0
    %1998 = vmatpush2.bf16.xpose.msra.mxu0 0
    %1999 = vmatprep.subr.bf16.mxu0 0
    %2000 = vmatpush2.bf16.xpose.msra.mxu0 0
    %2001 = vmatprep.subr.bf16.mxu0 0
    %2002 = vmatpush2.bf16.xpose.msra.mxu0 0
    %2003 = vmatprep.mubr.bf16.mxu0 0
    %2004 = vmatmul.mubr.bf16.gmra.mxu0 %v1966
    %v2005 = vpop.f32.mrf.mxu0
    %v2006 = vadd.f32 %v292, %v2005
    %v2007 = vpop.f32.mrf.mxu0
    %v2008 = vpop.f32.mrf.mxu0
    %v2009 = vpop.f32.mrf.mxu0
    %2010 = vdwg.mxu0
    %v2011 = vsel %vm232, %v1957, -inf
    %2012 = vmax.xlane.f32.xlu0 %v2011
    %v2013 = vpop.xlane.xlu0 %2012
    %v2014 = vsel %vm232, %v2006, -inf
    %2015 = vmax.xlane.f32.xlu0 %v2014
    %v2016 = vpop.xlane.xlu0 %2015
    %v2017 = vsub.f32 %v1957, %v2013
    %v2018 = vsub.f32 %v2006, %v2016
    %v2019 = vmul.f32 %v2017, 1.442695
    %v2020 = vpow.pop %v2019
    %v2021 = vmul.f32 %v2018, 1.442695
    %v2022 = vpow.pop %v2021
    %v2023 = vsel %vm232, %v2020, 0.0
    %2024 = vadd.xlane.f32.xlu0 %v2023
    %v2025 = vpop.xlane.xlu0 %2024
    %v2026 = vsel %vm232, %v2022, 0.0
    %2027 = vadd.xlane.f32.xlu0 %v2026
    %v2028 = vpop.xlane.xlu0 %2027
    %v2029 = vrcp.pop %v2025
    %v2030 = vrcp.pop %v2028
    %v2031 = vmul.f32 %v2020, %v2029
    %v2032 = vmul.f32 %v2022, %v2030
    %v2033 = vpack.c.bf16 %v2031, %v2031
    %v2034 = vpack.c.bf16 %v2032, %v2032
    %2036 = vrot.lane.b32.xlu0 %v1911, 64
    %v2037 = vpop.permute.xlu0 %2036
    %v2039 = vsel %vm232, %v2033, 0
    %v2042 = vsel %vm370, %v2037, 0
    %2044 = vmatprep.subr.bf16.mxu0 0
    %2045 = vmatpush1.bf16.msra.mxu0 0
    %2046 = vmatprep.subr.bf16.mxu0 0
    %2047 = vmatpush1.bf16.msra.mxu0 0
    %2048 = vmatprep.subr.bf16.mxu0 0
    %2049 = vmatpush1.bf16.msra.mxu0 0
    %2050 = vmatprep.subr.bf16.mxu0 0
    %2051 = vmatpush1.bf16.msra.mxu0 0
    %2052 = vmatprep.subr.bf16.mxu0 0
    %2053 = vmatpush1.bf16.msra.mxu0 0
    %2054 = vmatprep.subr.bf16.mxu0 0
    %2055 = vmatpush1.bf16.msra.mxu0 0
    %2056 = vmatprep.subr.bf16.mxu0 0
    %2057 = vmatpush1.bf16.msra.mxu0 0
    %2058 = vmatprep.subr.bf16.mxu0 0
    %2059 = vmatpush1.bf16.msra.mxu0 %v2042
    %2060 = vmatprep.subr.bf16.mxu0 0
    %2061 = vmatpush2.bf16.msra.mxu0 0
    %2062 = vmatprep.subr.bf16.mxu0 0
    %2063 = vmatpush2.bf16.msra.mxu0 0
    %2064 = vmatprep.subr.bf16.mxu0 0
    %2065 = vmatpush2.bf16.msra.mxu0 0
    %2066 = vmatprep.subr.bf16.mxu0 0
    %2067 = vmatpush2.bf16.msra.mxu0 0
    %2068 = vmatprep.subr.bf16.mxu0 0
    %2069 = vmatpush2.bf16.msra.mxu0 0
    %2070 = vmatprep.subr.bf16.mxu0 0
    %2071 = vmatpush2.bf16.msra.mxu0 0
    %2072 = vmatprep.subr.bf16.mxu0 0
    %2073 = vmatpush2.bf16.msra.mxu0 0
    %2074 = vmatprep.subr.bf16.mxu0 0
    %2075 = vmatpush2.bf16.msra.mxu0 0
    %2076 = vmatprep.mubr.bf16.mxu0 0
    %2077 = vmatmul.mubr.bf16.gmra.mxu0 %v2039
    %v2078 = vpop.f32.mrf.mxu0
    %v2079 = vadd.f32 0.0, %v2078
    %v2080 = vpop.f32.mrf.mxu0
    %v2081 = vpop.f32.mrf.mxu0
    %v2082 = vpop.f32.mrf.mxu0
    %2083 = vdwg.mxu0
    %2085 = vrot.lane.b32.xlu0 %v1912, 64
    %v2086 = vpop.permute.xlu0 %2085
    %v2088 = vsel %vm232, %v2034, 0
    %v2091 = vsel %vm370, %v2086, 0
    %2093 = vmatprep.subr.bf16.mxu0 0
    %2094 = vmatpush1.bf16.msra.mxu0 0
    %2095 = vmatprep.subr.bf16.mxu0 0
    %2096 = vmatpush1.bf16.msra.mxu0 0
    %2097 = vmatprep.subr.bf16.mxu0 0
    %2098 = vmatpush1.bf16.msra.mxu0 0
    %2099 = vmatprep.subr.bf16.mxu0 0
    %2100 = vmatpush1.bf16.msra.mxu0 0
    %2101 = vmatprep.subr.bf16.mxu0 0
    %2102 = vmatpush1.bf16.msra.mxu0 0
    %2103 = vmatprep.subr.bf16.mxu0 0
    %2104 = vmatpush1.bf16.msra.mxu0 0
    %2105 = vmatprep.subr.bf16.mxu0 0
    %2106 = vmatpush1.bf16.msra.mxu0 0
    %2107 = vmatprep.subr.bf16.mxu0 0
    %2108 = vmatpush1.bf16.msra.mxu0 %v2091
    %2109 = vmatprep.subr.bf16.mxu0 0
    %2110 = vmatpush2.bf16.msra.mxu0 0
    %2111 = vmatprep.subr.bf16.mxu0 0
    %2112 = vmatpush2.bf16.msra.mxu0 0
    %2113 = vmatprep.subr.bf16.mxu0 0
    %2114 = vmatpush2.bf16.msra.mxu0 0
    %2115 = vmatprep.subr.bf16.mxu0 0
    %2116 = vmatpush2.bf16.msra.mxu0 0
    %2117 = vmatprep.subr.bf16.mxu0 0
    %2118 = vmatpush2.bf16.msra.mxu0 0
    %2119 = vmatprep.subr.bf16.mxu0 0
    %2120 = vmatpush2.bf16.msra.mxu0 0
    %2121 = vmatprep.subr.bf16.mxu0 0
    %2122 = vmatpush2.bf16.msra.mxu0 0
    %2123 = vmatprep.subr.bf16.mxu0 0
    %2124 = vmatpush2.bf16.msra.mxu0 0
    %2125 = vmatprep.mubr.bf16.mxu0 0
    %2126 = vmatmul.mubr.bf16.gmra.mxu0 %v2088
    %v2127 = vpop.f32.mrf.mxu0
    %v2128 = vadd.f32 0.0, %v2127
    %v2129 = vpop.f32.mrf.mxu0
    %v2130 = vpop.f32.mrf.mxu0
    %v2131 = vpop.f32.mrf.mxu0
    %2132 = vdwg.mxu0
    %2134 = vrot.lane.b32.xlu0 %v1907, 120
    %v2135 = vpop.permute.xlu0 %2134
    %2136 = vrot.lane.b32.xlu0 %v1909, 88
    %v2137 = vpop.permute.xlu0 %2136
    %v2139 = vsel %vm232, %v2135, 0
    %v2142 = vsel %vm232, %v2137, 0
    %2144 = vmatprep.subr.bf16.mxu0 0
    %2145 = vmatpush1.bf16.xpose.msra.mxu0 0
    %2146 = vmatprep.subr.bf16.mxu0 0
    %2147 = vmatpush1.bf16.xpose.msra.mxu0 0
    %2148 = vmatprep.subr.bf16.mxu0 0
    %2149 = vmatpush1.bf16.xpose.msra.mxu0 0
    %2150 = vmatprep.subr.bf16.mxu0 0
    %2151 = vmatpush1.bf16.xpose.msra.mxu0 0
    %2152 = vmatprep.subr.bf16.mxu0 0
    %2153 = vmatpush1.bf16.xpose.msra.mxu0 0
    %2154 = vmatprep.subr.bf16.mxu0 0
    %2155 = vmatpush1.bf16.xpose.msra.mxu0 0
    %2156 = vmatprep.subr.bf16.mxu0 0
    %2157 = vmatpush1.bf16.xpose.msra.mxu0 0
    %2158 = vmatprep.subr.bf16.mxu0 0
    %2159 = vmatpush1.bf16.xpose.msra.mxu0 %v2142
    %2160 = vmatprep.subr.bf16.mxu0 0
    %2161 = vmatpush2.bf16.xpose.msra.mxu0 0
    %2162 = vmatprep.subr.bf16.mxu0 0
    %2163 = vmatpush2.bf16.xpose.msra.mxu0 0
    %2164 = vmatprep.subr.bf16.mxu0 0
    %2165 = vmatpush2.bf16.xpose.msra.mxu0 0
    %2166 = vmatprep.subr.bf16.mxu0 0
    %2167 = vmatpush2.bf16.xpose.msra.mxu0 0
    %2168 = vmatprep.subr.bf16.mxu0 0
    %2169 = vmatpush2.bf16.xpose.msra.mxu0 0
    %2170 = vmatprep.subr.bf16.mxu0 0
    %2171 = vmatpush2.bf16.xpose.msra.mxu0 0
    %2172 = vmatprep.subr.bf16.mxu0 0
    %2173 = vmatpush2.bf16.xpose.msra.mxu0 0
    %2174 = vmatprep.subr.bf16.mxu0 0
    %2175 = vmatpush2.bf16.xpose.msra.mxu0 0
    %2176 = vmatprep.mubr.bf16.mxu0 0
    %2177 = vmatmul.mubr.bf16.gmra.mxu0 %v2139
    %v2178 = vpop.f32.mrf.mxu0
    %v2179 = vadd.f32 %v230, %v2178
    %v2180 = vpop.f32.mrf.mxu0
    %v2181 = vpop.f32.mrf.mxu0
    %v2182 = vpop.f32.mrf.mxu0
    %2183 = vdwg.mxu0
    %2185 = vrot.lane.b32.xlu0 %v1908, 120
    %v2186 = vpop.permute.xlu0 %2185
    %2187 = vrot.lane.b32.xlu0 %v1910, 88
    %v2188 = vpop.permute.xlu0 %2187
    %v2190 = vsel %vm232, %v2186, 0
    %v2193 = vsel %vm232, %v2188, 0
    %2195 = vmatprep.subr.bf16.mxu0 0
    %2196 = vmatpush1.bf16.xpose.msra.mxu0 0
    %2197 = vmatprep.subr.bf16.mxu0 0
    %2198 = vmatpush1.bf16.xpose.msra.mxu0 0
    %2199 = vmatprep.subr.bf16.mxu0 0
    %2200 = vmatpush1.bf16.xpose.msra.mxu0 0
    %2201 = vmatprep.subr.bf16.mxu0 0
    %2202 = vmatpush1.bf16.xpose.msra.mxu0 0
    %2203 = vmatprep.subr.bf16.mxu0 0
    %2204 = vmatpush1.bf16.xpose.msra.mxu0 0
    %2205 = vmatprep.subr.bf16.mxu0 0
    %2206 = vmatpush1.bf16.xpose.msra.mxu0 0
    %2207 = vmatprep.subr.bf16.mxu0 0
    %2208 = vmatpush1.bf16.xpose.msra.mxu0 0
    %2209 = vmatprep.subr.bf16.mxu0 0
    %2210 = vmatpush1.bf16.xpose.msra.mxu0 %v2193
    %2211 = vmatprep.subr.bf16.mxu0 0
    %2212 = vmatpush2.bf16.xpose.msra.mxu0 0
    %2213 = vmatprep.subr.bf16.mxu0 0
    %2214 = vmatpush2.bf16.xpose.msra.mxu0 0
    %2215 = vmatprep.subr.bf16.mxu0 0
    %2216 = vmatpush2.bf16.xpose.msra.mxu0 0
    %2217 = vmatprep.subr.bf16.mxu0 0
    %2218 = vmatpush2.bf16.xpose.msra.mxu0 0
    %2219 = vmatprep.subr.bf16.mxu0 0
    %2220 = vmatpush2.bf16.xpose.msra.mxu0 0
    %2221 = vmatprep.subr.bf16.mxu0 0
    %2222 = vmatpush2.bf16.xpose.msra.mxu0 0
    %2223 = vmatprep.subr.bf16.mxu0 0
    %2224 = vmatpush2.bf16.xpose.msra.mxu0 0
    %2225 = vmatprep.subr.bf16.mxu0 0
    %2226 = vmatpush2.bf16.xpose.msra.mxu0 0
    %2227 = vmatprep.mubr.bf16.mxu0 0
    %2228 = vmatmul.mubr.bf16.gmra.mxu0 %v2190
    %v2229 = vpop.f32.mrf.mxu0
    %v2230 = vadd.f32 %v292, %v2229
    %v2231 = vpop.f32.mrf.mxu0
    %v2232 = vpop.f32.mrf.mxu0
    %v2233 = vpop.f32.mrf.mxu0
    %2234 = vdwg.mxu0
    %v2235 = vsel %vm232, %v2179, -inf
    %2236 = vmax.xlane.f32.xlu0 %v2235
    %v2237 = vpop.xlane.xlu0 %2236
    %v2238 = vsel %vm232, %v2230, -inf
    %2239 = vmax.xlane.f32.xlu0 %v2238
    %v2240 = vpop.xlane.xlu0 %2239
    %v2241 = vsub.f32 %v2179, %v2237
    %v2242 = vsub.f32 %v2230, %v2240
    %v2243 = vmul.f32 %v2241, 1.442695
    %v2244 = vpow.pop %v2243
    %v2245 = vmul.f32 %v2242, 1.442695
    %v2246 = vpow.pop %v2245
    %v2247 = vsel %vm232, %v2244, 0.0
    %2248 = vadd.xlane.f32.xlu0 %v2247
    %v2249 = vpop.xlane.xlu0 %2248
    %v2250 = vsel %vm232, %v2246, 0.0
    %2251 = vadd.xlane.f32.xlu0 %v2250
    %v2252 = vpop.xlane.xlu0 %2251
    %v2253 = vrcp.pop %v2249
    %v2254 = vrcp.pop %v2252
    %v2255 = vmul.f32 %v2244, %v2253
    %v2256 = vmul.f32 %v2246, %v2254
    %v2257 = vpack.c.bf16 %v2255, %v2255
    %v2258 = vpack.c.bf16 %v2256, %v2256
    %2259 = vrot.lane.b32.xlu0 %v1911, 56
    %v2260 = vpop.permute.xlu0 %2259
    %v2262 = vsel %vm232, %v2257, 0
    %v2265 = vsel %vm370, %v2260, 0
    %2267 = vmatprep.subr.bf16.mxu0 0
    %2268 = vmatpush1.bf16.msra.mxu0 0
    %2269 = vmatprep.subr.bf16.mxu0 0
    %2270 = vmatpush1.bf16.msra.mxu0 0
    %2271 = vmatprep.subr.bf16.mxu0 0
    %2272 = vmatpush1.bf16.msra.mxu0 0
    %2273 = vmatprep.subr.bf16.mxu0 0
    %2274 = vmatpush1.bf16.msra.mxu0 0
    %2275 = vmatprep.subr.bf16.mxu0 0
    %2276 = vmatpush1.bf16.msra.mxu0 0
    %2277 = vmatprep.subr.bf16.mxu0 0
    %2278 = vmatpush1.bf16.msra.mxu0 0
    %2279 = vmatprep.subr.bf16.mxu0 0
    %2280 = vmatpush1.bf16.msra.mxu0 0
    %2281 = vmatprep.subr.bf16.mxu0 0
    %2282 = vmatpush1.bf16.msra.mxu0 %v2265
    %2283 = vmatprep.subr.bf16.mxu0 0
    %2284 = vmatpush2.bf16.msra.mxu0 0
    %2285 = vmatprep.subr.bf16.mxu0 0
    %2286 = vmatpush2.bf16.msra.mxu0 0
    %2287 = vmatprep.subr.bf16.mxu0 0
    %2288 = vmatpush2.bf16.msra.mxu0 0
    %2289 = vmatprep.subr.bf16.mxu0 0
    %2290 = vmatpush2.bf16.msra.mxu0 0
    %2291 = vmatprep.subr.bf16.mxu0 0
    %2292 = vmatpush2.bf16.msra.mxu0 0
    %2293 = vmatprep.subr.bf16.mxu0 0
    %2294 = vmatpush2.bf16.msra.mxu0 0
    %2295 = vmatprep.subr.bf16.mxu0 0
    %2296 = vmatpush2.bf16.msra.mxu0 0
    %2297 = vmatprep.subr.bf16.mxu0 0
    %2298 = vmatpush2.bf16.msra.mxu0 0
    %2299 = vmatprep.mubr.bf16.mxu0 0
    %2300 = vmatmul.mubr.bf16.gmra.mxu0 %v2262
    %v2301 = vpop.f32.mrf.mxu0
    %v2302 = vadd.f32 0.0, %v2301
    %v2303 = vpop.f32.mrf.mxu0
    %v2304 = vpop.f32.mrf.mxu0
    %v2305 = vpop.f32.mrf.mxu0
    %2306 = vdwg.mxu0
    %2307 = vrot.lane.b32.xlu0 %v1912, 56
    %v2308 = vpop.permute.xlu0 %2307
    %v2310 = vsel %vm232, %v2258, 0
    %v2313 = vsel %vm370, %v2308, 0
    %2315 = vmatprep.subr.bf16.mxu0 0
    %2316 = vmatpush1.bf16.msra.mxu0 0
    %2317 = vmatprep.subr.bf16.mxu0 0
    %2318 = vmatpush1.bf16.msra.mxu0 0
    %2319 = vmatprep.subr.bf16.mxu0 0
    %2320 = vmatpush1.bf16.msra.mxu0 0
    %2321 = vmatprep.subr.bf16.mxu0 0
    %2322 = vmatpush1.bf16.msra.mxu0 0
    %2323 = vmatprep.subr.bf16.mxu0 0
    %2324 = vmatpush1.bf16.msra.mxu0 0
    %2325 = vmatprep.subr.bf16.mxu0 0
    %2326 = vmatpush1.bf16.msra.mxu0 0
    %2327 = vmatprep.subr.bf16.mxu0 0
    %2328 = vmatpush1.bf16.msra.mxu0 0
    %2329 = vmatprep.subr.bf16.mxu0 0
    %2330 = vmatpush1.bf16.msra.mxu0 %v2313
    %2331 = vmatprep.subr.bf16.mxu0 0
    %2332 = vmatpush2.bf16.msra.mxu0 0
    %2333 = vmatprep.subr.bf16.mxu0 0
    %2334 = vmatpush2.bf16.msra.mxu0 0
    %2335 = vmatprep.subr.bf16.mxu0 0
    %2336 = vmatpush2.bf16.msra.mxu0 0
    %2337 = vmatprep.subr.bf16.mxu0 0
    %2338 = vmatpush2.bf16.msra.mxu0 0
    %2339 = vmatprep.subr.bf16.mxu0 0
    %2340 = vmatpush2.bf16.msra.mxu0 0
    %2341 = vmatprep.subr.bf16.mxu0 0
    %2342 = vmatpush2.bf16.msra.mxu0 0
    %2343 = vmatprep.subr.bf16.mxu0 0
    %2344 = vmatpush2.bf16.msra.mxu0 0
    %2345 = vmatprep.subr.bf16.mxu0 0
    %2346 = vmatpush2.bf16.msra.mxu0 0
    %2347 = vmatprep.mubr.bf16.mxu0 0
    %2348 = vmatmul.mubr.bf16.gmra.mxu0 %v2310
    %v2349 = vpop.f32.mrf.mxu0
    %v2350 = vadd.f32 0.0, %v2349
    %v2351 = vpop.f32.mrf.mxu0
    %v2352 = vpop.f32.mrf.mxu0
    %v2353 = vpop.f32.mrf.mxu0
    %2354 = vdwg.mxu0
    %2355 = vrot.lane.b32.xlu0 %v1907, 112
    %v2356 = vpop.permute.xlu0 %2355
    %2357 = vrot.lane.b32.xlu0 %v1909, 80
    %v2358 = vpop.permute.xlu0 %2357
    %v2360 = vsel %vm232, %v2356, 0
    %v2363 = vsel %vm232, %v2358, 0
    %2365 = vmatprep.subr.bf16.mxu0 0
    %2366 = vmatpush1.bf16.xpose.msra.mxu0 0
    %2367 = vmatprep.subr.bf16.mxu0 0
    %2368 = vmatpush1.bf16.xpose.msra.mxu0 0
    %2369 = vmatprep.subr.bf16.mxu0 0
    %2370 = vmatpush1.bf16.xpose.msra.mxu0 0
    %2371 = vmatprep.subr.bf16.mxu0 0
    %2372 = vmatpush1.bf16.xpose.msra.mxu0 0
    %2373 = vmatprep.subr.bf16.mxu0 0
    %2374 = vmatpush1.bf16.xpose.msra.mxu0 0
    %2375 = vmatprep.subr.bf16.mxu0 0
    %2376 = vmatpush1.bf16.xpose.msra.mxu0 0
    %2377 = vmatprep.subr.bf16.mxu0 0
    %2378 = vmatpush1.bf16.xpose.msra.mxu0 0
    %2379 = vmatprep.subr.bf16.mxu0 0
    %2380 = vmatpush1.bf16.xpose.msra.mxu0 %v2363
    %2381 = vmatprep.subr.bf16.mxu0 0
    %2382 = vmatpush2.bf16.xpose.msra.mxu0 0
    %2383 = vmatprep.subr.bf16.mxu0 0
    %2384 = vmatpush2.bf16.xpose.msra.mxu0 0
    %2385 = vmatprep.subr.bf16.mxu0 0
    %2386 = vmatpush2.bf16.xpose.msra.mxu0 0
    %2387 = vmatprep.subr.bf16.mxu0 0
    %2388 = vmatpush2.bf16.xpose.msra.mxu0 0
    %2389 = vmatprep.subr.bf16.mxu0 0
    %2390 = vmatpush2.bf16.xpose.msra.mxu0 0
    %2391 = vmatprep.subr.bf16.mxu0 0
    %2392 = vmatpush2.bf16.xpose.msra.mxu0 0
    %2393 = vmatprep.subr.bf16.mxu0 0
    %2394 = vmatpush2.bf16.xpose.msra.mxu0 0
    %2395 = vmatprep.subr.bf16.mxu0 0
    %2396 = vmatpush2.bf16.xpose.msra.mxu0 0
    %2397 = vmatprep.mubr.bf16.mxu0 0
    %2398 = vmatmul.mubr.bf16.gmra.mxu0 %v2360
    %v2399 = vpop.f32.mrf.mxu0
    %v2400 = vadd.f32 %v230, %v2399
    %v2401 = vpop.f32.mrf.mxu0
    %v2402 = vpop.f32.mrf.mxu0
    %v2403 = vpop.f32.mrf.mxu0
    %2404 = vdwg.mxu0
    %2405 = vrot.lane.b32.xlu0 %v1908, 112
    %v2406 = vpop.permute.xlu0 %2405
    %2407 = vrot.lane.b32.xlu0 %v1910, 80
    %v2408 = vpop.permute.xlu0 %2407
    %v2410 = vsel %vm232, %v2406, 0
    %v2413 = vsel %vm232, %v2408, 0
    %2415 = vmatprep.subr.bf16.mxu0 0
    %2416 = vmatpush1.bf16.xpose.msra.mxu0 0
    %2417 = vmatprep.subr.bf16.mxu0 0
    %2418 = vmatpush1.bf16.xpose.msra.mxu0 0
    %2419 = vmatprep.subr.bf16.mxu0 0
    %2420 = vmatpush1.bf16.xpose.msra.mxu0 0
    %2421 = vmatprep.subr.bf16.mxu0 0
    %2422 = vmatpush1.bf16.xpose.msra.mxu0 0
    %2423 = vmatprep.subr.bf16.mxu0 0
    %2424 = vmatpush1.bf16.xpose.msra.mxu0 0
    %2425 = vmatprep.subr.bf16.mxu0 0
    %2426 = vmatpush1.bf16.xpose.msra.mxu0 0
    %2427 = vmatprep.subr.bf16.mxu0 0
    %2428 = vmatpush1.bf16.xpose.msra.mxu0 0
    %2429 = vmatprep.subr.bf16.mxu0 0
    %2430 = vmatpush1.bf16.xpose.msra.mxu0 %v2413
    %2431 = vmatprep.subr.bf16.mxu0 0
    %2432 = vmatpush2.bf16.xpose.msra.mxu0 0
    %2433 = vmatprep.subr.bf16.mxu0 0
    %2434 = vmatpush2.bf16.xpose.msra.mxu0 0
    %2435 = vmatprep.subr.bf16.mxu0 0
    %2436 = vmatpush2.bf16.xpose.msra.mxu0 0
    %2437 = vmatprep.subr.bf16.mxu0 0
    %2438 = vmatpush2.bf16.xpose.msra.mxu0 0
    %2439 = vmatprep.subr.bf16.mxu0 0
    %2440 = vmatpush2.bf16.xpose.msra.mxu0 0
    %2441 = vmatprep.subr.bf16.mxu0 0
    %2442 = vmatpush2.bf16.xpose.msra.mxu0 0
    %2443 = vmatprep.subr.bf16.mxu0 0
    %2444 = vmatpush2.bf16.xpose.msra.mxu0 0
    %2445 = vmatprep.subr.bf16.mxu0 0
    %2446 = vmatpush2.bf16.xpose.msra.mxu0 0
    %2447 = vmatprep.mubr.bf16.mxu0 0
    %2448 = vmatmul.mubr.bf16.gmra.mxu0 %v2410
    %v2449 = vpop.f32.mrf.mxu0
    %v2450 = vadd.f32 %v292, %v2449
    %v2451 = vpop.f32.mrf.mxu0
    %v2452 = vpop.f32.mrf.mxu0
    %v2453 = vpop.f32.mrf.mxu0
    %2454 = vdwg.mxu0
    %v2455 = vsel %vm232, %v2400, -inf
    %2456 = vmax.xlane.f32.xlu0 %v2455
    %v2457 = vpop.xlane.xlu0 %2456
    %v2458 = vsel %vm232, %v2450, -inf
    %2459 = vmax.xlane.f32.xlu0 %v2458
    %v2460 = vpop.xlane.xlu0 %2459
    %v2461 = vsub.f32 %v2400, %v2457
    %v2462 = vsub.f32 %v2450, %v2460
    %v2463 = vmul.f32 %v2461, 1.442695
    %v2464 = vpow.pop %v2463
    %v2465 = vmul.f32 %v2462, 1.442695
    %v2466 = vpow.pop %v2465
    %v2467 = vsel %vm232, %v2464, 0.0
    %2468 = vadd.xlane.f32.xlu0 %v2467
    %v2469 = vpop.xlane.xlu0 %2468
    %v2470 = vsel %vm232, %v2466, 0.0
    %2471 = vadd.xlane.f32.xlu0 %v2470
    %v2472 = vpop.xlane.xlu0 %2471
    %v2473 = vrcp.pop %v2469
    %v2474 = vrcp.pop %v2472
    %v2475 = vmul.f32 %v2464, %v2473
    %v2476 = vmul.f32 %v2466, %v2474
    %v2477 = vpack.c.bf16 %v2475, %v2475
    %v2478 = vpack.c.bf16 %v2476, %v2476
    %2479 = vrot.lane.b32.xlu0 %v1911, 48
    %v2480 = vpop.permute.xlu0 %2479
    %v2482 = vsel %vm232, %v2477, 0
    %v2485 = vsel %vm370, %v2480, 0
    %2487 = vmatprep.subr.bf16.mxu0 0
    %2488 = vmatpush1.bf16.msra.mxu0 0
    %2489 = vmatprep.subr.bf16.mxu0 0
    %2490 = vmatpush1.bf16.msra.mxu0 0
    %2491 = vmatprep.subr.bf16.mxu0 0
    %2492 = vmatpush1.bf16.msra.mxu0 0
    %2493 = vmatprep.subr.bf16.mxu0 0
    %2494 = vmatpush1.bf16.msra.mxu0 0
    %2495 = vmatprep.subr.bf16.mxu0 0
    %2496 = vmatpush1.bf16.msra.mxu0 0
    %2497 = vmatprep.subr.bf16.mxu0 0
    %2498 = vmatpush1.bf16.msra.mxu0 0
    %2499 = vmatprep.subr.bf16.mxu0 0
    %2500 = vmatpush1.bf16.msra.mxu0 0
    %2501 = vmatprep.subr.bf16.mxu0 0
    %2502 = vmatpush1.bf16.msra.mxu0 %v2485
    %2503 = vmatprep.subr.bf16.mxu0 0
    %2504 = vmatpush2.bf16.msra.mxu0 0
    %2505 = vmatprep.subr.bf16.mxu0 0
    %2506 = vmatpush2.bf16.msra.mxu0 0
    %2507 = vmatprep.subr.bf16.mxu0 0
    %2508 = vmatpush2.bf16.msra.mxu0 0
    %2509 = vmatprep.subr.bf16.mxu0 0
    %2510 = vmatpush2.bf16.msra.mxu0 0
    %2511 = vmatprep.subr.bf16.mxu0 0
    %2512 = vmatpush2.bf16.msra.mxu0 0
    %2513 = vmatprep.subr.bf16.mxu0 0
    %2514 = vmatpush2.bf16.msra.mxu0 0
    %2515 = vmatprep.subr.bf16.mxu0 0
    %2516 = vmatpush2.bf16.msra.mxu0 0
    %2517 = vmatprep.subr.bf16.mxu0 0
    %2518 = vmatpush2.bf16.msra.mxu0 0
    %2519 = vmatprep.mubr.bf16.mxu0 0
    %2520 = vmatmul.mubr.bf16.gmra.mxu0 %v2482
    %v2521 = vpop.f32.mrf.mxu0
    %v2522 = vadd.f32 0.0, %v2521
    %v2523 = vpop.f32.mrf.mxu0
    %v2524 = vpop.f32.mrf.mxu0
    %v2525 = vpop.f32.mrf.mxu0
    %2526 = vdwg.mxu0
    %2527 = vrot.lane.b32.xlu0 %v1912, 48
    %v2528 = vpop.permute.xlu0 %2527
    %v2530 = vsel %vm232, %v2478, 0
    %v2533 = vsel %vm370, %v2528, 0
    %2535 = vmatprep.subr.bf16.mxu0 0
    %2536 = vmatpush1.bf16.msra.mxu0 0
    %2537 = vmatprep.subr.bf16.mxu0 0
    %2538 = vmatpush1.bf16.msra.mxu0 0
    %2539 = vmatprep.subr.bf16.mxu0 0
    %2540 = vmatpush1.bf16.msra.mxu0 0
    %2541 = vmatprep.subr.bf16.mxu0 0
    %2542 = vmatpush1.bf16.msra.mxu0 0
    %2543 = vmatprep.subr.bf16.mxu0 0
    %2544 = vmatpush1.bf16.msra.mxu0 0
    %2545 = vmatprep.subr.bf16.mxu0 0
    %2546 = vmatpush1.bf16.msra.mxu0 0
    %2547 = vmatprep.subr.bf16.mxu0 0
    %2548 = vmatpush1.bf16.msra.mxu0 0
    %2549 = vmatprep.subr.bf16.mxu0 0
    %2550 = vmatpush1.bf16.msra.mxu0 %v2533
    %2551 = vmatprep.subr.bf16.mxu0 0
    %2552 = vmatpush2.bf16.msra.mxu0 0
    %2553 = vmatprep.subr.bf16.mxu0 0
    %2554 = vmatpush2.bf16.msra.mxu0 0
    %2555 = vmatprep.subr.bf16.mxu0 0
    %2556 = vmatpush2.bf16.msra.mxu0 0
    %2557 = vmatprep.subr.bf16.mxu0 0
    %2558 = vmatpush2.bf16.msra.mxu0 0
    %2559 = vmatprep.subr.bf16.mxu0 0
    %2560 = vmatpush2.bf16.msra.mxu0 0
    %2561 = vmatprep.subr.bf16.mxu0 0
    %2562 = vmatpush2.bf16.msra.mxu0 0
    %2563 = vmatprep.subr.bf16.mxu0 0
    %2564 = vmatpush2.bf16.msra.mxu0 0
    %2565 = vmatprep.subr.bf16.mxu0 0
    %2566 = vmatpush2.bf16.msra.mxu0 0
    %2567 = vmatprep.mubr.bf16.mxu0 0
    %2568 = vmatmul.mubr.bf16.gmra.mxu0 %v2530
    %v2569 = vpop.f32.mrf.mxu0
    %v2570 = vadd.f32 0.0, %v2569
    %v2571 = vpop.f32.mrf.mxu0
    %v2572 = vpop.f32.mrf.mxu0
    %v2573 = vpop.f32.mrf.mxu0
    %2574 = vdwg.mxu0
    %2575 = vrot.lane.b32.xlu0 %v1907, 104
    %v2576 = vpop.permute.xlu0 %2575
    %2577 = vrot.lane.b32.xlu0 %v1909, 72
    %v2578 = vpop.permute.xlu0 %2577
    %v2580 = vsel %vm232, %v2576, 0
    %v2583 = vsel %vm232, %v2578, 0
    %2585 = vmatprep.subr.bf16.mxu0 0
    %2586 = vmatpush1.bf16.xpose.msra.mxu0 0
    %2587 = vmatprep.subr.bf16.mxu0 0
    %2588 = vmatpush1.bf16.xpose.msra.mxu0 0
    %2589 = vmatprep.subr.bf16.mxu0 0
    %2590 = vmatpush1.bf16.xpose.msra.mxu0 0
    %2591 = vmatprep.subr.bf16.mxu0 0
    %2592 = vmatpush1.bf16.xpose.msra.mxu0 0
    %2593 = vmatprep.subr.bf16.mxu0 0
    %2594 = vmatpush1.bf16.xpose.msra.mxu0 0
    %2595 = vmatprep.subr.bf16.mxu0 0
    %2596 = vmatpush1.bf16.xpose.msra.mxu0 0
    %2597 = vmatprep.subr.bf16.mxu0 0
    %2598 = vmatpush1.bf16.xpose.msra.mxu0 0
    %2599 = vmatprep.subr.bf16.mxu0 0
    %2600 = vmatpush1.bf16.xpose.msra.mxu0 %v2583
    %2601 = vmatprep.subr.bf16.mxu0 0
    %2602 = vmatpush2.bf16.xpose.msra.mxu0 0
    %2603 = vmatprep.subr.bf16.mxu0 0
    %2604 = vmatpush2.bf16.xpose.msra.mxu0 0
    %2605 = vmatprep.subr.bf16.mxu0 0
    %2606 = vmatpush2.bf16.xpose.msra.mxu0 0
    %2607 = vmatprep.subr.bf16.mxu0 0
    %2608 = vmatpush2.bf16.xpose.msra.mxu0 0
    %2609 = vmatprep.subr.bf16.mxu0 0
    %2610 = vmatpush2.bf16.xpose.msra.mxu0 0
    %2611 = vmatprep.subr.bf16.mxu0 0
    %2612 = vmatpush2.bf16.xpose.msra.mxu0 0
    %2613 = vmatprep.subr.bf16.mxu0 0
    %2614 = vmatpush2.bf16.xpose.msra.mxu0 0
    %2615 = vmatprep.subr.bf16.mxu0 0
    %2616 = vmatpush2.bf16.xpose.msra.mxu0 0
    %2617 = vmatprep.mubr.bf16.mxu0 0
    %2618 = vmatmul.mubr.bf16.gmra.mxu0 %v2580
    %v2619 = vpop.f32.mrf.mxu0
    %v2620 = vadd.f32 %v230, %v2619
    %v2621 = vpop.f32.mrf.mxu0
    %v2622 = vpop.f32.mrf.mxu0
    %v2623 = vpop.f32.mrf.mxu0
    %2624 = vdwg.mxu0
    %2625 = vrot.lane.b32.xlu0 %v1908, 104
    %v2626 = vpop.permute.xlu0 %2625
    %2627 = vrot.lane.b32.xlu0 %v1910, 72
    %v2628 = vpop.permute.xlu0 %2627
    %v2630 = vsel %vm232, %v2626, 0
    %v2633 = vsel %vm232, %v2628, 0
    %2635 = vmatprep.subr.bf16.mxu0 0
    %2636 = vmatpush1.bf16.xpose.msra.mxu0 0
    %2637 = vmatprep.subr.bf16.mxu0 0
    %2638 = vmatpush1.bf16.xpose.msra.mxu0 0
    %2639 = vmatprep.subr.bf16.mxu0 0
    %2640 = vmatpush1.bf16.xpose.msra.mxu0 0
    %2641 = vmatprep.subr.bf16.mxu0 0
    %2642 = vmatpush1.bf16.xpose.msra.mxu0 0
    %2643 = vmatprep.subr.bf16.mxu0 0
    %2644 = vmatpush1.bf16.xpose.msra.mxu0 0
    %2645 = vmatprep.subr.bf16.mxu0 0
    %2646 = vmatpush1.bf16.xpose.msra.mxu0 0
    %2647 = vmatprep.subr.bf16.mxu0 0
    %2648 = vmatpush1.bf16.xpose.msra.mxu0 0
    %2649 = vmatprep.subr.bf16.mxu0 0
    %2650 = vmatpush1.bf16.xpose.msra.mxu0 %v2633
    %2651 = vmatprep.subr.bf16.mxu0 0
    %2652 = vmatpush2.bf16.xpose.msra.mxu0 0
    %2653 = vmatprep.subr.bf16.mxu0 0
    %2654 = vmatpush2.bf16.xpose.msra.mxu0 0
    %2655 = vmatprep.subr.bf16.mxu0 0
    %2656 = vmatpush2.bf16.xpose.msra.mxu0 0
    %2657 = vmatprep.subr.bf16.mxu0 0
    %2658 = vmatpush2.bf16.xpose.msra.mxu0 0
    %2659 = vmatprep.subr.bf16.mxu0 0
    %2660 = vmatpush2.bf16.xpose.msra.mxu0 0
    %2661 = vmatprep.subr.bf16.mxu0 0
    %2662 = vmatpush2.bf16.xpose.msra.mxu0 0
    %2663 = vmatprep.subr.bf16.mxu0 0
    %2664 = vmatpush2.bf16.xpose.msra.mxu0 0
    %2665 = vmatprep.subr.bf16.mxu0 0
    %2666 = vmatpush2.bf16.xpose.msra.mxu0 0
    %2667 = vmatprep.mubr.bf16.mxu0 0
    %2668 = vmatmul.mubr.bf16.gmra.mxu0 %v2630
    %v2669 = vpop.f32.mrf.mxu0
    %v2670 = vadd.f32 %v292, %v2669
    %v2671 = vpop.f32.mrf.mxu0
    %v2672 = vpop.f32.mrf.mxu0
    %v2673 = vpop.f32.mrf.mxu0
    %2674 = vdwg.mxu0
    %v2675 = vsel %vm232, %v2620, -inf
    %2676 = vmax.xlane.f32.xlu0 %v2675
    %v2677 = vpop.xlane.xlu0 %2676
    %v2678 = vsel %vm232, %v2670, -inf
    %2679 = vmax.xlane.f32.xlu0 %v2678
    %v2680 = vpop.xlane.xlu0 %2679
    %v2681 = vsub.f32 %v2620, %v2677
    %v2682 = vsub.f32 %v2670, %v2680
    %v2683 = vmul.f32 %v2681, 1.442695
    %v2684 = vpow.pop %v2683
    %v2685 = vmul.f32 %v2682, 1.442695
    %v2686 = vpow.pop %v2685
    %v2687 = vsel %vm232, %v2684, 0.0
    %2688 = vadd.xlane.f32.xlu0 %v2687
    %v2689 = vpop.xlane.xlu0 %2688
    %v2690 = vsel %vm232, %v2686, 0.0
    %2691 = vadd.xlane.f32.xlu0 %v2690
    %v2692 = vpop.xlane.xlu0 %2691
    %v2693 = vrcp.pop %v2689
    %v2694 = vrcp.pop %v2692
    %v2695 = vmul.f32 %v2684, %v2693
    %v2696 = vmul.f32 %v2686, %v2694
    %v2697 = vpack.c.bf16 %v2695, %v2695
    %v2698 = vpack.c.bf16 %v2696, %v2696
    %2699 = vrot.lane.b32.xlu0 %v1911, 40
    %v2700 = vpop.permute.xlu0 %2699
    %v2702 = vsel %vm232, %v2697, 0
    %v2705 = vsel %vm370, %v2700, 0
    %2707 = vmatprep.subr.bf16.mxu0 0
    %2708 = vmatpush1.bf16.msra.mxu0 0
    %2709 = vmatprep.subr.bf16.mxu0 0
    %2710 = vmatpush1.bf16.msra.mxu0 0
    %2711 = vmatprep.subr.bf16.mxu0 0
    %2712 = vmatpush1.bf16.msra.mxu0 0
    %2713 = vmatprep.subr.bf16.mxu0 0
    %2714 = vmatpush1.bf16.msra.mxu0 0
    %2715 = vmatprep.subr.bf16.mxu0 0
    %2716 = vmatpush1.bf16.msra.mxu0 0
    %2717 = vmatprep.subr.bf16.mxu0 0
    %2718 = vmatpush1.bf16.msra.mxu0 0
    %2719 = vmatprep.subr.bf16.mxu0 0
    %2720 = vmatpush1.bf16.msra.mxu0 0
    %2721 = vmatprep.subr.bf16.mxu0 0
    %2722 = vmatpush1.bf16.msra.mxu0 %v2705
    %2723 = vmatprep.subr.bf16.mxu0 0
    %2724 = vmatpush2.bf16.msra.mxu0 0
    %2725 = vmatprep.subr.bf16.mxu0 0
    %2726 = vmatpush2.bf16.msra.mxu0 0
    %2727 = vmatprep.subr.bf16.mxu0 0
    %2728 = vmatpush2.bf16.msra.mxu0 0
    %2729 = vmatprep.subr.bf16.mxu0 0
    %2730 = vmatpush2.bf16.msra.mxu0 0
    %2731 = vmatprep.subr.bf16.mxu0 0
    %2732 = vmatpush2.bf16.msra.mxu0 0
    %2733 = vmatprep.subr.bf16.mxu0 0
    %2734 = vmatpush2.bf16.msra.mxu0 0
    %2735 = vmatprep.subr.bf16.mxu0 0
    %2736 = vmatpush2.bf16.msra.mxu0 0
    %2737 = vmatprep.subr.bf16.mxu0 0
    %2738 = vmatpush2.bf16.msra.mxu0 0
    %2739 = vmatprep.mubr.bf16.mxu0 0
    %2740 = vmatmul.mubr.bf16.gmra.mxu0 %v2702
    %v2741 = vpop.f32.mrf.mxu0
    %v2742 = vadd.f32 0.0, %v2741
    %v2743 = vpop.f32.mrf.mxu0
    %v2744 = vpop.f32.mrf.mxu0
    %v2745 = vpop.f32.mrf.mxu0
    %2746 = vdwg.mxu0
    %2747 = vrot.lane.b32.xlu0 %v1912, 40
    %v2748 = vpop.permute.xlu0 %2747
    %v2750 = vsel %vm232, %v2698, 0
    %v2753 = vsel %vm370, %v2748, 0
    %2755 = vmatprep.subr.bf16.mxu0 0
    %2756 = vmatpush1.bf16.msra.mxu0 0
    %2757 = vmatprep.subr.bf16.mxu0 0
    %2758 = vmatpush1.bf16.msra.mxu0 0
    %2759 = vmatprep.subr.bf16.mxu0 0
    %2760 = vmatpush1.bf16.msra.mxu0 0
    %2761 = vmatprep.subr.bf16.mxu0 0
    %2762 = vmatpush1.bf16.msra.mxu0 0
    %2763 = vmatprep.subr.bf16.mxu0 0
    %2764 = vmatpush1.bf16.msra.mxu0 0
    %2765 = vmatprep.subr.bf16.mxu0 0
    %2766 = vmatpush1.bf16.msra.mxu0 0
    %2767 = vmatprep.subr.bf16.mxu0 0
    %2768 = vmatpush1.bf16.msra.mxu0 0
    %2769 = vmatprep.subr.bf16.mxu0 0
    %2770 = vmatpush1.bf16.msra.mxu0 %v2753
    %2771 = vmatprep.subr.bf16.mxu0 0
    %2772 = vmatpush2.bf16.msra.mxu0 0
    %2773 = vmatprep.subr.bf16.mxu0 0
    %2774 = vmatpush2.bf16.msra.mxu0 0
    %2775 = vmatprep.subr.bf16.mxu0 0
    %2776 = vmatpush2.bf16.msra.mxu0 0
    %2777 = vmatprep.subr.bf16.mxu0 0
    %2778 = vmatpush2.bf16.msra.mxu0 0
    %2779 = vmatprep.subr.bf16.mxu0 0
    %2780 = vmatpush2.bf16.msra.mxu0 0
    %2781 = vmatprep.subr.bf16.mxu0 0
    %2782 = vmatpush2.bf16.msra.mxu0 0
    %2783 = vmatprep.subr.bf16.mxu0 0
    %2784 = vmatpush2.bf16.msra.mxu0 0
    %2785 = vmatprep.subr.bf16.mxu0 0
    %2786 = vmatpush2.bf16.msra.mxu0 0
    %2787 = vmatprep.mubr.bf16.mxu0 0
    %2788 = vmatmul.mubr.bf16.gmra.mxu0 %v2750
    %v2789 = vpop.f32.mrf.mxu0
    %v2790 = vadd.f32 0.0, %v2789
    %v2791 = vpop.f32.mrf.mxu0
    %v2792 = vpop.f32.mrf.mxu0
    %v2793 = vpop.f32.mrf.mxu0
    %2794 = vdwg.mxu0
    %2797 = vrot.lane.b32.xlu0 %v2302, 8
    %v2798 = vpop.permute.xlu0 %2797
    %2799 = vrot.lane.b32.xlu0 %v2350, 8
    %v2800 = vpop.permute.xlu0 %2799
    %2805 = vrot.lane.b32.xlu0 %v2522, 16
    %v2806 = vpop.permute.xlu0 %2805
    %2807 = vrot.lane.b32.xlu0 %v2570, 16
    %v2808 = vpop.permute.xlu0 %2807
    %2813 = vrot.lane.b32.xlu0 %v2742, 24
    %v2814 = vpop.permute.xlu0 %2813
    %2815 = vrot.lane.b32.xlu0 %v2790, 24
    %v2816 = vpop.permute.xlu0 %2815
    %v2819 = vsel %vm232, %v2079, %v2798
    %v2820 = vsel %vm232, %v2128, %v2800
    %v2821 = vsel %vm42, %v2819, %v2806
    %v2822 = vsel %vm42, %v2820, %v2808
    %v2823 = vsel %vm1153, %v2821, %v2814
    %v2824 = vsel %vm1153, %v2822, %v2816
    %v2825 = vpack.c.bf16 %v2824, %v2823
    %s2826 = scalar_lea.vmem %s4, 16
    %v2827 = vld [vmem:[%s2826] sm:$0xf]
    %v2828 = vld [vmem:[%s2826 + $0x4] sm:$0xf]
    %v2829 = vld [vmem:[%s2826 + $0x8] sm:$0xf]
    %v2830 = vld [vmem:[%s2826 + $0xc] sm:$0xf]
    %v2831 = vlaneseq
    %v2832 = vshrl.u32 %v2831, 7
    %v2833 = vsub.s32 3, %v2832
    %v2834 = vrot.slane %v1817, %v2833
    %v2839 = vunpack.c.l.b16 %v2827
    %v2840 = vunpack.c.l.b16 %v2828
    %v2841 = vunpack.c.l.b16 %v2829
    %v2842 = vunpack.c.l.b16 %v2830
    %v2843 = vpack.c.b16 %v2840, %v2839
    %v2844 = vpack.c.b16 %v2842, %v2841
    %v2848 = vsel %vm132, %v2825, 0
    %2850 = vmatprep.subr.bf16.mxu0 0
    %2851 = vmatpush1.bf16.msra.mxu0 0
    %2852 = vmatprep.subr.bf16.mxu0 0
    %2853 = vmatpush1.bf16.msra.mxu0 0
    %2854 = vmatprep.subr.bf16.mxu0 0
    %2855 = vmatpush1.bf16.msra.mxu0 0
    %2856 = vmatprep.subr.bf16.mxu0 0
    %2857 = vmatpush1.bf16.msra.mxu0 0
    %2858 = vmatprep.subr.bf16.mxu0 0
    %2859 = vmatpush1.bf16.msra.mxu0 0
    %2860 = vmatprep.subr.bf16.mxu0 0
    %2861 = vmatpush1.bf16.msra.mxu0 0
    %2862 = vmatprep.subr.bf16.mxu0 0
    %2863 = vmatpush1.bf16.msra.mxu0 %v2844
    %2864 = vmatprep.subr.bf16.mxu0 0
    %2865 = vmatpush1.bf16.msra.mxu0 %v2843
    %2866 = vmatprep.subr.bf16.mxu0 0
    %2867 = vmatpush2.bf16.msra.mxu0 0
    %2868 = vmatprep.subr.bf16.mxu0 0
    %2869 = vmatpush2.bf16.msra.mxu0 0
    %2870 = vmatprep.subr.bf16.mxu0 0
    %2871 = vmatpush2.bf16.msra.mxu0 0
    %2872 = vmatprep.subr.bf16.mxu0 0
    %2873 = vmatpush2.bf16.msra.mxu0 0
    %2874 = vmatprep.subr.bf16.mxu0 0
    %2875 = vmatpush2.bf16.msra.mxu0 0
    %2876 = vmatprep.subr.bf16.mxu0 0
    %2877 = vmatpush2.bf16.msra.mxu0 0
    %2878 = vmatprep.subr.bf16.mxu0 0
    %2879 = vmatpush2.bf16.msra.mxu0 0
    %2880 = vmatprep.subr.bf16.mxu0 0
    %2881 = vmatpush2.bf16.msra.mxu0 0
    %2882 = vmatprep.mubr.bf16.mxu0 0
    %2883 = vmatmul.mubr.bf16.gmra.mxu0 %v2848
    %v2884 = vpop.f32.mrf.mxu0
    %v2885 = vadd.f32 %v2834, %v2884
    %v2886 = vpop.f32.mrf.mxu0
    %v2887 = vpop.f32.mrf.mxu0
    %v2888 = vadd.f32 %v2834, %v2887
    %v2889 = vpop.f32.mrf.mxu0
    %2890 = vdwg.mxu0
    %v2891 = vadd.f32 %v2885, %v1814
    %v2892 = vadd.f32 %v2888, %v1815
    %v2893 = vsel %vm132, %v2891, 0.0
    %2894 = vadd.xlane.f32.xlu0 %v2893
    %v2895 = vpop.xlane.xlu0 %2894
    %v2896 = vsel %vm132, %v2892, 0.0
    %2897 = vadd.xlane.f32.xlu0 %v2896
    %v2898 = vpop.xlane.xlu0 %2897
    %v2899 = vmul.f32 %v2895, %v1229
    %v2900 = vmul.f32 %v2898, %v1229
    %v2901 = vsub.f32 %v2891, %v2899
    %v2902 = vsub.f32 %v2892, %v2900
    %v2903 = vmul.f32 %v2901, %v2901
    %v2904 = vmul.f32 %v2902, %v2902
    %v2905 = vsel %vm132, %v2903, 0.0
    %2906 = vadd.xlane.f32.xlu0 %v2905
    %v2907 = vpop.xlane.xlu0 %2906
    %v2908 = vsel %vm132, %v2904, 0.0
    %2909 = vadd.xlane.f32.xlu0 %v2908
    %v2910 = vpop.xlane.xlu0 %2909
    %v2911 = vmul.f32 %v2907, %v1229
    %v2912 = vmul.f32 %v2910, %v1229
    %v2913 = vadd.f32 %v2911, 1e-05
    %v2914 = vadd.f32 %v2912, 1e-05
    %v2915 = vrsqrt.pop %v2913
    %v2916 = vrsqrt.pop %v2914
    %v2917 = vmul.f32 %v2901, %v2915
    %v2918 = vmul.f32 %v2902, %v2916
    %v2919 = vlaneseq
    %v2920 = vshrl.u32 %v2919, 7
    %v2921 = vsub.s32 5, %v2920
    %v2922 = vrot.slane %v1817, %v2921
    %v2923 = vmul.f32 %v2917, %v2922
    %v2924 = vmul.f32 %v2918, %v2922
    %v2925 = vlaneseq
    %v2926 = vshrl.u32 %v2925, 7
    %v2927 = vsub.s32 6, %v2926
    %v2928 = vrot.slane %v1817, %v2927
    %v2929 = vadd.f32 %v2923, %v2928
    %v2930 = vadd.f32 %v2924, %v2928
    %v2931 = vpack.c.bf16 %v2930, %v2929
    %s2932 = scalar_lea.vmem %s5, 64
    %v2933 = vld [vmem:[%s2932] sm:$0xff]
    %v2934 = vld [vmem:[%s2932 + $0x8] sm:$0xff]
    %v2935 = vld [vmem:[%s2932 + $0x10] sm:$0xff]
    %v2936 = vld [vmem:[%s2932 + $0x18] sm:$0xff]
    %v2937 = vld [vmem:[%s2932 + $0x20] sm:$0xff]
    %v2938 = vld [vmem:[%s2932 + $0x28] sm:$0xff]
    %v2939 = vld [vmem:[%s2932 + $0x30] sm:$0xff]
    %v2940 = vld [vmem:[%s2932 + $0x38] sm:$0xff]
    %s2941 = scalar_lea.vmem %s8, 4
    %v2942 = vld [vmem:[%s2941] sm:$0xf]
    %v2944 = vlaneseq
    %v2945 = vshrl.u32 %v2944, 7
    %v2946 = vsub.s32 0, %v2945
    %v2947 = vrot.slane %v2942, %v2946
    %v2948 = vlaneseq
    %v2949 = vshrl.u32 %v2948, 7
    %v2950 = vsub.s32 1, %v2949
    %v2951 = vrot.slane %v2942, %v2950
    %v2952 = vlaneseq
    %v2953 = vshrl.u32 %v2952, 7
    %v2954 = vsub.s32 2, %v2953
    %v2955 = vrot.slane %v2942, %v2954
    %v2956 = vlaneseq
    %v2957 = vshrl.u32 %v2956, 7
    %v2958 = vsub.s32 3, %v2957
    %v2959 = vrot.slane %v2942, %v2958
    %v2972 = vunpack.c.l.b16 %v2933
    %v2973 = vunpack.c.h.b16 %v2933
    %v2974 = vunpack.c.l.b16 %v2934
    %v2975 = vunpack.c.h.b16 %v2934
    %v2976 = vunpack.c.l.b16 %v2935
    %v2977 = vunpack.c.h.b16 %v2935
    %v2978 = vunpack.c.l.b16 %v2936
    %v2979 = vunpack.c.h.b16 %v2936
    %v2980 = vunpack.c.l.b16 %v2937
    %v2981 = vunpack.c.h.b16 %v2937
    %v2982 = vunpack.c.l.b16 %v2938
    %v2983 = vunpack.c.h.b16 %v2938
    %v2984 = vunpack.c.l.b16 %v2939
    %v2985 = vunpack.c.h.b16 %v2939
    %v2986 = vunpack.c.l.b16 %v2940
    %v2987 = vunpack.c.h.b16 %v2940
    %v2988 = vpack.c.b16 %v2976, %v2972
    %v2989 = vpack.c.b16 %v2977, %v2973
    %v2990 = vpack.c.b16 %v2978, %v2974
    %v2991 = vpack.c.b16 %v2979, %v2975
    %v2992 = vpack.c.b16 %v2984, %v2980
    %v2993 = vpack.c.b16 %v2985, %v2981
    %v2994 = vpack.c.b16 %v2986, %v2982
    %v2995 = vpack.c.b16 %v2987, %v2983
    %v3005 = vsel %vm132, %v2931, 0
    %3007 = vmatprep.subr.bf16.mxu0 0
    %3008 = vmatpush1.bf16.msra.mxu0 0
    %3009 = vmatprep.subr.bf16.mxu0 0
    %3010 = vmatpush1.bf16.msra.mxu0 0
    %3011 = vmatprep.subr.bf16.mxu0 0
    %3012 = vmatpush1.bf16.msra.mxu0 0
    %3013 = vmatprep.subr.bf16.mxu0 0
    %3014 = vmatpush1.bf16.msra.mxu0 0
    %3015 = vmatprep.subr.bf16.mxu0 0
    %3016 = vmatpush1.bf16.msra.mxu0 0
    %3017 = vmatprep.subr.bf16.mxu0 0
    %3018 = vmatpush1.bf16.msra.mxu0 0
    %3019 = vmatprep.subr.bf16.mxu0 %v2993
    %3020 = vmatpush1.bf16.msra.mxu0 %v2992
    %3021 = vmatprep.subr.bf16.mxu0 %v2989
    %3022 = vmatpush1.bf16.msra.mxu0 %v2988
    %3023 = vmatprep.subr.bf16.mxu0 0
    %3024 = vmatpush2.bf16.msra.mxu0 0
    %3025 = vmatprep.subr.bf16.mxu0 0
    %3026 = vmatpush2.bf16.msra.mxu0 0
    %3027 = vmatprep.subr.bf16.mxu0 0
    %3028 = vmatpush2.bf16.msra.mxu0 0
    %3029 = vmatprep.subr.bf16.mxu0 0
    %3030 = vmatpush2.bf16.msra.mxu0 0
    %3031 = vmatprep.subr.bf16.mxu0 0
    %3032 = vmatpush2.bf16.msra.mxu0 0
    %3033 = vmatprep.subr.bf16.mxu0 0
    %3034 = vmatpush2.bf16.msra.mxu0 0
    %3035 = vmatprep.subr.bf16.mxu0 0
    %3036 = vmatpush2.bf16.msra.mxu0 0
    %3037 = vmatprep.subr.bf16.mxu0 0
    %3038 = vmatpush2.bf16.msra.mxu0 0
    %3039 = vmatprep.mubr.bf16.mxu0 0
    %3040 = vmatmul.mubr.bf16.gmra.mxu0 %v3005
    %v3041 = vpop.f32.mrf.mxu0
    %v3042 = vadd.f32 %v2947, %v3041
    %v3043 = vpop.f32.mrf.mxu0
    %v3044 = vadd.f32 %v2951, %v3043
    %v3045 = vpop.f32.mrf.mxu0
    %v3046 = vadd.f32 %v2947, %v3045
    %v3047 = vpop.f32.mrf.mxu0
    %v3048 = vadd.f32 %v2951, %v3047
    %3049 = vdwg.mxu0
    %3050 = vmatprep.subr.bf16.mxu0 0
    %3051 = vmatpush1.bf16.msra.mxu0 0
    %3052 = vmatprep.subr.bf16.mxu0 0
    %3053 = vmatpush1.bf16.msra.mxu0 0
    %3054 = vmatprep.subr.bf16.mxu0 0
    %3055 = vmatpush1.bf16.msra.mxu0 0
    %3056 = vmatprep.subr.bf16.mxu0 0
    %3057 = vmatpush1.bf16.msra.mxu0 0
    %3058 = vmatprep.subr.bf16.mxu0 0
    %3059 = vmatpush1.bf16.msra.mxu0 0
    %3060 = vmatprep.subr.bf16.mxu0 0
    %3061 = vmatpush1.bf16.msra.mxu0 0
    %3062 = vmatprep.subr.bf16.mxu0 %v2995
    %3063 = vmatpush1.bf16.msra.mxu0 %v2994
    %3064 = vmatprep.subr.bf16.mxu0 %v2991
    %3065 = vmatpush1.bf16.msra.mxu0 %v2990
    %3066 = vmatprep.subr.bf16.mxu0 0
    %3067 = vmatpush2.bf16.msra.mxu0 0
    %3068 = vmatprep.subr.bf16.mxu0 0
    %3069 = vmatpush2.bf16.msra.mxu0 0
    %3070 = vmatprep.subr.bf16.mxu0 0
    %3071 = vmatpush2.bf16.msra.mxu0 0
    %3072 = vmatprep.subr.bf16.mxu0 0
    %3073 = vmatpush2.bf16.msra.mxu0 0
    %3074 = vmatprep.subr.bf16.mxu0 0
    %3075 = vmatpush2.bf16.msra.mxu0 0
    %3076 = vmatprep.subr.bf16.mxu0 0
    %3077 = vmatpush2.bf16.msra.mxu0 0
    %3078 = vmatprep.subr.bf16.mxu0 0
    %3079 = vmatpush2.bf16.msra.mxu0 0
    %3080 = vmatprep.subr.bf16.mxu0 0
    %3081 = vmatpush2.bf16.msra.mxu0 0
    %3082 = vmatprep.mubr.bf16.mxu0 0
    %3083 = vmatmul.mubr.bf16.gmra.mxu0 %v3005
    %v3084 = vpop.f32.mrf.mxu0
    %v3085 = vadd.f32 %v2955, %v3084
    %v3086 = vpop.f32.mrf.mxu0
    %v3087 = vadd.f32 %v2959, %v3086
    %v3088 = vpop.f32.mrf.mxu0
    %v3089 = vadd.f32 %v2955, %v3088
    %v3090 = vpop.f32.mrf.mxu0
    %v3091 = vadd.f32 %v2959, %v3090
    %3092 = vdwg.mxu0
    %v3093 = vmax.f32 %v3042, 0.0
    %v3094 = vmax.f32 %v3044, 0.0
    %v3095 = vmax.f32 %v3085, 0.0
    %v3096 = vmax.f32 %v3087, 0.0
    %v3097 = vmax.f32 %v3046, 0.0
    %v3098 = vmax.f32 %v3048, 0.0
    %v3099 = vmax.f32 %v3089, 0.0
    %v3100 = vmax.f32 %v3091, 0.0
    %v3101 = vpack.c.bf16 %v3097, %v3093
    %v3102 = vpack.c.bf16 %v3098, %v3094
    %v3103 = vpack.c.bf16 %v3099, %v3095
    %v3104 = vpack.c.bf16 %v3100, %v3096
    %s3105 = scalar_lea.vmem %s6, 256
    %v3106 = vld [vmem:[%s3105] sm:$0xf]
    %v3107 = vld [vmem:[%s3105 + $0x4] sm:$0xf]
    %v3108 = vld [vmem:[%s3105 + $0x8] sm:$0xf]
    %v3109 = vld [vmem:[%s3105 + $0xc] sm:$0xf]
    %v3110 = vld [vmem:[%s3105 + $0x10] sm:$0xf]
    %v3111 = vld [vmem:[%s3105 + $0x14] sm:$0xf]
    %v3112 = vld [vmem:[%s3105 + $0x18] sm:$0xf]
    %v3113 = vld [vmem:[%s3105 + $0x1c] sm:$0xf]
    %v3114 = vld [vmem:[%s3105 + $0x20] sm:$0xf]
    %v3115 = vld [vmem:[%s3105 + $0x24] sm:$0xf]
    %v3116 = vld [vmem:[%s3105 + $0x28] sm:$0xf]
    %v3117 = vld [vmem:[%s3105 + $0x2c] sm:$0xf]
    %v3118 = vld [vmem:[%s3105 + $0x30] sm:$0xf]
    %v3119 = vld [vmem:[%s3105 + $0x34] sm:$0xf]
    %v3120 = vld [vmem:[%s3105 + $0x38] sm:$0xf]
    %v3121 = vld [vmem:[%s3105 + $0x3c] sm:$0xf]
    %v3122 = vld [vmem:[%s3105 + $0x40] sm:$0xf]
    %v3123 = vld [vmem:[%s3105 + $0x44] sm:$0xf]
    %v3124 = vld [vmem:[%s3105 + $0x48] sm:$0xf]
    %v3125 = vld [vmem:[%s3105 + $0x4c] sm:$0xf]
    %v3126 = vld [vmem:[%s3105 + $0x50] sm:$0xf]
    %v3127 = vld [vmem:[%s3105 + $0x54] sm:$0xf]
    %v3128 = vld [vmem:[%s3105 + $0x58] sm:$0xf]
    %v3129 = vld [vmem:[%s3105 + $0x5c] sm:$0xf]
    %v3130 = vld [vmem:[%s3105 + $0x60] sm:$0xf]
    %v3131 = vld [vmem:[%s3105 + $0x64] sm:$0xf]
    %v3132 = vld [vmem:[%s3105 + $0x68] sm:$0xf]
    %v3133 = vld [vmem:[%s3105 + $0x6c] sm:$0xf]
    %v3134 = vld [vmem:[%s3105 + $0x70] sm:$0xf]
    %v3135 = vld [vmem:[%s3105 + $0x74] sm:$0xf]
    %v3136 = vld [vmem:[%s3105 + $0x78] sm:$0xf]
    %v3137 = vld [vmem:[%s3105 + $0x7c] sm:$0xf]
    %v3138 = vld [vmem:[%s3105 + $0x80] sm:$0xf]
    %v3139 = vld [vmem:[%s3105 + $0x84] sm:$0xf]
    %v3140 = vld [vmem:[%s3105 + $0x88] sm:$0xf]
    %v3141 = vld [vmem:[%s3105 + $0x8c] sm:$0xf]
    %v3142 = vld [vmem:[%s3105 + $0x90] sm:$0xf]
    %v3143 = vld [vmem:[%s3105 + $0x94] sm:$0xf]
    %v3144 = vld [vmem:[%s3105 + $0x98] sm:$0xf]
    %v3145 = vld [vmem:[%s3105 + $0x9c] sm:$0xf]
    %v3146 = vld [vmem:[%s3105 + $0xa0] sm:$0xf]
    %v3147 = vld [vmem:[%s3105 + $0xa4] sm:$0xf]
    %v3148 = vld [vmem:[%s3105 + $0xa8] sm:$0xf]
    %v3149 = vld [vmem:[%s3105 + $0xac] sm:$0xf]
    %v3150 = vld [vmem:[%s3105 + $0xb0] sm:$0xf]
    %v3151 = vld [vmem:[%s3105 + $0xb4] sm:$0xf]
    %v3152 = vld [vmem:[%s3105 + $0xb8] sm:$0xf]
    %v3153 = vld [vmem:[%s3105 + $0xbc] sm:$0xf]
    %v3154 = vld [vmem:[%s3105 + $0xc0] sm:$0xf]
    %v3155 = vld [vmem:[%s3105 + $0xc4] sm:$0xf]
    %v3156 = vld [vmem:[%s3105 + $0xc8] sm:$0xf]
    %v3157 = vld [vmem:[%s3105 + $0xcc] sm:$0xf]
    %v3158 = vld [vmem:[%s3105 + $0xd0] sm:$0xf]
    %v3159 = vld [vmem:[%s3105 + $0xd4] sm:$0xf]
    %v3160 = vld [vmem:[%s3105 + $0xd8] sm:$0xf]
    %v3161 = vld [vmem:[%s3105 + $0xdc] sm:$0xf]
    %v3162 = vld [vmem:[%s3105 + $0xe0] sm:$0xf]
    %v3163 = vld [vmem:[%s3105 + $0xe4] sm:$0xf]
    %v3164 = vld [vmem:[%s3105 + $0xe8] sm:$0xf]
    %v3165 = vld [vmem:[%s3105 + $0xec] sm:$0xf]
    %v3166 = vld [vmem:[%s3105 + $0xf0] sm:$0xf]
    %v3167 = vld [vmem:[%s3105 + $0xf4] sm:$0xf]
    %v3168 = vld [vmem:[%s3105 + $0xf8] sm:$0xf]
    %v3169 = vld [vmem:[%s3105 + $0xfc] sm:$0xf]
    %v3170 = vlaneseq
    %v3171 = vshrl.u32 %v3170, 7
    %v3172 = vsub.s32 4, %v3171
    %v3173 = vrot.slane %v1817, %v3172
    %v3238 = vunpack.c.l.b16 %v3106
    %v3239 = vunpack.c.l.b16 %v3107
    %v3240 = vunpack.c.l.b16 %v3108
    %v3241 = vunpack.c.l.b16 %v3109
    %v3242 = vunpack.c.l.b16 %v3110
    %v3243 = vunpack.c.l.b16 %v3111
    %v3244 = vunpack.c.l.b16 %v3112
    %v3245 = vunpack.c.l.b16 %v3113
    %v3246 = vunpack.c.l.b16 %v3114
    %v3247 = vunpack.c.l.b16 %v3115
    %v3248 = vunpack.c.l.b16 %v3116
    %v3249 = vunpack.c.l.b16 %v3117
    %v3250 = vunpack.c.l.b16 %v3118
    %v3251 = vunpack.c.l.b16 %v3119
    %v3252 = vunpack.c.l.b16 %v3120
    %v3253 = vunpack.c.l.b16 %v3121
    %v3254 = vunpack.c.l.b16 %v3122
    %v3255 = vunpack.c.l.b16 %v3123
    %v3256 = vunpack.c.l.b16 %v3124
    %v3257 = vunpack.c.l.b16 %v3125
    %v3258 = vunpack.c.l.b16 %v3126
    %v3259 = vunpack.c.l.b16 %v3127
    %v3260 = vunpack.c.l.b16 %v3128
    %v3261 = vunpack.c.l.b16 %v3129
    %v3262 = vunpack.c.l.b16 %v3130
    %v3263 = vunpack.c.l.b16 %v3131
    %v3264 = vunpack.c.l.b16 %v3132
    %v3265 = vunpack.c.l.b16 %v3133
    %v3266 = vunpack.c.l.b16 %v3134
    %v3267 = vunpack.c.l.b16 %v3135
    %v3268 = vunpack.c.l.b16 %v3136
    %v3269 = vunpack.c.l.b16 %v3137
    %v3270 = vunpack.c.l.b16 %v3138
    %v3271 = vunpack.c.l.b16 %v3139
    %v3272 = vunpack.c.l.b16 %v3140
    %v3273 = vunpack.c.l.b16 %v3141
    %v3274 = vunpack.c.l.b16 %v3142
    %v3275 = vunpack.c.l.b16 %v3143
    %v3276 = vunpack.c.l.b16 %v3144
    %v3277 = vunpack.c.l.b16 %v3145
    %v3278 = vunpack.c.l.b16 %v3146
    %v3279 = vunpack.c.l.b16 %v3147
    %v3280 = vunpack.c.l.b16 %v3148
    %v3281 = vunpack.c.l.b16 %v3149
    %v3282 = vunpack.c.l.b16 %v3150
    %v3283 = vunpack.c.l.b16 %v3151
    %v3284 = vunpack.c.l.b16 %v3152
    %v3285 = vunpack.c.l.b16 %v3153
    %v3286 = vunpack.c.l.b16 %v3154
    %v3287 = vunpack.c.l.b16 %v3155
    %v3288 = vunpack.c.l.b16 %v3156
    %v3289 = vunpack.c.l.b16 %v3157
    %v3290 = vunpack.c.l.b16 %v3158
    %v3291 = vunpack.c.l.b16 %v3159
    %v3292 = vunpack.c.l.b16 %v3160
    %v3293 = vunpack.c.l.b16 %v3161
    %v3294 = vunpack.c.l.b16 %v3162
    %v3295 = vunpack.c.l.b16 %v3163
    %v3296 = vunpack.c.l.b16 %v3164
    %v3297 = vunpack.c.l.b16 %v3165
    %v3298 = vunpack.c.l.b16 %v3166
    %v3299 = vunpack.c.l.b16 %v3167
    %v3300 = vunpack.c.l.b16 %v3168
    %v3301 = vunpack.c.l.b16 %v3169
    %v3302 = vpack.c.b16 %v3239, %v3238
    %v3303 = vpack.c.b16 %v3241, %v3240
    %v3304 = vpack.c.b16 %v3243, %v3242
    %v3305 = vpack.c.b16 %v3245, %v3244
    %v3306 = vpack.c.b16 %v3247, %v3246
    %v3307 = vpack.c.b16 %v3249, %v3248
    %v3308 = vpack.c.b16 %v3251, %v3250
    %v3309 = vpack.c.b16 %v3253, %v3252
    %v3310 = vpack.c.b16 %v3255, %v3254
    %v3311 = vpack.c.b16 %v3257, %v3256
    %v3312 = vpack.c.b16 %v3259, %v3258
    %v3313 = vpack.c.b16 %v3261, %v3260
    %v3314 = vpack.c.b16 %v3263, %v3262
    %v3315 = vpack.c.b16 %v3265, %v3264
    %v3316 = vpack.c.b16 %v3267, %v3266
    %v3317 = vpack.c.b16 %v3269, %v3268
    %v3318 = vpack.c.b16 %v3271, %v3270
    %v3319 = vpack.c.b16 %v3273, %v3272
    %v3320 = vpack.c.b16 %v3275, %v3274
    %v3321 = vpack.c.b16 %v3277, %v3276
    %v3322 = vpack.c.b16 %v3279, %v3278
    %v3323 = vpack.c.b16 %v3281, %v3280
    %v3324 = vpack.c.b16 %v3283, %v3282
    %v3325 = vpack.c.b16 %v3285, %v3284
    %v3326 = vpack.c.b16 %v3287, %v3286
    %v3327 = vpack.c.b16 %v3289, %v3288
    %v3328 = vpack.c.b16 %v3291, %v3290
    %v3329 = vpack.c.b16 %v3293, %v3292
    %v3330 = vpack.c.b16 %v3295, %v3294
    %v3331 = vpack.c.b16 %v3297, %v3296
    %v3332 = vpack.c.b16 %v3299, %v3298
    %v3333 = vpack.c.b16 %v3301, %v3300
    %3366 = vmatprep.subr.bf16.mxu0 0
    %3367 = vmatpush1.bf16.msra.mxu0 %v3309
    %3368 = vmatprep.subr.bf16.mxu0 0
    %3369 = vmatpush1.bf16.msra.mxu0 %v3308
    %3370 = vmatprep.subr.bf16.mxu0 0
    %3371 = vmatpush1.bf16.msra.mxu0 %v3307
    %3372 = vmatprep.subr.bf16.mxu0 0
    %3373 = vmatpush1.bf16.msra.mxu0 %v3306
    %3374 = vmatprep.subr.bf16.mxu0 0
    %3375 = vmatpush1.bf16.msra.mxu0 %v3305
    %3376 = vmatprep.subr.bf16.mxu0 0
    %3377 = vmatpush1.bf16.msra.mxu0 %v3304
    %3378 = vmatprep.subr.bf16.mxu0 0
    %3379 = vmatpush1.bf16.msra.mxu0 %v3303
    %3380 = vmatprep.subr.bf16.mxu0 0
    %3381 = vmatpush1.bf16.msra.mxu0 %v3302
    %3382 = vmatprep.subr.bf16.mxu0 0
    %3383 = vmatpush2.bf16.msra.mxu0 %v3317
    %3384 = vmatprep.subr.bf16.mxu0 0
    %3385 = vmatpush2.bf16.msra.mxu0 %v3316
    %3386 = vmatprep.subr.bf16.mxu0 0
    %3387 = vmatpush2.bf16.msra.mxu0 %v3315
    %3388 = vmatprep.subr.bf16.mxu0 0
    %3389 = vmatpush2.bf16.msra.mxu0 %v3314
    %3390 = vmatprep.subr.bf16.mxu0 0
    %3391 = vmatpush2.bf16.msra.mxu0 %v3313
    %3392 = vmatprep.subr.bf16.mxu0 0
    %3393 = vmatpush2.bf16.msra.mxu0 %v3312
    %3394 = vmatprep.subr.bf16.mxu0 0
    %3395 = vmatpush2.bf16.msra.mxu0 %v3311
    %3396 = vmatprep.subr.bf16.mxu0 0
    %3397 = vmatpush2.bf16.msra.mxu0 %v3310
    %3398 = vmatprep.mubr.bf16.mxu0 %v3102
    %3399 = vmatmul.mubr.bf16.gmra.mxu0 %v3101
    %v3400 = vpop.f32.mrf.mxu0
    %v3401 = vadd.f32 %v3173, %v3400
    %v3402 = vpop.f32.mrf.mxu0
    %v3403 = vpop.f32.mrf.mxu0
    %v3404 = vadd.f32 %v3173, %v3403
    %v3405 = vpop.f32.mrf.mxu0
    %3406 = vdwg.mxu0
    %3407 = vmatprep.subr.bf16.mxu0 0
    %3408 = vmatpush1.bf16.msra.mxu0 %v3325
    %3409 = vmatprep.subr.bf16.mxu0 0
    %3410 = vmatpush1.bf16.msra.mxu0 %v3324
    %3411 = vmatprep.subr.bf16.mxu0 0
    %3412 = vmatpush1.bf16.msra.mxu0 %v3323
    %3413 = vmatprep.subr.bf16.mxu0 0
    %3414 = vmatpush1.bf16.msra.mxu0 %v3322
    %3415 = vmatprep.subr.bf16.mxu0 0
    %3416 = vmatpush1.bf16.msra.mxu0 %v3321
    %3417 = vmatprep.subr.bf16.mxu0 0
    %3418 = vmatpush1.bf16.msra.mxu0 %v3320
    %3419 = vmatprep.subr.bf16.mxu0 0
    %3420 = vmatpush1.bf16.msra.mxu0 %v3319
    %3421 = vmatprep.subr.bf16.mxu0 0
    %3422 = vmatpush1.bf16.msra.mxu0 %v3318
    %3423 = vmatprep.subr.bf16.mxu0 0
    %3424 = vmatpush2.bf16.msra.mxu0 %v3333
    %3425 = vmatprep.subr.bf16.mxu0 0
    %3426 = vmatpush2.bf16.msra.mxu0 %v3332
    %3427 = vmatprep.subr.bf16.mxu0 0
    %3428 = vmatpush2.bf16.msra.mxu0 %v3331
    %3429 = vmatprep.subr.bf16.mxu0 0
    %3430 = vmatpush2.bf16.msra.mxu0 %v3330
    %3431 = vmatprep.subr.bf16.mxu0 0
    %3432 = vmatpush2.bf16.msra.mxu0 %v3329
    %3433 = vmatprep.subr.bf16.mxu0 0
    %3434 = vmatpush2.bf16.msra.mxu0 %v3328
    %3435 = vmatprep.subr.bf16.mxu0 0
    %3436 = vmatpush2.bf16.msra.mxu0 %v3327
    %3437 = vmatprep.subr.bf16.mxu0 0
    %3438 = vmatpush2.bf16.msra.mxu0 %v3326
    %3439 = vmatprep.mubr.bf16.mxu0 %v3104
    %3440 = vmatmul.mubr.bf16.gmra.mxu0 %v3103
    %v3441 = vpop.f32.mrf.mxu0
    %v3442 = vadd.f32 %v3401, %v3441
    %v3443 = vpop.f32.mrf.mxu0
    %v3444 = vpop.f32.mrf.mxu0
    %v3445 = vadd.f32 %v3404, %v3444
    %v3446 = vpop.f32.mrf.mxu0
    %3447 = vdwg.mxu0
    %v3448 = vadd.f32 %v3442, %v2929
    %v3449 = vadd.f32 %v3445, %v2930
    %v3450 = vsel %vm132, %v3448, 0.0
    %3451 = vadd.xlane.f32.xlu0 %v3450
    %v3452 = vpop.xlane.xlu0 %3451
    %v3453 = vsel %vm132, %v3449, 0.0
    %3454 = vadd.xlane.f32.xlu0 %v3453
    %v3455 = vpop.xlane.xlu0 %3454
    %v3456 = vmul.f32 %v3452, %v1229
    %v3457 = vmul.f32 %v3455, %v1229
    %v3458 = vsub.f32 %v3448, %v3456
    %v3459 = vsub.f32 %v3449, %v3457
    %v3460 = vmul.f32 %v3458, %v3458
    %v3461 = vmul.f32 %v3459, %v3459
    %v3462 = vsel %vm132, %v3460, 0.0
    %3463 = vadd.xlane.f32.xlu0 %v3462
    %v3464 = vpop.xlane.xlu0 %3463
    %v3465 = vsel %vm132, %v3461, 0.0
    %3466 = vadd.xlane.f32.xlu0 %v3465
    %v3467 = vpop.xlane.xlu0 %3466
    %v3468 = vmul.f32 %v3464, %v1229
    %v3469 = vmul.f32 %v3467, %v1229
    %v3470 = vadd.f32 %v3468, 1e-05
    %v3471 = vadd.f32 %v3469, 1e-05
    %v3472 = vrsqrt.pop %v3470
    %v3473 = vrsqrt.pop %v3471
    %v3474 = vmul.f32 %v3458, %v3472
    %v3475 = vmul.f32 %v3459, %v3473
    %v3476 = vlaneseq
    %v3477 = vshrl.u32 %v3476, 7
    %v3478 = vsub.s32 7, %v3477
    %v3479 = vrot.slane %v1817, %v3478
    %v3480 = vmul.f32 %v3474, %v3479
    %v3481 = vmul.f32 %v3475, %v3479
    %v3482 = vlaneseq
    %v3483 = vshrl.u32 %v3482, 7
    %v3484 = vsub.s32 0, %v3483
    %v3485 = vrot.slane %v1818, %v3484
    %v3486 = vadd.f32 %v3480, %v3485
    %v3487 = vadd.f32 %v3481, %v3485
    %v3488 = vpack.c.bf16 %v3487, %v3486
    %v3489 = vld [vmem:[%s9] sm:$0xf]
    %v3490 = vld [vmem:[%s9 + $0x4] sm:$0xf]
    %v3491 = vld [vmem:[%s9 + $0x8] sm:$0xf]
    %v3492 = vld [vmem:[%s9 + $0xc] sm:$0xf]
    %v3493 = vld [vmem:[%s10] sm:$0x1]
    %v3495 = vlaneseq
    %v3496 = vshrl.u32 %v3495, 7
    %v3497 = vsub.s32 0, %v3496
    %v3498 = vrot.slane %v3493, %v3497
    %v3504 = vunpack.c.l.b16 %v3489
    %v3505 = vunpack.c.l.b16 %v3490
    %v3506 = vunpack.c.l.b16 %v3491
    %v3507 = vunpack.c.l.b16 %v3492
    %v3508 = vpack.c.b16 %v3505, %v3504
    %v3509 = vpack.c.b16 %v3507, %v3506
    %v3513 = vsel %vm132, %v3488, 0
    %3515 = vmatprep.subr.bf16.mxu0 0
    %3516 = vmatpush1.bf16.msra.mxu0 0
    %3517 = vmatprep.subr.bf16.mxu0 0
    %3518 = vmatpush1.bf16.msra.mxu0 0
    %3519 = vmatprep.subr.bf16.mxu0 0
    %3520 = vmatpush1.bf16.msra.mxu0 0
    %3521 = vmatprep.subr.bf16.mxu0 0
    %3522 = vmatpush1.bf16.msra.mxu0 0
    %3523 = vmatprep.subr.bf16.mxu0 0
    %3524 = vmatpush1.bf16.msra.mxu0 0
    %3525 = vmatprep.subr.bf16.mxu0 0
    %3526 = vmatpush1.bf16.msra.mxu0 0
    %3527 = vmatprep.subr.bf16.mxu0 0
    %3528 = vmatpush1.bf16.msra.mxu0 %v3509
    %3529 = vmatprep.subr.bf16.mxu0 0
    %3530 = vmatpush1.bf16.msra.mxu0 %v3508
    %3531 = vmatprep.subr.bf16.mxu0 0
    %3532 = vmatpush2.bf16.msra.mxu0 0
    %3533 = vmatprep.subr.bf16.mxu0 0
    %3534 = vmatpush2.bf16.msra.mxu0 0
    %3535 = vmatprep.subr.bf16.mxu0 0
    %3536 = vmatpush2.bf16.msra.mxu0 0
    %3537 = vmatprep.subr.bf16.mxu0 0
    %3538 = vmatpush2.bf16.msra.mxu0 0
    %3539 = vmatprep.subr.bf16.mxu0 0
    %3540 = vmatpush2.bf16.msra.mxu0 0
    %3541 = vmatprep.subr.bf16.mxu0 0
    %3542 = vmatpush2.bf16.msra.mxu0 0
    %3543 = vmatprep.subr.bf16.mxu0 0
    %3544 = vmatpush2.bf16.msra.mxu0 0
    %3545 = vmatprep.subr.bf16.mxu0 0
    %3546 = vmatpush2.bf16.msra.mxu0 0
    %3547 = vmatprep.mubr.bf16.mxu0 0
    %3548 = vmatmul.mubr.bf16.gmra.mxu0 %v3513
    %v3549 = vpop.f32.mrf.mxu0
    %v3550 = vadd.f32 %v3498, %v3549
    %v3551 = vpop.f32.mrf.mxu0
    %v3552 = vpop.f32.mrf.mxu0
    %v3553 = vadd.f32 %v3498, %v3552
    %v3554 = vpop.f32.mrf.mxu0
    %3555 = vdwg.mxu0
    %3556 = vst [vmem:[#allocation2] sm:$0xff] %v3550
    %3557 = vst [vmem:[#allocation2 + $0x8] sm:$0xff] %v3553
    // Predicated region
    $region46: #{custom_model_forward.1} parent=1 // pred_check
      _
    $region47: #{custom_model_forward.1} parent=1 // pred_check_branch
      %3559 = sbr.rel (0) target = $region49
    $region48: #{custom_model_forward.1} parent=1 // pred_region
      %s3561 = ssub.s32 256, 256
      %3562 = vsyncadd [#allocation3], %s3561
      %s3563 = sshll.u32 [#allocation2], 4
      %s3564 = int_to_ptr.vmem [resolvable:$true] %s3563
      %3569 = dma.vmem_to_hbm [thread:$0]  %s3564, 256, %s11, [#allocation3], 128, 128, 8
    $region49: #{custom_model_forward.1} parent=1 // pred_fallthru
      _
    // Predicated region
    $region50: #{custom_model_forward.1} parent=1 // pred_check
      _
    $region51: #{custom_model_forward.1} parent=1 // pred_check_branch
      %3571 = sbr.rel (0) target = $region53
    $region52: #{custom_model_forward.1} parent=1 // pred_region
      %3572 = dma.done [#allocation3], 256
    $region53: #{custom_model_forward.1} parent=1 // pred_fallthru
      _
    %3573 = vsyncpa [#allocation3], 1

</llo_original>
